<compile_context>
chip_gen: v5e
topology: v5e:2x2
jax: 0.10.0
libtpu: 0.0.40
codegen_flags: <defaults>
</compile_context>

<pallas_src>
import numpy as np
import jax
import jax.numpy as jnp
from jax.experimental import pallas as pl
from jax.experimental.pallas import tpu as pltpu


# ----------------------------- Pallas kernel -------------------------------

def _attn_kernel(p_ref, w_ref, o_ref):
    # p_ref: (NB, K, NHW)  augmented im2col patches, one (K, NHW) matrix per branch
    #                      (K = 9*Cin + 1; last row is ones so bias folds into W).
    # w_ref: (Cout, K)     folded shared conv weights, last column = bias.
    # o_ref: (Cout, NHW)   product over the 4 branches, lane-dense last dim.
    w = w_ref[...]                                            # (C, K) — loaded once
    n_branches = p_ref.shape[0]

    # Branch 0 initializes the product directly (ones * conv0 == conv0).
    prod = jnp.dot(w, p_ref[0],
                   preferred_element_type=jnp.float32,
                   precision=jax.lax.Precision.HIGHEST)       # (C, NHW)
    for b in range(1, n_branches):                            # unrolled, in-register
        conv_b = jnp.dot(w, p_ref[b],
                         preferred_element_type=jnp.float32,
                         precision=jax.lax.Precision.HIGHEST)
        prod = prod * conv_b

    o_ref[...] = prod                                         # single lane-dense store


def _pallas_attention(p_all, w_aug):
    """p_all: (4, K, NHW) f32 augmented im2col patches; w_aug: (C, K) f32."""
    nb, K, NHW = p_all.shape
    C = w_aug.shape[0]
    return pl.pallas_call(
        _attn_kernel,
        out_shape=jax.ShapeDtypeStruct((C, NHW), jnp.float32),
        grid_spec=pltpu.PrefetchScalarGridSpec(
            num_scalar_prefetch=0,
            grid=(1,),                                        # single invocation
            in_specs=[
                pl.BlockSpec((nb, K, NHW), lambda i: (0, 0, 0)),
                pl.BlockSpec((C, K), lambda i: (0, 0)),
            ],
            out_specs=pl.BlockSpec((C, NHW), lambda i: (0, 0)),
        ),
        compiler_params=pltpu.CompilerParams(
            dimension_semantics=("arbitrary",)),
    )(p_all, w_aug)


# --------------------------- resize glue (plain JAX) ------------------------
# TODO(synk): resizing (adaptive_avg_pool2d / bilinear align_corners=True) is
# done as exact resampling matrices in plain JAX, not inside the Pallas kernel.

def _adaptive_pool_matrix(in_size, out_size):
    P = np.zeros((out_size, in_size), np.float32)
    for o in range(out_size):
        s = (o * in_size) // out_size
        e = -(-((o + 1) * in_size) // out_size)  # ceil
        P[o, s:e] = 1.0 / (e - s)
    return jnp.asarray(P)


def _bilinear_matrix(in_size, out_size):
    A = np.zeros((out_size, in_size), np.float32)
    if out_size == 1:
        A[0, 0] = 1.0
    else:
        scale = (in_size - 1) / (out_size - 1)
        for o in range(out_size):
            src = o * scale
            i0 = min(int(np.floor(src)), in_size - 1)
            i1 = min(i0 + 1, in_size - 1)
            w1 = src - i0
            A[o, i0] += 1.0 - w1
            A[o, i1] += w1
    return jnp.asarray(A)


def _resize_to(x_nchw, target):
    # Mode chosen by width, exactly like the PyTorch module's `x.shape[-1]` test.
    h, w = x_nchw.shape[-2], x_nchw.shape[-1]
    if w > target:
        Rh, Rw = _adaptive_pool_matrix(h, target), _adaptive_pool_matrix(w, target)
    elif w < target:
        Rh, Rw = _bilinear_matrix(h, target), _bilinear_matrix(w, target)
    else:
        return x_nchw
    return jnp.einsum('oi,ncij,pj->ncop', Rh, x_nchw, Rw)


# ------------------------------- module wrapper -----------------------------

def attention_layer_forward(xs, anchor, w_oihw, bias):
    """xs: list of 4 NCHW arrays; anchor: NCHW (square); w_oihw: (C,C,3,3); bias: (C,)."""
    N, C = anchor.shape[0], anchor.shape[1]
    target = anchor.shape[-1]
    H = W = target
    NHW = N * H * W
    K = 9 * C + 1

    # Shared conv weights folded to (Cout, 9*Cin) with bias as the last column.
    #   column index j = (dy*3 + dx)*Cin + ci
    w_fold = jnp.transpose(w_oihw.astype(jnp.float32), (0, 2, 3, 1)).reshape(C, 9 * C)
    w_aug = jnp.concatenate(
        [w_fold, bias.astype(jnp.float32).reshape(C, 1)], axis=1)        # (C, K)

    # Per branch: resize -> zero-pad -> im2col (rows = (tap, ci), cols = (n, h, w))
    # -> append a ones row so the bias column of w_aug applies it.
    p_branches = []
    for x in xs:
        xr = _resize_to(x.astype(jnp.float32), target)                   # (N, C, H, W)
        xp = jnp.pad(xr, ((0, 0), (0, 0), (1, 1), (1, 1)))               # (N, C, H+2, W+2)
        taps = [xp[:, :, dy:dy + H, dx:dx + W]
                for dy in range(3) for dx in range(3)]                   # 9 x (N, C, H, W)
        pt = jnp.stack(taps, axis=0)                                     # (9, N, C, H, W)
        pt = jnp.transpose(pt, (0, 2, 1, 3, 4)).reshape(9 * C, NHW)      # (9C, NHW)
        pt = jnp.concatenate([pt, jnp.ones((1, NHW), jnp.float32)], axis=0)  # (K, NHW)
        p_branches.append(pt)
    p_all = jnp.stack(p_branches, axis=0)                                # (4, K, NHW)

    out = _pallas_attention(p_all, w_aug)                                # (C, NHW)
    out = out.reshape(C, N, H, W)
    return jnp.transpose(out, (1, 0, 2, 3)).astype(anchor.dtype)         # (N, C, H, W)


# ------------------------------ pure-JAX reference --------------------------

def _reference_forward(xs, anchor, w_oihw, bias):
    ans = jnp.ones_like(anchor)
    target = anchor.shape[-1]
    for x in xs:
        xr = _resize_to(x.astype(jnp.float32), target)
        y = jax.lax.conv_general_dilated(
            xr, w_oihw, window_strides=(1, 1), padding=((1, 1), (1, 1)),
            dimension_numbers=('NCHW', 'OIHW', 'NCHW'),
            precision=jax.lax.Precision.HIGHEST,
        ) + bias.reshape(1, -1, 1, 1)
        ans = ans * y
    return ans


# ------------------------------------ main -----------------------------------

if __name__ == "__main__":
    key = jax.random.PRNGKey(0)
    kx0, kx1, kx2, kx3, ka, kw, kb = jax.random.split(key, 7)

    N, C = 2, 4
    anchor = jax.random.normal(ka, (N, C, 16, 16), jnp.float32)
    xs = [
        jax.random.normal(kx0, (N, C, 32, 32), jnp.float32),  # larger  -> adaptive avg pool
        jax.random.normal(kx1, (N, C, 8, 8), jnp.float32),    # smaller -> bilinear upsample
        jax.random.normal(kx2, (N, C, 16, 16), jnp.float32),  # equal   -> identity
        jax.random.normal(kx3, (N, C, 4, 4), jnp.float32),    # smaller -> bilinear upsample
    ]

    # Shared conv parameters (all 4 "convs" are the same module in PyTorch).
    w_oihw = 0.1 * jax.random.normal(kw, (C, C, 3, 3), jnp.float32)
    bias = 0.1 * jax.random.normal(kb, (C,), jnp.float32)

    out = attention_layer_forward(xs, anchor, w_oihw, bias)
    out = jax.block_until_ready(out)

    ref = jax.block_until_ready(_reference_forward(xs, anchor, w_oihw, bias))
    np.testing.assert_allclose(np.asarray(out), np.asarray(ref),
                               rtol=2e-4, atol=1e-5)
    assert out.shape == anchor.shape and out.dtype == anchor.dtype

    print("KERNEL_OK")
</pallas_src>

<mosaic_0001>
module attributes {stable_mosaic.version = 11 : i64} {
  func.func @_attn_kernel(%arg0: i32, %arg1: memref<4x37x512xf32, #tpu.memory_space<vmem>>, %arg2: memref<4x37xf32, #tpu.memory_space<vmem>>, %arg3: memref<4x512xf32, #tpu.memory_space<vmem>>) attributes {dimension_semantics = [#tpu.dimension_semantics<arbitrary>], iteration_bounds = array<i64: 1>, scalar_prefetch = 0 : i64, scratch_operands = 0 : i64, tpu.core_type = #tpu.core_type<tc>, window_params = [{pipeline_mode = #tpu.pipeline_mode<synchronous>, transform_indices = @transform_0, window_bounds = array<i64: 4, 37, 512>}, {pipeline_mode = #tpu.pipeline_mode<synchronous>, transform_indices = @transform_1, window_bounds = array<i64: 4, 37>}, {pipeline_mode = #tpu.pipeline_mode<synchronous>, transform_indices = @transform_2, window_bounds = array<i64: 4, 512>}]} {
    %c0 = arith.constant 0 : index
    %c0_0 = arith.constant 0 : index
    %0 = vector.load %arg2[%c0, %c0_0] : memref<4x37xf32, #tpu.memory_space<vmem>>, vector<4x37xf32>
    %c0_1 = arith.constant 0 : index
    %c0_2 = arith.constant 0 : index
    %c0_3 = arith.constant 0 : index
    %1 = vector.load %arg1[%c0_1, %c0_2, %c0_3] : memref<4x37x512xf32, #tpu.memory_space<vmem>>, vector<1x37x512xf32>
    %2 = vector.shape_cast %1 : vector<1x37x512xf32> to vector<37x512xf32>
    %cst = arith.constant dense<0.000000e+00> : vector<4x512xf32>
    %3 = tpu.matmul %0, %2, %cst {dimension_numbers = #tpu.dot_dimension_numbers<[1], [0], [0], [1], [0, 0, 1, 1], [], []>, precision = #tpu.contract_precision<fp32>} : vector<4x37xf32>, vector<37x512xf32>, vector<4x512xf32> -> vector<4x512xf32>
    %c1 = arith.constant 1 : index
    %c0_4 = arith.constant 0 : index
    %c0_5 = arith.constant 0 : index
    %4 = vector.load %arg1[%c1, %c0_4, %c0_5] : memref<4x37x512xf32, #tpu.memory_space<vmem>>, vector<1x37x512xf32>
    %5 = vector.shape_cast %4 : vector<1x37x512xf32> to vector<37x512xf32>
    %cst_6 = arith.constant dense<0.000000e+00> : vector<4x512xf32>
    %6 = tpu.matmul %0, %5, %cst_6 {dimension_numbers = #tpu.dot_dimension_numbers<[1], [0], [0], [1], [0, 0, 1, 1], [], []>, precision = #tpu.contract_precision<fp32>} : vector<4x37xf32>, vector<37x512xf32>, vector<4x512xf32> -> vector<4x512xf32>
    %7 = arith.mulf %3, %6 : vector<4x512xf32>
    %c2 = arith.constant 2 : index
    %c0_7 = arith.constant 0 : index
    %c0_8 = arith.constant 0 : index
    %8 = vector.load %arg1[%c2, %c0_7, %c0_8] : memref<4x37x512xf32, #tpu.memory_space<vmem>>, vector<1x37x512xf32>
    %9 = vector.shape_cast %8 : vector<1x37x512xf32> to vector<37x512xf32>
    %cst_9 = arith.constant dense<0.000000e+00> : vector<4x512xf32>
    %10 = tpu.matmul %0, %9, %cst_9 {dimension_numbers = #tpu.dot_dimension_numbers<[1], [0], [0], [1], [0, 0, 1, 1], [], []>, precision = #tpu.contract_precision<fp32>} : vector<4x37xf32>, vector<37x512xf32>, vector<4x512xf32> -> vector<4x512xf32>
    %11 = arith.mulf %7, %10 : vector<4x512xf32>
    %c3 = arith.constant 3 : index
    %c0_10 = arith.constant 0 : index
    %c0_11 = arith.constant 0 : index
    %12 = vector.load %arg1[%c3, %c0_10, %c0_11] : memref<4x37x512xf32, #tpu.memory_space<vmem>>, vector<1x37x512xf32>
    %13 = vector.shape_cast %12 : vector<1x37x512xf32> to vector<37x512xf32>
    %cst_12 = arith.constant dense<0.000000e+00> : vector<4x512xf32>
    %14 = tpu.matmul %0, %13, %cst_12 {dimension_numbers = #tpu.dot_dimension_numbers<[1], [0], [0], [1], [0, 0, 1, 1], [], []>, precision = #tpu.contract_precision<fp32>} : vector<4x37xf32>, vector<37x512xf32>, vector<4x512xf32> -> vector<4x512xf32>
    %15 = arith.mulf %11, %14 : vector<4x512xf32>
    %c0_13 = arith.constant 0 : index
    %c0_14 = arith.constant 0 : index
    %16 = vector.load %arg3[%c0_13, %c0_14] : memref<4x512xf32, #tpu.memory_space<vmem>>, vector<4x512xf32>
    tpu.vector_store %arg3[%c0_13, %c0_14], %15 {strides = array<i32>} : memref<4x512xf32, #tpu.memory_space<vmem>>, vector<4x512xf32>,
    return
  }
  func.func @transform_0(%arg0: i32) -> (i32, i32, i32) {
    %c0_i32 = arith.constant 0 : i32
    %c0_i32_0 = arith.constant 0 : i32
    %c0_i32_1 = arith.constant 0 : i32
    %c0_i32_2 = arith.constant 0 : i32
    return %c0_i32, %c0_i32_0, %c0_i32_1 : i32, i32, i32
  }
  func.func @transform_1(%arg0: i32) -> (i32, i32) {
    %c0_i32 = arith.constant 0 : i32
    %c0_i32_0 = arith.constant 0 : i32
    %c0_i32_1 = arith.constant 0 : i32
    return %c0_i32, %c0_i32_0 : i32, i32
  }
  func.func @transform_2(%arg0: i32) -> (i32, i32) {
    %c0_i32 = arith.constant 0 : i32
    %c0_i32_0 = arith.constant 0 : i32
    %c0_i32_1 = arith.constant 0 : i32
    return %c0_i32, %c0_i32_0 : i32, i32
  }
}

</mosaic_0001>

<llo_original>
// kernel: tpu_custom_call.1
$region0: #{tpu_custom_call.1}
  #allocation0 [shape = 'u32[]', space=smem, size = 0x4, offset = 0x4, fixed_abs, tag = 'smem constant byte address 0x4 - core index']
  #allocation1 [shape = 'u32[72,128]{1,0:T(1,128)}', space=vmem, size = 0x9000, scoped, tag = 'internal scratch']
  %s0 = inlined_call_operand.vmem [shape: f32[4,37,512], index: 0, kind: input, shape index: {}]
  %s1 = inlined_call_operand.vmem [shape: f32[4,37], index: 1, kind: input, shape index: {}]
  %s2 = inlined_call_operand.hbm [shape: f32[4,512], index: 2, kind: output, shape index: {}]
  %s3 = sld [smem:[#allocation0]]
  $region18: #{tpu_custom_call.1} parent=0
    _
  %s5 = ssub.s32 1, %s3
  %s6 = scalar_select 0, %s5, %s3
  $region1: #{tpu_custom_call.1} parent=0
    #allocation2 [shape = 'u8[8192]{0}', space=vmem, size = 0x2000, scoped, tag = 'output window, operand 0, single buffered']
    #allocation3 [shape = 's32[1]{0}', space=sflag, size = 0x4, scoped, tag = 'scoped memory for tpu_custom_call.1']
    %7 = vsyncpa [#allocation3], 0
    // Predicated region
    $region2: #{tpu_custom_call.1} parent=1 // pred_check
      _
    $region3: #{tpu_custom_call.1} parent=1 // pred_check_branch
      %9 = sbr.rel (0) target = $region5
    $region4: #{tpu_custom_call.1} parent=1 // pred_region
      _
    $region5: #{tpu_custom_call.1} parent=1 // pred_fallthru
      _
    // Predicated region
    $region6: #{tpu_custom_call.1} parent=1 // pred_check
      _
    $region7: #{tpu_custom_call.1} parent=1 // pred_check_branch
      %11 = sbr.rel (0) target = $region9
    $region8: #{tpu_custom_call.1} parent=1 // pred_region
      _
    $region9: #{tpu_custom_call.1} parent=1 // pred_fallthru
      _
    %v12 = vld [vmem:[%s1] sm:$0xf]
    %v13 = vld [vmem:[%s0] sm:$0xff]
    %v14 = vld [vmem:[%s0 + $0x8] sm:$0xff]
    %v15 = vld [vmem:[%s0 + $0x10] sm:$0xff]
    %v16 = vld [vmem:[%s0 + $0x18] sm:$0xff]
    %v17 = vld [vmem:[%s0 + $0x20] sm:$0xff]
    %v18 = vld [vmem:[%s0 + $0x28] sm:$0xff]
    %v19 = vld [vmem:[%s0 + $0x30] sm:$0xff]
    %v20 = vld [vmem:[%s0 + $0x38] sm:$0xff]
    %v21 = vld [vmem:[%s0 + $0x40] sm:$0xff]
    %v22 = vld [vmem:[%s0 + $0x48] sm:$0xff]
    %v23 = vld [vmem:[%s0 + $0x50] sm:$0xff]
    %v24 = vld [vmem:[%s0 + $0x58] sm:$0xff]
    %v25 = vld [vmem:[%s0 + $0x60] sm:$0xff]
    %v26 = vld [vmem:[%s0 + $0x68] sm:$0xff]
    %v27 = vld [vmem:[%s0 + $0x70] sm:$0xff]
    %v28 = vld [vmem:[%s0 + $0x78] sm:$0xff]
    %v29 = vld [vmem:[%s0 + $0x80] sm:$0x1f]
    %v30 = vld [vmem:[%s0 + $0x88] sm:$0x1f]
    %v31 = vld [vmem:[%s0 + $0x90] sm:$0x1f]
    %v32 = vld [vmem:[%s0 + $0x98] sm:$0x1f]
    %vm33 = vcmask 302080
    %v35 = vsel %vm33, %v12, 0
    %vm37 = vcmask 1044480
    %v39 = vsel %vm37, %v29, 0
    %v42 = vsel %vm37, %v30, 0
    %v45 = vsel %vm37, %v31, 0
    %v48 = vsel %vm37, %v32, 0
    %50 = vmatpush.msra.mxu0 0.0
    %51 = vmatpush.msra.mxu0 0.0
    %52 = vmatpush.msra.mxu0 0.0
    %53 = vmatpush.msra.mxu0 0.0
    %54 = vmatpush.msra.mxu0 0.0
    %55 = vmatpush.msra.mxu0 0.0
    %56 = vmatpush.msra.mxu0 0.0
    %57 = vmatpush.msra.mxu0 0.0
    %58 = vmatpush.msra.mxu0 0.0
    %59 = vmatpush.msra.mxu0 0.0
    %60 = vmatpush.msra.mxu0 0.0
    %v61 = vand.u32 %v39, 4294901760
    %62 = vmatpush.msra.mxu0 %v61
    %v63 = vand.u32 %v25, 4294901760
    %64 = vmatpush.msra.mxu0 %v63
    %v65 = vand.u32 %v21, 4294901760
    %66 = vmatpush.msra.mxu0 %v65
    %v67 = vand.u32 %v17, 4294901760
    %68 = vmatpush.msra.mxu0 %v67
    %v69 = vand.u32 %v13, 4294901760
    %70 = vmatpush.msra.mxu0 %v69
    %v71 = vand.u32 %v35, 4294901760
    %v72 = vsub.f32 %v35, %v71
    %v73 = vand.u32 %v72, 4294901760
    %v74 = vsub.f32 %v72, %v73
    %v75 = vand.u32 %v74, 4294901760
    %76 = vmatmul.f32.gmra.mxu0 %v75
    %v77 = vpop.f32.mrf.mxu0
    %v78 = vadd.f32 0.0, %v77
    %79 = vdwg.mxu0
    %80 = vmatpush.msra.mxu0 0.0
    %81 = vmatpush.msra.mxu0 0.0
    %82 = vmatpush.msra.mxu0 0.0
    %83 = vmatpush.msra.mxu0 0.0
    %84 = vmatpush.msra.mxu0 0.0
    %85 = vmatpush.msra.mxu0 0.0
    %86 = vmatpush.msra.mxu0 0.0
    %87 = vmatpush.msra.mxu0 0.0
    %88 = vmatpush.msra.mxu0 0.0
    %89 = vmatpush.msra.mxu0 0.0
    %90 = vmatpush.msra.mxu0 0.0
    %v91 = vand.u32 %v39, 4294901760
    %v92 = vsub.f32 %v39, %v91
    %v93 = vand.u32 %v92, 4294901760
    %v94 = vsub.f32 %v92, %v93
    %v95 = vand.u32 %v94, 4294901760
    %96 = vmatpush.msra.mxu0 %v95
    %v97 = vand.u32 %v25, 4294901760
    %v98 = vsub.f32 %v25, %v97
    %v99 = vand.u32 %v98, 4294901760
    %v100 = vsub.f32 %v98, %v99
    %v101 = vand.u32 %v100, 4294901760
    %102 = vmatpush.msra.mxu0 %v101
    %v103 = vand.u32 %v21, 4294901760
    %v104 = vsub.f32 %v21, %v103
    %v105 = vand.u32 %v104, 4294901760
    %v106 = vsub.f32 %v104, %v105
    %v107 = vand.u32 %v106, 4294901760
    %108 = vmatpush.msra.mxu0 %v107
    %v109 = vand.u32 %v17, 4294901760
    %v110 = vsub.f32 %v17, %v109
    %v111 = vand.u32 %v110, 4294901760
    %v112 = vsub.f32 %v110, %v111
    %v113 = vand.u32 %v112, 4294901760
    %114 = vmatpush.msra.mxu0 %v113
    %v115 = vand.u32 %v13, 4294901760
    %v116 = vsub.f32 %v13, %v115
    %v117 = vand.u32 %v116, 4294901760
    %v118 = vsub.f32 %v116, %v117
    %v119 = vand.u32 %v118, 4294901760
    %120 = vmatpush.msra.mxu0 %v119
    %v121 = vand.u32 %v35, 4294901760
    %122 = vmatmul.f32.gmra.mxu0 %v121
    %v123 = vpop.f32.mrf.mxu0
    %v124 = vadd.f32 %v78, %v123
    %125 = vdwg.mxu0
    %126 = vmatpush.msra.mxu0 0.0
    %127 = vmatpush.msra.mxu0 0.0
    %128 = vmatpush.msra.mxu0 0.0
    %129 = vmatpush.msra.mxu0 0.0
    %130 = vmatpush.msra.mxu0 0.0
    %131 = vmatpush.msra.mxu0 0.0
    %132 = vmatpush.msra.mxu0 0.0
    %133 = vmatpush.msra.mxu0 0.0
    %134 = vmatpush.msra.mxu0 0.0
    %135 = vmatpush.msra.mxu0 0.0
    %136 = vmatpush.msra.mxu0 0.0
    %v137 = vand.u32 %v39, 4294901760
    %v138 = vsub.f32 %v39, %v137
    %139 = vmatpush.msra.mxu0 %v138
    %v140 = vand.u32 %v25, 4294901760
    %v141 = vsub.f32 %v25, %v140
    %142 = vmatpush.msra.mxu0 %v141
    %v143 = vand.u32 %v21, 4294901760
    %v144 = vsub.f32 %v21, %v143
    %145 = vmatpush.msra.mxu0 %v144
    %v146 = vand.u32 %v17, 4294901760
    %v147 = vsub.f32 %v17, %v146
    %148 = vmatpush.msra.mxu0 %v147
    %v149 = vand.u32 %v13, 4294901760
    %v150 = vsub.f32 %v13, %v149
    %151 = vmatpush.msra.mxu0 %v150
    %v152 = vand.u32 %v35, 4294901760
    %v153 = vsub.f32 %v35, %v152
    %154 = vmatmul.f32.gmra.mxu0 %v153
    %v155 = vpop.f32.mrf.mxu0
    %v156 = vadd.f32 %v124, %v155
    %157 = vdwg.mxu0
    %158 = vmatpush.msra.mxu0 0.0
    %159 = vmatpush.msra.mxu0 0.0
    %160 = vmatpush.msra.mxu0 0.0
    %161 = vmatpush.msra.mxu0 0.0
    %162 = vmatpush.msra.mxu0 0.0
    %163 = vmatpush.msra.mxu0 0.0
    %164 = vmatpush.msra.mxu0 0.0
    %165 = vmatpush.msra.mxu0 0.0
    %166 = vmatpush.msra.mxu0 0.0
    %167 = vmatpush.msra.mxu0 0.0
    %168 = vmatpush.msra.mxu0 0.0
    %v169 = vand.u32 %v39, 4294901760
    %170 = vmatpush.msra.mxu0 %v169
    %v171 = vand.u32 %v25, 4294901760
    %172 = vmatpush.msra.mxu0 %v171
    %v173 = vand.u32 %v21, 4294901760
    %174 = vmatpush.msra.mxu0 %v173
    %v175 = vand.u32 %v17, 4294901760
    %176 = vmatpush.msra.mxu0 %v175
    %v177 = vand.u32 %v13, 4294901760
    %178 = vmatpush.msra.mxu0 %v177
    %v179 = vand.u32 %v35, 4294901760
    %v180 = vsub.f32 %v35, %v179
    %v181 = vand.u32 %v180, 4294901760
    %182 = vmatmul.f32.gmra.mxu0 %v181
    %v183 = vpop.f32.mrf.mxu0
    %v184 = vadd.f32 %v156, %v183
    %185 = vdwg.mxu0
    %186 = vmatpush.msra.mxu0 0.0
    %187 = vmatpush.msra.mxu0 0.0
    %188 = vmatpush.msra.mxu0 0.0
    %189 = vmatpush.msra.mxu0 0.0
    %190 = vmatpush.msra.mxu0 0.0
    %191 = vmatpush.msra.mxu0 0.0
    %192 = vmatpush.msra.mxu0 0.0
    %193 = vmatpush.msra.mxu0 0.0
    %194 = vmatpush.msra.mxu0 0.0
    %195 = vmatpush.msra.mxu0 0.0
    %196 = vmatpush.msra.mxu0 0.0
    %v197 = vand.u32 %v39, 4294901760
    %v198 = vsub.f32 %v39, %v197
    %v199 = vand.u32 %v198, 4294901760
    %200 = vmatpush.msra.mxu0 %v199
    %v201 = vand.u32 %v25, 4294901760
    %v202 = vsub.f32 %v25, %v201
    %v203 = vand.u32 %v202, 4294901760
    %204 = vmatpush.msra.mxu0 %v203
    %v205 = vand.u32 %v21, 4294901760
    %v206 = vsub.f32 %v21, %v205
    %v207 = vand.u32 %v206, 4294901760
    %208 = vmatpush.msra.mxu0 %v207
    %v209 = vand.u32 %v17, 4294901760
    %v210 = vsub.f32 %v17, %v209
    %v211 = vand.u32 %v210, 4294901760
    %212 = vmatpush.msra.mxu0 %v211
    %v213 = vand.u32 %v13, 4294901760
    %v214 = vsub.f32 %v13, %v213
    %v215 = vand.u32 %v214, 4294901760
    %216 = vmatpush.msra.mxu0 %v215
    %v217 = vand.u32 %v35, 4294901760
    %218 = vmatmul.f32.gmra.mxu0 %v217
    %v219 = vpop.f32.mrf.mxu0
    %v220 = vadd.f32 %v184, %v219
    %221 = vdwg.mxu0
    %222 = vmatpush.msra.mxu0 0.0
    %223 = vmatpush.msra.mxu0 0.0
    %224 = vmatpush.msra.mxu0 0.0
    %225 = vmatpush.msra.mxu0 0.0
    %226 = vmatpush.msra.mxu0 0.0
    %227 = vmatpush.msra.mxu0 0.0
    %228 = vmatpush.msra.mxu0 0.0
    %229 = vmatpush.msra.mxu0 0.0
    %230 = vmatpush.msra.mxu0 0.0
    %231 = vmatpush.msra.mxu0 0.0
    %232 = vmatpush.msra.mxu0 0.0
    %v233 = vand.u32 %v39, 4294901760
    %234 = vmatpush.msra.mxu0 %v233
    %v235 = vand.u32 %v25, 4294901760
    %236 = vmatpush.msra.mxu0 %v235
    %v237 = vand.u32 %v21, 4294901760
    %238 = vmatpush.msra.mxu0 %v237
    %v239 = vand.u32 %v17, 4294901760
    %240 = vmatpush.msra.mxu0 %v239
    %v241 = vand.u32 %v13, 4294901760
    %242 = vmatpush.msra.mxu0 %v241
    %v243 = vand.u32 %v35, 4294901760
    %244 = vmatmul.f32.gmra.mxu0 %v243
    %v245 = vpop.f32.mrf.mxu0
    %v246 = vadd.f32 %v220, %v245
    %247 = vdwg.mxu0
    %248 = vmatpush.msra.mxu0 0.0
    %249 = vmatpush.msra.mxu0 0.0
    %250 = vmatpush.msra.mxu0 0.0
    %251 = vmatpush.msra.mxu0 0.0
    %252 = vmatpush.msra.mxu0 0.0
    %253 = vmatpush.msra.mxu0 0.0
    %254 = vmatpush.msra.mxu0 0.0
    %255 = vmatpush.msra.mxu0 0.0
    %256 = vmatpush.msra.mxu0 0.0
    %257 = vmatpush.msra.mxu0 0.0
    %258 = vmatpush.msra.mxu0 0.0
    %v259 = vand.u32 %v42, 4294901760
    %260 = vmatpush.msra.mxu0 %v259
    %v261 = vand.u32 %v26, 4294901760
    %262 = vmatpush.msra.mxu0 %v261
    %v263 = vand.u32 %v22, 4294901760
    %264 = vmatpush.msra.mxu0 %v263
    %v265 = vand.u32 %v18, 4294901760
    %266 = vmatpush.msra.mxu0 %v265
    %v267 = vand.u32 %v14, 4294901760
    %268 = vmatpush.msra.mxu0 %v267
    %v269 = vand.u32 %v35, 4294901760
    %v270 = vsub.f32 %v35, %v269
    %v271 = vand.u32 %v270, 4294901760
    %v272 = vsub.f32 %v270, %v271
    %v273 = vand.u32 %v272, 4294901760
    %274 = vmatmul.f32.gmra.mxu0 %v273
    %v275 = vpop.f32.mrf.mxu0
    %v276 = vadd.f32 0.0, %v275
    %277 = vdwg.mxu0
    %278 = vmatpush.msra.mxu0 0.0
    %279 = vmatpush.msra.mxu0 0.0
    %280 = vmatpush.msra.mxu0 0.0
    %281 = vmatpush.msra.mxu0 0.0
    %282 = vmatpush.msra.mxu0 0.0
    %283 = vmatpush.msra.mxu0 0.0
    %284 = vmatpush.msra.mxu0 0.0
    %285 = vmatpush.msra.mxu0 0.0
    %286 = vmatpush.msra.mxu0 0.0
    %287 = vmatpush.msra.mxu0 0.0
    %288 = vmatpush.msra.mxu0 0.0
    %v289 = vand.u32 %v42, 4294901760
    %v290 = vsub.f32 %v42, %v289
    %v291 = vand.u32 %v290, 4294901760
    %v292 = vsub.f32 %v290, %v291
    %v293 = vand.u32 %v292, 4294901760
    %294 = vmatpush.msra.mxu0 %v293
    %v295 = vand.u32 %v26, 4294901760
    %v296 = vsub.f32 %v26, %v295
    %v297 = vand.u32 %v296, 4294901760
    %v298 = vsub.f32 %v296, %v297
    %v299 = vand.u32 %v298, 4294901760
    %300 = vmatpush.msra.mxu0 %v299
    %v301 = vand.u32 %v22, 4294901760
    %v302 = vsub.f32 %v22, %v301
    %v303 = vand.u32 %v302, 4294901760
    %v304 = vsub.f32 %v302, %v303
    %v305 = vand.u32 %v304, 4294901760
    %306 = vmatpush.msra.mxu0 %v305
    %v307 = vand.u32 %v18, 4294901760
    %v308 = vsub.f32 %v18, %v307
    %v309 = vand.u32 %v308, 4294901760
    %v310 = vsub.f32 %v308, %v309
    %v311 = vand.u32 %v310, 4294901760
    %312 = vmatpush.msra.mxu0 %v311
    %v313 = vand.u32 %v14, 4294901760
    %v314 = vsub.f32 %v14, %v313
    %v315 = vand.u32 %v314, 4294901760
    %v316 = vsub.f32 %v314, %v315
    %v317 = vand.u32 %v316, 4294901760
    %318 = vmatpush.msra.mxu0 %v317
    %v319 = vand.u32 %v35, 4294901760
    %320 = vmatmul.f32.gmra.mxu0 %v319
    %v321 = vpop.f32.mrf.mxu0
    %v322 = vadd.f32 %v276, %v321
    %323 = vdwg.mxu0
    %324 = vmatpush.msra.mxu0 0.0
    %325 = vmatpush.msra.mxu0 0.0
    %326 = vmatpush.msra.mxu0 0.0
    %327 = vmatpush.msra.mxu0 0.0
    %328 = vmatpush.msra.mxu0 0.0
    %329 = vmatpush.msra.mxu0 0.0
    %330 = vmatpush.msra.mxu0 0.0
    %331 = vmatpush.msra.mxu0 0.0
    %332 = vmatpush.msra.mxu0 0.0
    %333 = vmatpush.msra.mxu0 0.0
    %334 = vmatpush.msra.mxu0 0.0
    %v335 = vand.u32 %v42, 4294901760
    %v336 = vsub.f32 %v42, %v335
    %337 = vmatpush.msra.mxu0 %v336
    %v338 = vand.u32 %v26, 4294901760
    %v339 = vsub.f32 %v26, %v338
    %340 = vmatpush.msra.mxu0 %v339
    %v341 = vand.u32 %v22, 4294901760
    %v342 = vsub.f32 %v22, %v341
    %343 = vmatpush.msra.mxu0 %v342
    %v344 = vand.u32 %v18, 4294901760
    %v345 = vsub.f32 %v18, %v344
    %346 = vmatpush.msra.mxu0 %v345
    %v347 = vand.u32 %v14, 4294901760
    %v348 = vsub.f32 %v14, %v347
    %349 = vmatpush.msra.mxu0 %v348
    %v350 = vand.u32 %v35, 4294901760
    %v351 = vsub.f32 %v35, %v350
    %352 = vmatmul.f32.gmra.mxu0 %v351
    %v353 = vpop.f32.mrf.mxu0
    %v354 = vadd.f32 %v322, %v353
    %355 = vdwg.mxu0
    %356 = vmatpush.msra.mxu0 0.0
    %357 = vmatpush.msra.mxu0 0.0
    %358 = vmatpush.msra.mxu0 0.0
    %359 = vmatpush.msra.mxu0 0.0
    %360 = vmatpush.msra.mxu0 0.0
    %361 = vmatpush.msra.mxu0 0.0
    %362 = vmatpush.msra.mxu0 0.0
    %363 = vmatpush.msra.mxu0 0.0
    %364 = vmatpush.msra.mxu0 0.0
    %365 = vmatpush.msra.mxu0 0.0
    %366 = vmatpush.msra.mxu0 0.0
    %v367 = vand.u32 %v42, 4294901760
    %368 = vmatpush.msra.mxu0 %v367
    %v369 = vand.u32 %v26, 4294901760
    %370 = vmatpush.msra.mxu0 %v369
    %v371 = vand.u32 %v22, 4294901760
    %372 = vmatpush.msra.mxu0 %v371
    %v373 = vand.u32 %v18, 4294901760
    %374 = vmatpush.msra.mxu0 %v373
    %v375 = vand.u32 %v14, 4294901760
    %376 = vmatpush.msra.mxu0 %v375
    %v377 = vand.u32 %v35, 4294901760
    %v378 = vsub.f32 %v35, %v377
    %v379 = vand.u32 %v378, 4294901760
    %380 = vmatmul.f32.gmra.mxu0 %v379
    %v381 = vpop.f32.mrf.mxu0
    %v382 = vadd.f32 %v354, %v381
    %383 = vdwg.mxu0
    %384 = vmatpush.msra.mxu0 0.0
    %385 = vmatpush.msra.mxu0 0.0
    %386 = vmatpush.msra.mxu0 0.0
    %387 = vmatpush.msra.mxu0 0.0
    %388 = vmatpush.msra.mxu0 0.0
    %389 = vmatpush.msra.mxu0 0.0
    %390 = vmatpush.msra.mxu0 0.0
    %391 = vmatpush.msra.mxu0 0.0
    %392 = vmatpush.msra.mxu0 0.0
    %393 = vmatpush.msra.mxu0 0.0
    %394 = vmatpush.msra.mxu0 0.0
    %v395 = vand.u32 %v42, 4294901760
    %v396 = vsub.f32 %v42, %v395
    %v397 = vand.u32 %v396, 4294901760
    %398 = vmatpush.msra.mxu0 %v397
    %v399 = vand.u32 %v26, 4294901760
    %v400 = vsub.f32 %v26, %v399
    %v401 = vand.u32 %v400, 4294901760
    %402 = vmatpush.msra.mxu0 %v401
    %v403 = vand.u32 %v22, 4294901760
    %v404 = vsub.f32 %v22, %v403
    %v405 = vand.u32 %v404, 4294901760
    %406 = vmatpush.msra.mxu0 %v405
    %v407 = vand.u32 %v18, 4294901760
    %v408 = vsub.f32 %v18, %v407
    %v409 = vand.u32 %v408, 4294901760
    %410 = vmatpush.msra.mxu0 %v409
    %v411 = vand.u32 %v14, 4294901760
    %v412 = vsub.f32 %v14, %v411
    %v413 = vand.u32 %v412, 4294901760
    %414 = vmatpush.msra.mxu0 %v413
    %v415 = vand.u32 %v35, 4294901760
    %416 = vmatmul.f32.gmra.mxu0 %v415
    %v417 = vpop.f32.mrf.mxu0
    %v418 = vadd.f32 %v382, %v417
    %419 = vdwg.mxu0
    %420 = vmatpush.msra.mxu0 0.0
    %421 = vmatpush.msra.mxu0 0.0
    %422 = vmatpush.msra.mxu0 0.0
    %423 = vmatpush.msra.mxu0 0.0
    %424 = vmatpush.msra.mxu0 0.0
    %425 = vmatpush.msra.mxu0 0.0
    %426 = vmatpush.msra.mxu0 0.0
    %427 = vmatpush.msra.mxu0 0.0
    %428 = vmatpush.msra.mxu0 0.0
    %429 = vmatpush.msra.mxu0 0.0
    %430 = vmatpush.msra.mxu0 0.0
    %v431 = vand.u32 %v42, 4294901760
    %432 = vmatpush.msra.mxu0 %v431
    %v433 = vand.u32 %v26, 4294901760
    %434 = vmatpush.msra.mxu0 %v433
    %v435 = vand.u32 %v22, 4294901760
    %436 = vmatpush.msra.mxu0 %v435
    %v437 = vand.u32 %v18, 4294901760
    %438 = vmatpush.msra.mxu0 %v437
    %v439 = vand.u32 %v14, 4294901760
    %440 = vmatpush.msra.mxu0 %v439
    %v441 = vand.u32 %v35, 4294901760
    %442 = vmatmul.f32.gmra.mxu0 %v441
    %v443 = vpop.f32.mrf.mxu0
    %v444 = vadd.f32 %v418, %v443
    %445 = vdwg.mxu0
    %446 = vmatpush.msra.mxu0 0.0
    %447 = vmatpush.msra.mxu0 0.0
    %448 = vmatpush.msra.mxu0 0.0
    %449 = vmatpush.msra.mxu0 0.0
    %450 = vmatpush.msra.mxu0 0.0
    %451 = vmatpush.msra.mxu0 0.0
    %452 = vmatpush.msra.mxu0 0.0
    %453 = vmatpush.msra.mxu0 0.0
    %454 = vmatpush.msra.mxu0 0.0
    %455 = vmatpush.msra.mxu0 0.0
    %456 = vmatpush.msra.mxu0 0.0
    %v457 = vand.u32 %v45, 4294901760
    %458 = vmatpush.msra.mxu0 %v457
    %v459 = vand.u32 %v27, 4294901760
    %460 = vmatpush.msra.mxu0 %v459
    %v461 = vand.u32 %v23, 4294901760
    %462 = vmatpush.msra.mxu0 %v461
    %v463 = vand.u32 %v19, 4294901760
    %464 = vmatpush.msra.mxu0 %v463
    %v465 = vand.u32 %v15, 4294901760
    %466 = vmatpush.msra.mxu0 %v465
    %v467 = vand.u32 %v35, 4294901760
    %v468 = vsub.f32 %v35, %v467
    %v469 = vand.u32 %v468, 4294901760
    %v470 = vsub.f32 %v468, %v469
    %v471 = vand.u32 %v470, 4294901760
    %472 = vmatmul.f32.gmra.mxu0 %v471
    %v473 = vpop.f32.mrf.mxu0
    %v474 = vadd.f32 0.0, %v473
    %475 = vdwg.mxu0
    %476 = vmatpush.msra.mxu0 0.0
    %477 = vmatpush.msra.mxu0 0.0
    %478 = vmatpush.msra.mxu0 0.0
    %479 = vmatpush.msra.mxu0 0.0
    %480 = vmatpush.msra.mxu0 0.0
    %481 = vmatpush.msra.mxu0 0.0
    %482 = vmatpush.msra.mxu0 0.0
    %483 = vmatpush.msra.mxu0 0.0
    %484 = vmatpush.msra.mxu0 0.0
    %485 = vmatpush.msra.mxu0 0.0
    %486 = vmatpush.msra.mxu0 0.0
    %v487 = vand.u32 %v45, 4294901760
    %v488 = vsub.f32 %v45, %v487
    %v489 = vand.u32 %v488, 4294901760
    %v490 = vsub.f32 %v488, %v489
    %v491 = vand.u32 %v490, 4294901760
    %492 = vmatpush.msra.mxu0 %v491
    %v493 = vand.u32 %v27, 4294901760
    %v494 = vsub.f32 %v27, %v493
    %v495 = vand.u32 %v494, 4294901760
    %v496 = vsub.f32 %v494, %v495
    %v497 = vand.u32 %v496, 4294901760
    %498 = vmatpush.msra.mxu0 %v497
    %v499 = vand.u32 %v23, 4294901760
    %v500 = vsub.f32 %v23, %v499
    %v501 = vand.u32 %v500, 4294901760
    %v502 = vsub.f32 %v500, %v501
    %v503 = vand.u32 %v502, 4294901760
    %504 = vmatpush.msra.mxu0 %v503
    %v505 = vand.u32 %v19, 4294901760
    %v506 = vsub.f32 %v19, %v505
    %v507 = vand.u32 %v506, 4294901760
    %v508 = vsub.f32 %v506, %v507
    %v509 = vand.u32 %v508, 4294901760
    %510 = vmatpush.msra.mxu0 %v509
    %v511 = vand.u32 %v15, 4294901760
    %v512 = vsub.f32 %v15, %v511
    %v513 = vand.u32 %v512, 4294901760
    %v514 = vsub.f32 %v512, %v513
    %v515 = vand.u32 %v514, 4294901760
    %516 = vmatpush.msra.mxu0 %v515
    %v517 = vand.u32 %v35, 4294901760
    %518 = vmatmul.f32.gmra.mxu0 %v517
    %v519 = vpop.f32.mrf.mxu0
    %v520 = vadd.f32 %v474, %v519
    %521 = vdwg.mxu0
    %522 = vmatpush.msra.mxu0 0.0
    %523 = vmatpush.msra.mxu0 0.0
    %524 = vmatpush.msra.mxu0 0.0
    %525 = vmatpush.msra.mxu0 0.0
    %526 = vmatpush.msra.mxu0 0.0
    %527 = vmatpush.msra.mxu0 0.0
    %528 = vmatpush.msra.mxu0 0.0
    %529 = vmatpush.msra.mxu0 0.0
    %530 = vmatpush.msra.mxu0 0.0
    %531 = vmatpush.msra.mxu0 0.0
    %532 = vmatpush.msra.mxu0 0.0
    %v533 = vand.u32 %v45, 4294901760
    %v534 = vsub.f32 %v45, %v533
    %535 = vmatpush.msra.mxu0 %v534
    %v536 = vand.u32 %v27, 4294901760
    %v537 = vsub.f32 %v27, %v536
    %538 = vmatpush.msra.mxu0 %v537
    %v539 = vand.u32 %v23, 4294901760
    %v540 = vsub.f32 %v23, %v539
    %541 = vmatpush.msra.mxu0 %v540
    %v542 = vand.u32 %v19, 4294901760
    %v543 = vsub.f32 %v19, %v542
    %544 = vmatpush.msra.mxu0 %v543
    %v545 = vand.u32 %v15, 4294901760
    %v546 = vsub.f32 %v15, %v545
    %547 = vmatpush.msra.mxu0 %v546
    %v548 = vand.u32 %v35, 4294901760
    %v549 = vsub.f32 %v35, %v548
    %550 = vmatmul.f32.gmra.mxu0 %v549
    %v551 = vpop.f32.mrf.mxu0
    %v552 = vadd.f32 %v520, %v551
    %553 = vdwg.mxu0
    %554 = vmatpush.msra.mxu0 0.0
    %555 = vmatpush.msra.mxu0 0.0
    %556 = vmatpush.msra.mxu0 0.0
    %557 = vmatpush.msra.mxu0 0.0
    %558 = vmatpush.msra.mxu0 0.0
    %559 = vmatpush.msra.mxu0 0.0
    %560 = vmatpush.msra.mxu0 0.0
    %561 = vmatpush.msra.mxu0 0.0
    %562 = vmatpush.msra.mxu0 0.0
    %563 = vmatpush.msra.mxu0 0.0
    %564 = vmatpush.msra.mxu0 0.0
    %v565 = vand.u32 %v45, 4294901760
    %566 = vmatpush.msra.mxu0 %v565
    %v567 = vand.u32 %v27, 4294901760
    %568 = vmatpush.msra.mxu0 %v567
    %v569 = vand.u32 %v23, 4294901760
    %570 = vmatpush.msra.mxu0 %v569
    %v571 = vand.u32 %v19, 4294901760
    %572 = vmatpush.msra.mxu0 %v571
    %v573 = vand.u32 %v15, 4294901760
    %574 = vmatpush.msra.mxu0 %v573
    %v575 = vand.u32 %v35, 4294901760
    %v576 = vsub.f32 %v35, %v575
    %v577 = vand.u32 %v576, 4294901760
    %578 = vmatmul.f32.gmra.mxu0 %v577
    %v579 = vpop.f32.mrf.mxu0
    %v580 = vadd.f32 %v552, %v579
    %581 = vdwg.mxu0
    %582 = vmatpush.msra.mxu0 0.0
    %583 = vmatpush.msra.mxu0 0.0
    %584 = vmatpush.msra.mxu0 0.0
    %585 = vmatpush.msra.mxu0 0.0
    %586 = vmatpush.msra.mxu0 0.0
    %587 = vmatpush.msra.mxu0 0.0
    %588 = vmatpush.msra.mxu0 0.0
    %589 = vmatpush.msra.mxu0 0.0
    %590 = vmatpush.msra.mxu0 0.0
    %591 = vmatpush.msra.mxu0 0.0
    %592 = vmatpush.msra.mxu0 0.0
    %v593 = vand.u32 %v45, 4294901760
    %v594 = vsub.f32 %v45, %v593
    %v595 = vand.u32 %v594, 4294901760
    %596 = vmatpush.msra.mxu0 %v595
    %v597 = vand.u32 %v27, 4294901760
    %v598 = vsub.f32 %v27, %v597
    %v599 = vand.u32 %v598, 4294901760
    %600 = vmatpush.msra.mxu0 %v599
    %v601 = vand.u32 %v23, 4294901760
    %v602 = vsub.f32 %v23, %v601
    %v603 = vand.u32 %v602, 4294901760
    %604 = vmatpush.msra.mxu0 %v603
    %v605 = vand.u32 %v19, 4294901760
    %v606 = vsub.f32 %v19, %v605
    %v607 = vand.u32 %v606, 4294901760
    %608 = vmatpush.msra.mxu0 %v607
    %v609 = vand.u32 %v15, 4294901760
    %v610 = vsub.f32 %v15, %v609
    %v611 = vand.u32 %v610, 4294901760
    %612 = vmatpush.msra.mxu0 %v611
    %v613 = vand.u32 %v35, 4294901760
    %614 = vmatmul.f32.gmra.mxu0 %v613
    %v615 = vpop.f32.mrf.mxu0
    %v616 = vadd.f32 %v580, %v615
    %617 = vdwg.mxu0
    %618 = vmatpush.msra.mxu0 0.0
    %619 = vmatpush.msra.mxu0 0.0
    %620 = vmatpush.msra.mxu0 0.0
    %621 = vmatpush.msra.mxu0 0.0
    %622 = vmatpush.msra.mxu0 0.0
    %623 = vmatpush.msra.mxu0 0.0
    %624 = vmatpush.msra.mxu0 0.0
    %625 = vmatpush.msra.mxu0 0.0
    %626 = vmatpush.msra.mxu0 0.0
    %627 = vmatpush.msra.mxu0 0.0
    %628 = vmatpush.msra.mxu0 0.0
    %v629 = vand.u32 %v45, 4294901760
    %630 = vmatpush.msra.mxu0 %v629
    %v631 = vand.u32 %v27, 4294901760
    %632 = vmatpush.msra.mxu0 %v631
    %v633 = vand.u32 %v23, 4294901760
    %634 = vmatpush.msra.mxu0 %v633
    %v635 = vand.u32 %v19, 4294901760
    %636 = vmatpush.msra.mxu0 %v635
    %v637 = vand.u32 %v15, 4294901760
    %638 = vmatpush.msra.mxu0 %v637
    %v639 = vand.u32 %v35, 4294901760
    %640 = vmatmul.f32.gmra.mxu0 %v639
    %v641 = vpop.f32.mrf.mxu0
    %v642 = vadd.f32 %v616, %v641
    %643 = vdwg.mxu0
    %644 = vmatpush.msra.mxu0 0.0
    %645 = vmatpush.msra.mxu0 0.0
    %646 = vmatpush.msra.mxu0 0.0
    %647 = vmatpush.msra.mxu0 0.0
    %648 = vmatpush.msra.mxu0 0.0
    %649 = vmatpush.msra.mxu0 0.0
    %650 = vmatpush.msra.mxu0 0.0
    %651 = vmatpush.msra.mxu0 0.0
    %652 = vmatpush.msra.mxu0 0.0
    %653 = vmatpush.msra.mxu0 0.0
    %654 = vmatpush.msra.mxu0 0.0
    %v655 = vand.u32 %v48, 4294901760
    %656 = vmatpush.msra.mxu0 %v655
    %v657 = vand.u32 %v28, 4294901760
    %658 = vmatpush.msra.mxu0 %v657
    %v659 = vand.u32 %v24, 4294901760
    %660 = vmatpush.msra.mxu0 %v659
    %v661 = vand.u32 %v20, 4294901760
    %662 = vmatpush.msra.mxu0 %v661
    %v663 = vand.u32 %v16, 4294901760
    %664 = vmatpush.msra.mxu0 %v663
    %v665 = vand.u32 %v35, 4294901760
    %v666 = vsub.f32 %v35, %v665
    %v667 = vand.u32 %v666, 4294901760
    %v668 = vsub.f32 %v666, %v667
    %v669 = vand.u32 %v668, 4294901760
    %670 = vmatmul.f32.gmra.mxu0 %v669
    %v671 = vpop.f32.mrf.mxu0
    %v672 = vadd.f32 0.0, %v671
    %673 = vdwg.mxu0
    %674 = vmatpush.msra.mxu0 0.0
    %675 = vmatpush.msra.mxu0 0.0
    %676 = vmatpush.msra.mxu0 0.0
    %677 = vmatpush.msra.mxu0 0.0
    %678 = vmatpush.msra.mxu0 0.0
    %679 = vmatpush.msra.mxu0 0.0
    %680 = vmatpush.msra.mxu0 0.0
    %681 = vmatpush.msra.mxu0 0.0
    %682 = vmatpush.msra.mxu0 0.0
    %683 = vmatpush.msra.mxu0 0.0
    %684 = vmatpush.msra.mxu0 0.0
    %v685 = vand.u32 %v48, 4294901760
    %v686 = vsub.f32 %v48, %v685
    %v687 = vand.u32 %v686, 4294901760
    %v688 = vsub.f32 %v686, %v687
    %v689 = vand.u32 %v688, 4294901760
    %690 = vmatpush.msra.mxu0 %v689
    %v691 = vand.u32 %v28, 4294901760
    %v692 = vsub.f32 %v28, %v691
    %v693 = vand.u32 %v692, 4294901760
    %v694 = vsub.f32 %v692, %v693
    %v695 = vand.u32 %v694, 4294901760
    %696 = vmatpush.msra.mxu0 %v695
    %v697 = vand.u32 %v24, 4294901760
    %v698 = vsub.f32 %v24, %v697
    %v699 = vand.u32 %v698, 4294901760
    %v700 = vsub.f32 %v698, %v699
    %v701 = vand.u32 %v700, 4294901760
    %702 = vmatpush.msra.mxu0 %v701
    %v703 = vand.u32 %v20, 4294901760
    %v704 = vsub.f32 %v20, %v703
    %v705 = vand.u32 %v704, 4294901760
    %v706 = vsub.f32 %v704, %v705
    %v707 = vand.u32 %v706, 4294901760
    %708 = vmatpush.msra.mxu0 %v707
    %v709 = vand.u32 %v16, 4294901760
    %v710 = vsub.f32 %v16, %v709
    %v711 = vand.u32 %v710, 4294901760
    %v712 = vsub.f32 %v710, %v711
    %v713 = vand.u32 %v712, 4294901760
    %714 = vmatpush.msra.mxu0 %v713
    %v715 = vand.u32 %v35, 4294901760
    %716 = vmatmul.f32.gmra.mxu0 %v715
    %v717 = vpop.f32.mrf.mxu0
    %v718 = vadd.f32 %v672, %v717
    %719 = vdwg.mxu0
    %720 = vmatpush.msra.mxu0 0.0
    %721 = vmatpush.msra.mxu0 0.0
    %722 = vmatpush.msra.mxu0 0.0
    %723 = vmatpush.msra.mxu0 0.0
    %724 = vmatpush.msra.mxu0 0.0
    %725 = vmatpush.msra.mxu0 0.0
    %726 = vmatpush.msra.mxu0 0.0
    %727 = vmatpush.msra.mxu0 0.0
    %728 = vmatpush.msra.mxu0 0.0
    %729 = vmatpush.msra.mxu0 0.0
    %730 = vmatpush.msra.mxu0 0.0
    %v731 = vand.u32 %v48, 4294901760
    %v732 = vsub.f32 %v48, %v731
    %733 = vmatpush.msra.mxu0 %v732
    %v734 = vand.u32 %v28, 4294901760
    %v735 = vsub.f32 %v28, %v734
    %736 = vmatpush.msra.mxu0 %v735
    %v737 = vand.u32 %v24, 4294901760
    %v738 = vsub.f32 %v24, %v737
    %739 = vmatpush.msra.mxu0 %v738
    %v740 = vand.u32 %v20, 4294901760
    %v741 = vsub.f32 %v20, %v740
    %742 = vmatpush.msra.mxu0 %v741
    %v743 = vand.u32 %v16, 4294901760
    %v744 = vsub.f32 %v16, %v743
    %745 = vmatpush.msra.mxu0 %v744
    %v746 = vand.u32 %v35, 4294901760
    %v747 = vsub.f32 %v35, %v746
    %748 = vmatmul.f32.gmra.mxu0 %v747
    %v749 = vpop.f32.mrf.mxu0
    %v750 = vadd.f32 %v718, %v749
    %751 = vdwg.mxu0
    %752 = vmatpush.msra.mxu0 0.0
    %753 = vmatpush.msra.mxu0 0.0
    %754 = vmatpush.msra.mxu0 0.0
    %755 = vmatpush.msra.mxu0 0.0
    %756 = vmatpush.msra.mxu0 0.0
    %757 = vmatpush.msra.mxu0 0.0
    %758 = vmatpush.msra.mxu0 0.0
    %759 = vmatpush.msra.mxu0 0.0
    %760 = vmatpush.msra.mxu0 0.0
    %761 = vmatpush.msra.mxu0 0.0
    %762 = vmatpush.msra.mxu0 0.0
    %v763 = vand.u32 %v48, 4294901760
    %764 = vmatpush.msra.mxu0 %v763
    %v765 = vand.u32 %v28, 4294901760
    %766 = vmatpush.msra.mxu0 %v765
    %v767 = vand.u32 %v24, 4294901760
    %768 = vmatpush.msra.mxu0 %v767
    %v769 = vand.u32 %v20, 4294901760
    %770 = vmatpush.msra.mxu0 %v769
    %v771 = vand.u32 %v16, 4294901760
    %772 = vmatpush.msra.mxu0 %v771
    %v773 = vand.u32 %v35, 4294901760
    %v774 = vsub.f32 %v35, %v773
    %v775 = vand.u32 %v774, 4294901760
    %776 = vmatmul.f32.gmra.mxu0 %v775
    %v777 = vpop.f32.mrf.mxu0
    %v778 = vadd.f32 %v750, %v777
    %779 = vdwg.mxu0
    %780 = vmatpush.msra.mxu0 0.0
    %781 = vmatpush.msra.mxu0 0.0
    %782 = vmatpush.msra.mxu0 0.0
    %783 = vmatpush.msra.mxu0 0.0
    %784 = vmatpush.msra.mxu0 0.0
    %785 = vmatpush.msra.mxu0 0.0
    %786 = vmatpush.msra.mxu0 0.0
    %787 = vmatpush.msra.mxu0 0.0
    %788 = vmatpush.msra.mxu0 0.0
    %789 = vmatpush.msra.mxu0 0.0
    %790 = vmatpush.msra.mxu0 0.0
    %v791 = vand.u32 %v48, 4294901760
    %v792 = vsub.f32 %v48, %v791
    %v793 = vand.u32 %v792, 4294901760
    %794 = vmatpush.msra.mxu0 %v793
    %v795 = vand.u32 %v28, 4294901760
    %v796 = vsub.f32 %v28, %v795
    %v797 = vand.u32 %v796, 4294901760
    %798 = vmatpush.msra.mxu0 %v797
    %v799 = vand.u32 %v24, 4294901760
    %v800 = vsub.f32 %v24, %v799
    %v801 = vand.u32 %v800, 4294901760
    %802 = vmatpush.msra.mxu0 %v801
    %v803 = vand.u32 %v20, 4294901760
    %v804 = vsub.f32 %v20, %v803
    %v805 = vand.u32 %v804, 4294901760
    %806 = vmatpush.msra.mxu0 %v805
    %v807 = vand.u32 %v16, 4294901760
    %v808 = vsub.f32 %v16, %v807
    %v809 = vand.u32 %v808, 4294901760
    %810 = vmatpush.msra.mxu0 %v809
    %v811 = vand.u32 %v35, 4294901760
    %812 = vmatmul.f32.gmra.mxu0 %v811
    %v813 = vpop.f32.mrf.mxu0
    %v814 = vadd.f32 %v778, %v813
    %815 = vdwg.mxu0
    %816 = vmatpush.msra.mxu0 0.0
    %817 = vmatpush.msra.mxu0 0.0
    %818 = vmatpush.msra.mxu0 0.0
    %819 = vmatpush.msra.mxu0 0.0
    %820 = vmatpush.msra.mxu0 0.0
    %821 = vmatpush.msra.mxu0 0.0
    %822 = vmatpush.msra.mxu0 0.0
    %823 = vmatpush.msra.mxu0 0.0
    %824 = vmatpush.msra.mxu0 0.0
    %825 = vmatpush.msra.mxu0 0.0
    %826 = vmatpush.msra.mxu0 0.0
    %v827 = vand.u32 %v48, 4294901760
    %828 = vmatpush.msra.mxu0 %v827
    %v829 = vand.u32 %v28, 4294901760
    %830 = vmatpush.msra.mxu0 %v829
    %v831 = vand.u32 %v24, 4294901760
    %832 = vmatpush.msra.mxu0 %v831
    %v833 = vand.u32 %v20, 4294901760
    %834 = vmatpush.msra.mxu0 %v833
    %v835 = vand.u32 %v16, 4294901760
    %836 = vmatpush.msra.mxu0 %v835
    %v837 = vand.u32 %v35, 4294901760
    %838 = vmatmul.f32.gmra.mxu0 %v837
    %v839 = vpop.f32.mrf.mxu0
    %v840 = vadd.f32 %v814, %v839
    %841 = vdwg.mxu0
    %s842 = scalar_lea.vmem %s0, 160
    %v843 = vld [vmem:[%s842] sm:$0xff]
    %v844 = vld [vmem:[%s842 + $0x8] sm:$0xff]
    %v845 = vld [vmem:[%s842 + $0x10] sm:$0xff]
    %v846 = vld [vmem:[%s842 + $0x18] sm:$0xff]
    %v847 = vld [vmem:[%s842 + $0x20] sm:$0xff]
    %v848 = vld [vmem:[%s842 + $0x28] sm:$0xff]
    %v849 = vld [vmem:[%s842 + $0x30] sm:$0xff]
    %v850 = vld [vmem:[%s842 + $0x38] sm:$0xff]
    %v851 = vld [vmem:[%s842 + $0x40] sm:$0xff]
    %v852 = vld [vmem:[%s842 + $0x48] sm:$0xff]
    %v853 = vld [vmem:[%s842 + $0x50] sm:$0xff]
    %v854 = vld [vmem:[%s842 + $0x58] sm:$0xff]
    %v855 = vld [vmem:[%s842 + $0x60] sm:$0xff]
    %v856 = vld [vmem:[%s842 + $0x68] sm:$0xff]
    %v857 = vld [vmem:[%s842 + $0x70] sm:$0xff]
    %v858 = vld [vmem:[%s842 + $0x78] sm:$0xff]
    %v859 = vld [vmem:[%s842 + $0x80] sm:$0x1f]
    %v860 = vld [vmem:[%s842 + $0x88] sm:$0x1f]
    %v861 = vld [vmem:[%s842 + $0x90] sm:$0x1f]
    %v862 = vld [vmem:[%s842 + $0x98] sm:$0x1f]
    %v864 = vsel %vm37, %v859, 0
    %v867 = vsel %vm37, %v860, 0
    %v870 = vsel %vm37, %v861, 0
    %v873 = vsel %vm37, %v862, 0
    %875 = vmatpush.msra.mxu0 0.0
    %876 = vmatpush.msra.mxu0 0.0
    %877 = vmatpush.msra.mxu0 0.0
    %878 = vmatpush.msra.mxu0 0.0
    %879 = vmatpush.msra.mxu0 0.0
    %880 = vmatpush.msra.mxu0 0.0
    %881 = vmatpush.msra.mxu0 0.0
    %882 = vmatpush.msra.mxu0 0.0
    %883 = vmatpush.msra.mxu0 0.0
    %884 = vmatpush.msra.mxu0 0.0
    %885 = vmatpush.msra.mxu0 0.0
    %v886 = vand.u32 %v864, 4294901760
    %887 = vmatpush.msra.mxu0 %v886
    %v888 = vand.u32 %v855, 4294901760
    %889 = vmatpush.msra.mxu0 %v888
    %v890 = vand.u32 %v851, 4294901760
    %891 = vmatpush.msra.mxu0 %v890
    %v892 = vand.u32 %v847, 4294901760
    %893 = vmatpush.msra.mxu0 %v892
    %v894 = vand.u32 %v843, 4294901760
    %895 = vmatpush.msra.mxu0 %v894
    %v896 = vand.u32 %v35, 4294901760
    %v897 = vsub.f32 %v35, %v896
    %v898 = vand.u32 %v897, 4294901760
    %v899 = vsub.f32 %v897, %v898
    %v900 = vand.u32 %v899, 4294901760
    %901 = vmatmul.f32.gmra.mxu0 %v900
    %v902 = vpop.f32.mrf.mxu0
    %v903 = vadd.f32 0.0, %v902
    %904 = vdwg.mxu0
    %905 = vmatpush.msra.mxu0 0.0
    %906 = vmatpush.msra.mxu0 0.0
    %907 = vmatpush.msra.mxu0 0.0
    %908 = vmatpush.msra.mxu0 0.0
    %909 = vmatpush.msra.mxu0 0.0
    %910 = vmatpush.msra.mxu0 0.0
    %911 = vmatpush.msra.mxu0 0.0
    %912 = vmatpush.msra.mxu0 0.0
    %913 = vmatpush.msra.mxu0 0.0
    %914 = vmatpush.msra.mxu0 0.0
    %915 = vmatpush.msra.mxu0 0.0
    %v916 = vand.u32 %v864, 4294901760
    %v917 = vsub.f32 %v864, %v916
    %v918 = vand.u32 %v917, 4294901760
    %v919 = vsub.f32 %v917, %v918
    %v920 = vand.u32 %v919, 4294901760
    %921 = vmatpush.msra.mxu0 %v920
    %v922 = vand.u32 %v855, 4294901760
    %v923 = vsub.f32 %v855, %v922
    %v924 = vand.u32 %v923, 4294901760
    %v925 = vsub.f32 %v923, %v924
    %v926 = vand.u32 %v925, 4294901760
    %927 = vmatpush.msra.mxu0 %v926
    %v928 = vand.u32 %v851, 4294901760
    %v929 = vsub.f32 %v851, %v928
    %v930 = vand.u32 %v929, 4294901760
    %v931 = vsub.f32 %v929, %v930
    %v932 = vand.u32 %v931, 4294901760
    %933 = vmatpush.msra.mxu0 %v932
    %v934 = vand.u32 %v847, 4294901760
    %v935 = vsub.f32 %v847, %v934
    %v936 = vand.u32 %v935, 4294901760
    %v937 = vsub.f32 %v935, %v936
    %v938 = vand.u32 %v937, 4294901760
    %939 = vmatpush.msra.mxu0 %v938
    %v940 = vand.u32 %v843, 4294901760
    %v941 = vsub.f32 %v843, %v940
    %v942 = vand.u32 %v941, 4294901760
    %v943 = vsub.f32 %v941, %v942
    %v944 = vand.u32 %v943, 4294901760
    %945 = vmatpush.msra.mxu0 %v944
    %v946 = vand.u32 %v35, 4294901760
    %947 = vmatmul.f32.gmra.mxu0 %v946
    %v948 = vpop.f32.mrf.mxu0
    %v949 = vadd.f32 %v903, %v948
    %950 = vdwg.mxu0
    %951 = vmatpush.msra.mxu0 0.0
    %952 = vmatpush.msra.mxu0 0.0
    %953 = vmatpush.msra.mxu0 0.0
    %954 = vmatpush.msra.mxu0 0.0
    %955 = vmatpush.msra.mxu0 0.0
    %956 = vmatpush.msra.mxu0 0.0
    %957 = vmatpush.msra.mxu0 0.0
    %958 = vmatpush.msra.mxu0 0.0
    %959 = vmatpush.msra.mxu0 0.0
    %960 = vmatpush.msra.mxu0 0.0
    %961 = vmatpush.msra.mxu0 0.0
    %v962 = vand.u32 %v864, 4294901760
    %v963 = vsub.f32 %v864, %v962
    %964 = vmatpush.msra.mxu0 %v963
    %v965 = vand.u32 %v855, 4294901760
    %v966 = vsub.f32 %v855, %v965
    %967 = vmatpush.msra.mxu0 %v966
    %v968 = vand.u32 %v851, 4294901760
    %v969 = vsub.f32 %v851, %v968
    %970 = vmatpush.msra.mxu0 %v969
    %v971 = vand.u32 %v847, 4294901760
    %v972 = vsub.f32 %v847, %v971
    %973 = vmatpush.msra.mxu0 %v972
    %v974 = vand.u32 %v843, 4294901760
    %v975 = vsub.f32 %v843, %v974
    %976 = vmatpush.msra.mxu0 %v975
    %v977 = vand.u32 %v35, 4294901760
    %v978 = vsub.f32 %v35, %v977
    %979 = vmatmul.f32.gmra.mxu0 %v978
    %v980 = vpop.f32.mrf.mxu0
    %v981 = vadd.f32 %v949, %v980
    %982 = vdwg.mxu0
    %983 = vmatpush.msra.mxu0 0.0
    %984 = vmatpush.msra.mxu0 0.0
    %985 = vmatpush.msra.mxu0 0.0
    %986 = vmatpush.msra.mxu0 0.0
    %987 = vmatpush.msra.mxu0 0.0
    %988 = vmatpush.msra.mxu0 0.0
    %989 = vmatpush.msra.mxu0 0.0
    %990 = vmatpush.msra.mxu0 0.0
    %991 = vmatpush.msra.mxu0 0.0
    %992 = vmatpush.msra.mxu0 0.0
    %993 = vmatpush.msra.mxu0 0.0
    %v994 = vand.u32 %v864, 4294901760
    %995 = vmatpush.msra.mxu0 %v994
    %v996 = vand.u32 %v855, 4294901760
    %997 = vmatpush.msra.mxu0 %v996
    %v998 = vand.u32 %v851, 4294901760
    %999 = vmatpush.msra.mxu0 %v998
    %v1000 = vand.u32 %v847, 4294901760
    %1001 = vmatpush.msra.mxu0 %v1000
    %v1002 = vand.u32 %v843, 4294901760
    %1003 = vmatpush.msra.mxu0 %v1002
    %v1004 = vand.u32 %v35, 4294901760
    %v1005 = vsub.f32 %v35, %v1004
    %v1006 = vand.u32 %v1005, 4294901760
    %1007 = vmatmul.f32.gmra.mxu0 %v1006
    %v1008 = vpop.f32.mrf.mxu0
    %v1009 = vadd.f32 %v981, %v1008
    %1010 = vdwg.mxu0
    %1011 = vmatpush.msra.mxu0 0.0
    %1012 = vmatpush.msra.mxu0 0.0
    %1013 = vmatpush.msra.mxu0 0.0
    %1014 = vmatpush.msra.mxu0 0.0
    %1015 = vmatpush.msra.mxu0 0.0
    %1016 = vmatpush.msra.mxu0 0.0
    %1017 = vmatpush.msra.mxu0 0.0
    %1018 = vmatpush.msra.mxu0 0.0
    %1019 = vmatpush.msra.mxu0 0.0
    %1020 = vmatpush.msra.mxu0 0.0
    %1021 = vmatpush.msra.mxu0 0.0
    %v1022 = vand.u32 %v864, 4294901760
    %v1023 = vsub.f32 %v864, %v1022
    %v1024 = vand.u32 %v1023, 4294901760
    %1025 = vmatpush.msra.mxu0 %v1024
    %v1026 = vand.u32 %v855, 4294901760
    %v1027 = vsub.f32 %v855, %v1026
    %v1028 = vand.u32 %v1027, 4294901760
    %1029 = vmatpush.msra.mxu0 %v1028
    %v1030 = vand.u32 %v851, 4294901760
    %v1031 = vsub.f32 %v851, %v1030
    %v1032 = vand.u32 %v1031, 4294901760
    %1033 = vmatpush.msra.mxu0 %v1032
    %v1034 = vand.u32 %v847, 4294901760
    %v1035 = vsub.f32 %v847, %v1034
    %v1036 = vand.u32 %v1035, 4294901760
    %1037 = vmatpush.msra.mxu0 %v1036
    %v1038 = vand.u32 %v843, 4294901760
    %v1039 = vsub.f32 %v843, %v1038
    %v1040 = vand.u32 %v1039, 4294901760
    %1041 = vmatpush.msra.mxu0 %v1040
    %v1042 = vand.u32 %v35, 4294901760
    %1043 = vmatmul.f32.gmra.mxu0 %v1042
    %v1044 = vpop.f32.mrf.mxu0
    %v1045 = vadd.f32 %v1009, %v1044
    %1046 = vdwg.mxu0
    %1047 = vmatpush.msra.mxu0 0.0
    %1048 = vmatpush.msra.mxu0 0.0
    %1049 = vmatpush.msra.mxu0 0.0
    %1050 = vmatpush.msra.mxu0 0.0
    %1051 = vmatpush.msra.mxu0 0.0
    %1052 = vmatpush.msra.mxu0 0.0
    %1053 = vmatpush.msra.mxu0 0.0
    %1054 = vmatpush.msra.mxu0 0.0
    %1055 = vmatpush.msra.mxu0 0.0
    %1056 = vmatpush.msra.mxu0 0.0
    %1057 = vmatpush.msra.mxu0 0.0
    %v1058 = vand.u32 %v864, 4294901760
    %1059 = vmatpush.msra.mxu0 %v1058
    %v1060 = vand.u32 %v855, 4294901760
    %1061 = vmatpush.msra.mxu0 %v1060
    %v1062 = vand.u32 %v851, 4294901760
    %1063 = vmatpush.msra.mxu0 %v1062
    %v1064 = vand.u32 %v847, 4294901760
    %1065 = vmatpush.msra.mxu0 %v1064
    %v1066 = vand.u32 %v843, 4294901760
    %1067 = vmatpush.msra.mxu0 %v1066
    %v1068 = vand.u32 %v35, 4294901760
    %1069 = vmatmul.f32.gmra.mxu0 %v1068
    %v1070 = vpop.f32.mrf.mxu0
    %v1071 = vadd.f32 %v1045, %v1070
    %1072 = vdwg.mxu0
    %1073 = vmatpush.msra.mxu0 0.0
    %1074 = vmatpush.msra.mxu0 0.0
    %1075 = vmatpush.msra.mxu0 0.0
    %1076 = vmatpush.msra.mxu0 0.0
    %1077 = vmatpush.msra.mxu0 0.0
    %1078 = vmatpush.msra.mxu0 0.0
    %1079 = vmatpush.msra.mxu0 0.0
    %1080 = vmatpush.msra.mxu0 0.0
    %1081 = vmatpush.msra.mxu0 0.0
    %1082 = vmatpush.msra.mxu0 0.0
    %1083 = vmatpush.msra.mxu0 0.0
    %v1084 = vand.u32 %v867, 4294901760
    %1085 = vmatpush.msra.mxu0 %v1084
    %v1086 = vand.u32 %v856, 4294901760
    %1087 = vmatpush.msra.mxu0 %v1086
    %v1088 = vand.u32 %v852, 4294901760
    %1089 = vmatpush.msra.mxu0 %v1088
    %v1090 = vand.u32 %v848, 4294901760
    %1091 = vmatpush.msra.mxu0 %v1090
    %v1092 = vand.u32 %v844, 4294901760
    %1093 = vmatpush.msra.mxu0 %v1092
    %v1094 = vand.u32 %v35, 4294901760
    %v1095 = vsub.f32 %v35, %v1094
    %v1096 = vand.u32 %v1095, 4294901760
    %v1097 = vsub.f32 %v1095, %v1096
    %v1098 = vand.u32 %v1097, 4294901760
    %1099 = vmatmul.f32.gmra.mxu0 %v1098
    %v1100 = vpop.f32.mrf.mxu0
    %v1101 = vadd.f32 0.0, %v1100
    %1102 = vdwg.mxu0
    %1103 = vmatpush.msra.mxu0 0.0
    %1104 = vmatpush.msra.mxu0 0.0
    %1105 = vmatpush.msra.mxu0 0.0
    %1106 = vmatpush.msra.mxu0 0.0
    %1107 = vmatpush.msra.mxu0 0.0
    %1108 = vmatpush.msra.mxu0 0.0
    %1109 = vmatpush.msra.mxu0 0.0
    %1110 = vmatpush.msra.mxu0 0.0
    %1111 = vmatpush.msra.mxu0 0.0
    %1112 = vmatpush.msra.mxu0 0.0
    %1113 = vmatpush.msra.mxu0 0.0
    %v1114 = vand.u32 %v867, 4294901760
    %v1115 = vsub.f32 %v867, %v1114
    %v1116 = vand.u32 %v1115, 4294901760
    %v1117 = vsub.f32 %v1115, %v1116
    %v1118 = vand.u32 %v1117, 4294901760
    %1119 = vmatpush.msra.mxu0 %v1118
    %v1120 = vand.u32 %v856, 4294901760
    %v1121 = vsub.f32 %v856, %v1120
    %v1122 = vand.u32 %v1121, 4294901760
    %v1123 = vsub.f32 %v1121, %v1122
    %v1124 = vand.u32 %v1123, 4294901760
    %1125 = vmatpush.msra.mxu0 %v1124
    %v1126 = vand.u32 %v852, 4294901760
    %v1127 = vsub.f32 %v852, %v1126
    %v1128 = vand.u32 %v1127, 4294901760
    %v1129 = vsub.f32 %v1127, %v1128
    %v1130 = vand.u32 %v1129, 4294901760
    %1131 = vmatpush.msra.mxu0 %v1130
    %v1132 = vand.u32 %v848, 4294901760
    %v1133 = vsub.f32 %v848, %v1132
    %v1134 = vand.u32 %v1133, 4294901760
    %v1135 = vsub.f32 %v1133, %v1134
    %v1136 = vand.u32 %v1135, 4294901760
    %1137 = vmatpush.msra.mxu0 %v1136
    %v1138 = vand.u32 %v844, 4294901760
    %v1139 = vsub.f32 %v844, %v1138
    %v1140 = vand.u32 %v1139, 4294901760
    %v1141 = vsub.f32 %v1139, %v1140
    %v1142 = vand.u32 %v1141, 4294901760
    %1143 = vmatpush.msra.mxu0 %v1142
    %v1144 = vand.u32 %v35, 4294901760
    %1145 = vmatmul.f32.gmra.mxu0 %v1144
    %v1146 = vpop.f32.mrf.mxu0
    %v1147 = vadd.f32 %v1101, %v1146
    %1148 = vdwg.mxu0
    %1149 = vmatpush.msra.mxu0 0.0
    %1150 = vmatpush.msra.mxu0 0.0
    %1151 = vmatpush.msra.mxu0 0.0
    %1152 = vmatpush.msra.mxu0 0.0
    %1153 = vmatpush.msra.mxu0 0.0
    %1154 = vmatpush.msra.mxu0 0.0
    %1155 = vmatpush.msra.mxu0 0.0
    %1156 = vmatpush.msra.mxu0 0.0
    %1157 = vmatpush.msra.mxu0 0.0
    %1158 = vmatpush.msra.mxu0 0.0
    %1159 = vmatpush.msra.mxu0 0.0
    %v1160 = vand.u32 %v867, 4294901760
    %v1161 = vsub.f32 %v867, %v1160
    %1162 = vmatpush.msra.mxu0 %v1161
    %v1163 = vand.u32 %v856, 4294901760
    %v1164 = vsub.f32 %v856, %v1163
    %1165 = vmatpush.msra.mxu0 %v1164
    %v1166 = vand.u32 %v852, 4294901760
    %v1167 = vsub.f32 %v852, %v1166
    %1168 = vmatpush.msra.mxu0 %v1167
    %v1169 = vand.u32 %v848, 4294901760
    %v1170 = vsub.f32 %v848, %v1169
    %1171 = vmatpush.msra.mxu0 %v1170
    %v1172 = vand.u32 %v844, 4294901760
    %v1173 = vsub.f32 %v844, %v1172
    %1174 = vmatpush.msra.mxu0 %v1173
    %v1175 = vand.u32 %v35, 4294901760
    %v1176 = vsub.f32 %v35, %v1175
    %1177 = vmatmul.f32.gmra.mxu0 %v1176
    %v1178 = vpop.f32.mrf.mxu0
    %v1179 = vadd.f32 %v1147, %v1178
    %1180 = vdwg.mxu0
    %1181 = vmatpush.msra.mxu0 0.0
    %1182 = vmatpush.msra.mxu0 0.0
    %1183 = vmatpush.msra.mxu0 0.0
    %1184 = vmatpush.msra.mxu0 0.0
    %1185 = vmatpush.msra.mxu0 0.0
    %1186 = vmatpush.msra.mxu0 0.0
    %1187 = vmatpush.msra.mxu0 0.0
    %1188 = vmatpush.msra.mxu0 0.0
    %1189 = vmatpush.msra.mxu0 0.0
    %1190 = vmatpush.msra.mxu0 0.0
    %1191 = vmatpush.msra.mxu0 0.0
    %v1192 = vand.u32 %v867, 4294901760
    %1193 = vmatpush.msra.mxu0 %v1192
    %v1194 = vand.u32 %v856, 4294901760
    %1195 = vmatpush.msra.mxu0 %v1194
    %v1196 = vand.u32 %v852, 4294901760
    %1197 = vmatpush.msra.mxu0 %v1196
    %v1198 = vand.u32 %v848, 4294901760
    %1199 = vmatpush.msra.mxu0 %v1198
    %v1200 = vand.u32 %v844, 4294901760
    %1201 = vmatpush.msra.mxu0 %v1200
    %v1202 = vand.u32 %v35, 4294901760
    %v1203 = vsub.f32 %v35, %v1202
    %v1204 = vand.u32 %v1203, 4294901760
    %1205 = vmatmul.f32.gmra.mxu0 %v1204
    %v1206 = vpop.f32.mrf.mxu0
    %v1207 = vadd.f32 %v1179, %v1206
    %1208 = vdwg.mxu0
    %1209 = vmatpush.msra.mxu0 0.0
    %1210 = vmatpush.msra.mxu0 0.0
    %1211 = vmatpush.msra.mxu0 0.0
    %1212 = vmatpush.msra.mxu0 0.0
    %1213 = vmatpush.msra.mxu0 0.0
    %1214 = vmatpush.msra.mxu0 0.0
    %1215 = vmatpush.msra.mxu0 0.0
    %1216 = vmatpush.msra.mxu0 0.0
    %1217 = vmatpush.msra.mxu0 0.0
    %1218 = vmatpush.msra.mxu0 0.0
    %1219 = vmatpush.msra.mxu0 0.0
    %v1220 = vand.u32 %v867, 4294901760
    %v1221 = vsub.f32 %v867, %v1220
    %v1222 = vand.u32 %v1221, 4294901760
    %1223 = vmatpush.msra.mxu0 %v1222
    %v1224 = vand.u32 %v856, 4294901760
    %v1225 = vsub.f32 %v856, %v1224
    %v1226 = vand.u32 %v1225, 4294901760
    %1227 = vmatpush.msra.mxu0 %v1226
    %v1228 = vand.u32 %v852, 4294901760
    %v1229 = vsub.f32 %v852, %v1228
    %v1230 = vand.u32 %v1229, 4294901760
    %1231 = vmatpush.msra.mxu0 %v1230
    %v1232 = vand.u32 %v848, 4294901760
    %v1233 = vsub.f32 %v848, %v1232
    %v1234 = vand.u32 %v1233, 4294901760
    %1235 = vmatpush.msra.mxu0 %v1234
    %v1236 = vand.u32 %v844, 4294901760
    %v1237 = vsub.f32 %v844, %v1236
    %v1238 = vand.u32 %v1237, 4294901760
    %1239 = vmatpush.msra.mxu0 %v1238
    %v1240 = vand.u32 %v35, 4294901760
    %1241 = vmatmul.f32.gmra.mxu0 %v1240
    %v1242 = vpop.f32.mrf.mxu0
    %v1243 = vadd.f32 %v1207, %v1242
    %1244 = vdwg.mxu0
    %1245 = vmatpush.msra.mxu0 0.0
    %1246 = vmatpush.msra.mxu0 0.0
    %1247 = vmatpush.msra.mxu0 0.0
    %1248 = vmatpush.msra.mxu0 0.0
    %1249 = vmatpush.msra.mxu0 0.0
    %1250 = vmatpush.msra.mxu0 0.0
    %1251 = vmatpush.msra.mxu0 0.0
    %1252 = vmatpush.msra.mxu0 0.0
    %1253 = vmatpush.msra.mxu0 0.0
    %1254 = vmatpush.msra.mxu0 0.0
    %1255 = vmatpush.msra.mxu0 0.0
    %v1256 = vand.u32 %v867, 4294901760
    %1257 = vmatpush.msra.mxu0 %v1256
    %v1258 = vand.u32 %v856, 4294901760
    %1259 = vmatpush.msra.mxu0 %v1258
    %v1260 = vand.u32 %v852, 4294901760
    %1261 = vmatpush.msra.mxu0 %v1260
    %v1262 = vand.u32 %v848, 4294901760
    %1263 = vmatpush.msra.mxu0 %v1262
    %v1264 = vand.u32 %v844, 4294901760
    %1265 = vmatpush.msra.mxu0 %v1264
    %v1266 = vand.u32 %v35, 4294901760
    %1267 = vmatmul.f32.gmra.mxu0 %v1266
    %v1268 = vpop.f32.mrf.mxu0
    %v1269 = vadd.f32 %v1243, %v1268
    %1270 = vdwg.mxu0
    %1271 = vmatpush.msra.mxu0 0.0
    %1272 = vmatpush.msra.mxu0 0.0
    %1273 = vmatpush.msra.mxu0 0.0
    %1274 = vmatpush.msra.mxu0 0.0
    %1275 = vmatpush.msra.mxu0 0.0
    %1276 = vmatpush.msra.mxu0 0.0
    %1277 = vmatpush.msra.mxu0 0.0
    %1278 = vmatpush.msra.mxu0 0.0
    %1279 = vmatpush.msra.mxu0 0.0
    %1280 = vmatpush.msra.mxu0 0.0
    %1281 = vmatpush.msra.mxu0 0.0
    %v1282 = vand.u32 %v870, 4294901760
    %1283 = vmatpush.msra.mxu0 %v1282
    %v1284 = vand.u32 %v857, 4294901760
    %1285 = vmatpush.msra.mxu0 %v1284
    %v1286 = vand.u32 %v853, 4294901760
    %1287 = vmatpush.msra.mxu0 %v1286
    %v1288 = vand.u32 %v849, 4294901760
    %1289 = vmatpush.msra.mxu0 %v1288
    %v1290 = vand.u32 %v845, 4294901760
    %1291 = vmatpush.msra.mxu0 %v1290
    %v1292 = vand.u32 %v35, 4294901760
    %v1293 = vsub.f32 %v35, %v1292
    %v1294 = vand.u32 %v1293, 4294901760
    %v1295 = vsub.f32 %v1293, %v1294
    %v1296 = vand.u32 %v1295, 4294901760
    %1297 = vmatmul.f32.gmra.mxu0 %v1296
    %v1298 = vpop.f32.mrf.mxu0
    %v1299 = vadd.f32 0.0, %v1298
    %1300 = vdwg.mxu0
    %1301 = vmatpush.msra.mxu0 0.0
    %1302 = vmatpush.msra.mxu0 0.0
    %1303 = vmatpush.msra.mxu0 0.0
    %1304 = vmatpush.msra.mxu0 0.0
    %1305 = vmatpush.msra.mxu0 0.0
    %1306 = vmatpush.msra.mxu0 0.0
    %1307 = vmatpush.msra.mxu0 0.0
    %1308 = vmatpush.msra.mxu0 0.0
    %1309 = vmatpush.msra.mxu0 0.0
    %1310 = vmatpush.msra.mxu0 0.0
    %1311 = vmatpush.msra.mxu0 0.0
    %v1312 = vand.u32 %v870, 4294901760
    %v1313 = vsub.f32 %v870, %v1312
    %v1314 = vand.u32 %v1313, 4294901760
    %v1315 = vsub.f32 %v1313, %v1314
    %v1316 = vand.u32 %v1315, 4294901760
    %1317 = vmatpush.msra.mxu0 %v1316
    %v1318 = vand.u32 %v857, 4294901760
    %v1319 = vsub.f32 %v857, %v1318
    %v1320 = vand.u32 %v1319, 4294901760
    %v1321 = vsub.f32 %v1319, %v1320
    %v1322 = vand.u32 %v1321, 4294901760
    %1323 = vmatpush.msra.mxu0 %v1322
    %v1324 = vand.u32 %v853, 4294901760
    %v1325 = vsub.f32 %v853, %v1324
    %v1326 = vand.u32 %v1325, 4294901760
    %v1327 = vsub.f32 %v1325, %v1326
    %v1328 = vand.u32 %v1327, 4294901760
    %1329 = vmatpush.msra.mxu0 %v1328
    %v1330 = vand.u32 %v849, 4294901760
    %v1331 = vsub.f32 %v849, %v1330
    %v1332 = vand.u32 %v1331, 4294901760
    %v1333 = vsub.f32 %v1331, %v1332
    %v1334 = vand.u32 %v1333, 4294901760
    %1335 = vmatpush.msra.mxu0 %v1334
    %v1336 = vand.u32 %v845, 4294901760
    %v1337 = vsub.f32 %v845, %v1336
    %v1338 = vand.u32 %v1337, 4294901760
    %v1339 = vsub.f32 %v1337, %v1338
    %v1340 = vand.u32 %v1339, 4294901760
    %1341 = vmatpush.msra.mxu0 %v1340
    %v1342 = vand.u32 %v35, 4294901760
    %1343 = vmatmul.f32.gmra.mxu0 %v1342
    %v1344 = vpop.f32.mrf.mxu0
    %v1345 = vadd.f32 %v1299, %v1344
    %1346 = vdwg.mxu0
    %1347 = vmatpush.msra.mxu0 0.0
    %1348 = vmatpush.msra.mxu0 0.0
    %1349 = vmatpush.msra.mxu0 0.0
    %1350 = vmatpush.msra.mxu0 0.0
    %1351 = vmatpush.msra.mxu0 0.0
    %1352 = vmatpush.msra.mxu0 0.0
    %1353 = vmatpush.msra.mxu0 0.0
    %1354 = vmatpush.msra.mxu0 0.0
    %1355 = vmatpush.msra.mxu0 0.0
    %1356 = vmatpush.msra.mxu0 0.0
    %1357 = vmatpush.msra.mxu0 0.0
    %v1358 = vand.u32 %v870, 4294901760
    %v1359 = vsub.f32 %v870, %v1358
    %1360 = vmatpush.msra.mxu0 %v1359
    %v1361 = vand.u32 %v857, 4294901760
    %v1362 = vsub.f32 %v857, %v1361
    %1363 = vmatpush.msra.mxu0 %v1362
    %v1364 = vand.u32 %v853, 4294901760
    %v1365 = vsub.f32 %v853, %v1364
    %1366 = vmatpush.msra.mxu0 %v1365
    %v1367 = vand.u32 %v849, 4294901760
    %v1368 = vsub.f32 %v849, %v1367
    %1369 = vmatpush.msra.mxu0 %v1368
    %v1370 = vand.u32 %v845, 4294901760
    %v1371 = vsub.f32 %v845, %v1370
    %1372 = vmatpush.msra.mxu0 %v1371
    %v1373 = vand.u32 %v35, 4294901760
    %v1374 = vsub.f32 %v35, %v1373
    %1375 = vmatmul.f32.gmra.mxu0 %v1374
    %v1376 = vpop.f32.mrf.mxu0
    %v1377 = vadd.f32 %v1345, %v1376
    %1378 = vdwg.mxu0
    %1379 = vmatpush.msra.mxu0 0.0
    %1380 = vmatpush.msra.mxu0 0.0
    %1381 = vmatpush.msra.mxu0 0.0
    %1382 = vmatpush.msra.mxu0 0.0
    %1383 = vmatpush.msra.mxu0 0.0
    %1384 = vmatpush.msra.mxu0 0.0
    %1385 = vmatpush.msra.mxu0 0.0
    %1386 = vmatpush.msra.mxu0 0.0
    %1387 = vmatpush.msra.mxu0 0.0
    %1388 = vmatpush.msra.mxu0 0.0
    %1389 = vmatpush.msra.mxu0 0.0
    %v1390 = vand.u32 %v870, 4294901760
    %1391 = vmatpush.msra.mxu0 %v1390
    %v1392 = vand.u32 %v857, 4294901760
    %1393 = vmatpush.msra.mxu0 %v1392
    %v1394 = vand.u32 %v853, 4294901760
    %1395 = vmatpush.msra.mxu0 %v1394
    %v1396 = vand.u32 %v849, 4294901760
    %1397 = vmatpush.msra.mxu0 %v1396
    %v1398 = vand.u32 %v845, 4294901760
    %1399 = vmatpush.msra.mxu0 %v1398
    %v1400 = vand.u32 %v35, 4294901760
    %v1401 = vsub.f32 %v35, %v1400
    %v1402 = vand.u32 %v1401, 4294901760
    %1403 = vmatmul.f32.gmra.mxu0 %v1402
    %v1404 = vpop.f32.mrf.mxu0
    %v1405 = vadd.f32 %v1377, %v1404
    %1406 = vdwg.mxu0
    %1407 = vmatpush.msra.mxu0 0.0
    %1408 = vmatpush.msra.mxu0 0.0
    %1409 = vmatpush.msra.mxu0 0.0
    %1410 = vmatpush.msra.mxu0 0.0
    %1411 = vmatpush.msra.mxu0 0.0
    %1412 = vmatpush.msra.mxu0 0.0
    %1413 = vmatpush.msra.mxu0 0.0
    %1414 = vmatpush.msra.mxu0 0.0
    %1415 = vmatpush.msra.mxu0 0.0
    %1416 = vmatpush.msra.mxu0 0.0
    %1417 = vmatpush.msra.mxu0 0.0
    %v1418 = vand.u32 %v870, 4294901760
    %v1419 = vsub.f32 %v870, %v1418
    %v1420 = vand.u32 %v1419, 4294901760
    %1421 = vmatpush.msra.mxu0 %v1420
    %v1422 = vand.u32 %v857, 4294901760
    %v1423 = vsub.f32 %v857, %v1422
    %v1424 = vand.u32 %v1423, 4294901760
    %1425 = vmatpush.msra.mxu0 %v1424
    %v1426 = vand.u32 %v853, 4294901760
    %v1427 = vsub.f32 %v853, %v1426
    %v1428 = vand.u32 %v1427, 4294901760
    %1429 = vmatpush.msra.mxu0 %v1428
    %v1430 = vand.u32 %v849, 4294901760
    %v1431 = vsub.f32 %v849, %v1430
    %v1432 = vand.u32 %v1431, 4294901760
    %1433 = vmatpush.msra.mxu0 %v1432
    %v1434 = vand.u32 %v845, 4294901760
    %v1435 = vsub.f32 %v845, %v1434
    %v1436 = vand.u32 %v1435, 4294901760
    %1437 = vmatpush.msra.mxu0 %v1436
    %v1438 = vand.u32 %v35, 4294901760
    %1439 = vmatmul.f32.gmra.mxu0 %v1438
    %v1440 = vpop.f32.mrf.mxu0
    %v1441 = vadd.f32 %v1405, %v1440
    %1442 = vdwg.mxu0
    %1443 = vmatpush.msra.mxu0 0.0
    %1444 = vmatpush.msra.mxu0 0.0
    %1445 = vmatpush.msra.mxu0 0.0
    %1446 = vmatpush.msra.mxu0 0.0
    %1447 = vmatpush.msra.mxu0 0.0
    %1448 = vmatpush.msra.mxu0 0.0
    %1449 = vmatpush.msra.mxu0 0.0
    %1450 = vmatpush.msra.mxu0 0.0
    %1451 = vmatpush.msra.mxu0 0.0
    %1452 = vmatpush.msra.mxu0 0.0
    %1453 = vmatpush.msra.mxu0 0.0
    %v1454 = vand.u32 %v870, 4294901760
    %1455 = vmatpush.msra.mxu0 %v1454
    %v1456 = vand.u32 %v857, 4294901760
    %1457 = vmatpush.msra.mxu0 %v1456
    %v1458 = vand.u32 %v853, 4294901760
    %1459 = vmatpush.msra.mxu0 %v1458
    %v1460 = vand.u32 %v849, 4294901760
    %1461 = vmatpush.msra.mxu0 %v1460
    %v1462 = vand.u32 %v845, 4294901760
    %1463 = vmatpush.msra.mxu0 %v1462
    %v1464 = vand.u32 %v35, 4294901760
    %1465 = vmatmul.f32.gmra.mxu0 %v1464
    %v1466 = vpop.f32.mrf.mxu0
    %v1467 = vadd.f32 %v1441, %v1466
    %1468 = vdwg.mxu0
    %1469 = vmatpush.msra.mxu0 0.0
    %1470 = vmatpush.msra.mxu0 0.0
    %1471 = vmatpush.msra.mxu0 0.0
    %1472 = vmatpush.msra.mxu0 0.0
    %1473 = vmatpush.msra.mxu0 0.0
    %1474 = vmatpush.msra.mxu0 0.0
    %1475 = vmatpush.msra.mxu0 0.0
    %1476 = vmatpush.msra.mxu0 0.0
    %1477 = vmatpush.msra.mxu0 0.0
    %1478 = vmatpush.msra.mxu0 0.0
    %1479 = vmatpush.msra.mxu0 0.0
    %v1480 = vand.u32 %v873, 4294901760
    %1481 = vmatpush.msra.mxu0 %v1480
    %v1482 = vand.u32 %v858, 4294901760
    %1483 = vmatpush.msra.mxu0 %v1482
    %v1484 = vand.u32 %v854, 4294901760
    %1485 = vmatpush.msra.mxu0 %v1484
    %v1486 = vand.u32 %v850, 4294901760
    %1487 = vmatpush.msra.mxu0 %v1486
    %v1488 = vand.u32 %v846, 4294901760
    %1489 = vmatpush.msra.mxu0 %v1488
    %v1490 = vand.u32 %v35, 4294901760
    %v1491 = vsub.f32 %v35, %v1490
    %v1492 = vand.u32 %v1491, 4294901760
    %v1493 = vsub.f32 %v1491, %v1492
    %v1494 = vand.u32 %v1493, 4294901760
    %1495 = vmatmul.f32.gmra.mxu0 %v1494
    %v1496 = vpop.f32.mrf.mxu0
    %v1497 = vadd.f32 0.0, %v1496
    %1498 = vdwg.mxu0
    %1499 = vmatpush.msra.mxu0 0.0
    %1500 = vmatpush.msra.mxu0 0.0
    %1501 = vmatpush.msra.mxu0 0.0
    %1502 = vmatpush.msra.mxu0 0.0
    %1503 = vmatpush.msra.mxu0 0.0
    %1504 = vmatpush.msra.mxu0 0.0
    %1505 = vmatpush.msra.mxu0 0.0
    %1506 = vmatpush.msra.mxu0 0.0
    %1507 = vmatpush.msra.mxu0 0.0
    %1508 = vmatpush.msra.mxu0 0.0
    %1509 = vmatpush.msra.mxu0 0.0
    %v1510 = vand.u32 %v873, 4294901760
    %v1511 = vsub.f32 %v873, %v1510
    %v1512 = vand.u32 %v1511, 4294901760
    %v1513 = vsub.f32 %v1511, %v1512
    %v1514 = vand.u32 %v1513, 4294901760
    %1515 = vmatpush.msra.mxu0 %v1514
    %v1516 = vand.u32 %v858, 4294901760
    %v1517 = vsub.f32 %v858, %v1516
    %v1518 = vand.u32 %v1517, 4294901760
    %v1519 = vsub.f32 %v1517, %v1518
    %v1520 = vand.u32 %v1519, 4294901760
    %1521 = vmatpush.msra.mxu0 %v1520
    %v1522 = vand.u32 %v854, 4294901760
    %v1523 = vsub.f32 %v854, %v1522
    %v1524 = vand.u32 %v1523, 4294901760
    %v1525 = vsub.f32 %v1523, %v1524
    %v1526 = vand.u32 %v1525, 4294901760
    %1527 = vmatpush.msra.mxu0 %v1526
    %v1528 = vand.u32 %v850, 4294901760
    %v1529 = vsub.f32 %v850, %v1528
    %v1530 = vand.u32 %v1529, 4294901760
    %v1531 = vsub.f32 %v1529, %v1530
    %v1532 = vand.u32 %v1531, 4294901760
    %1533 = vmatpush.msra.mxu0 %v1532
    %v1534 = vand.u32 %v846, 4294901760
    %v1535 = vsub.f32 %v846, %v1534
    %v1536 = vand.u32 %v1535, 4294901760
    %v1537 = vsub.f32 %v1535, %v1536
    %v1538 = vand.u32 %v1537, 4294901760
    %1539 = vmatpush.msra.mxu0 %v1538
    %v1540 = vand.u32 %v35, 4294901760
    %1541 = vmatmul.f32.gmra.mxu0 %v1540
    %v1542 = vpop.f32.mrf.mxu0
    %v1543 = vadd.f32 %v1497, %v1542
    %1544 = vdwg.mxu0
    %1545 = vmatpush.msra.mxu0 0.0
    %1546 = vmatpush.msra.mxu0 0.0
    %1547 = vmatpush.msra.mxu0 0.0
    %1548 = vmatpush.msra.mxu0 0.0
    %1549 = vmatpush.msra.mxu0 0.0
    %1550 = vmatpush.msra.mxu0 0.0
    %1551 = vmatpush.msra.mxu0 0.0
    %1552 = vmatpush.msra.mxu0 0.0
    %1553 = vmatpush.msra.mxu0 0.0
    %1554 = vmatpush.msra.mxu0 0.0
    %1555 = vmatpush.msra.mxu0 0.0
    %v1556 = vand.u32 %v873, 4294901760
    %v1557 = vsub.f32 %v873, %v1556
    %1558 = vmatpush.msra.mxu0 %v1557
    %v1559 = vand.u32 %v858, 4294901760
    %v1560 = vsub.f32 %v858, %v1559
    %1561 = vmatpush.msra.mxu0 %v1560
    %v1562 = vand.u32 %v854, 4294901760
    %v1563 = vsub.f32 %v854, %v1562
    %1564 = vmatpush.msra.mxu0 %v1563
    %v1565 = vand.u32 %v850, 4294901760
    %v1566 = vsub.f32 %v850, %v1565
    %1567 = vmatpush.msra.mxu0 %v1566
    %v1568 = vand.u32 %v846, 4294901760
    %v1569 = vsub.f32 %v846, %v1568
    %1570 = vmatpush.msra.mxu0 %v1569
    %v1571 = vand.u32 %v35, 4294901760
    %v1572 = vsub.f32 %v35, %v1571
    %1573 = vmatmul.f32.gmra.mxu0 %v1572
    %v1574 = vpop.f32.mrf.mxu0
    %v1575 = vadd.f32 %v1543, %v1574
    %1576 = vdwg.mxu0
    %1577 = vmatpush.msra.mxu0 0.0
    %1578 = vmatpush.msra.mxu0 0.0
    %1579 = vmatpush.msra.mxu0 0.0
    %1580 = vmatpush.msra.mxu0 0.0
    %1581 = vmatpush.msra.mxu0 0.0
    %1582 = vmatpush.msra.mxu0 0.0
    %1583 = vmatpush.msra.mxu0 0.0
    %1584 = vmatpush.msra.mxu0 0.0
    %1585 = vmatpush.msra.mxu0 0.0
    %1586 = vmatpush.msra.mxu0 0.0
    %1587 = vmatpush.msra.mxu0 0.0
    %v1588 = vand.u32 %v873, 4294901760
    %1589 = vmatpush.msra.mxu0 %v1588
    %v1590 = vand.u32 %v858, 4294901760
    %1591 = vmatpush.msra.mxu0 %v1590
    %v1592 = vand.u32 %v854, 4294901760
    %1593 = vmatpush.msra.mxu0 %v1592
    %v1594 = vand.u32 %v850, 4294901760
    %1595 = vmatpush.msra.mxu0 %v1594
    %v1596 = vand.u32 %v846, 4294901760
    %1597 = vmatpush.msra.mxu0 %v1596
    %v1598 = vand.u32 %v35, 4294901760
    %v1599 = vsub.f32 %v35, %v1598
    %v1600 = vand.u32 %v1599, 4294901760
    %1601 = vmatmul.f32.gmra.mxu0 %v1600
    %v1602 = vpop.f32.mrf.mxu0
    %v1603 = vadd.f32 %v1575, %v1602
    %1604 = vdwg.mxu0
    %1605 = vmatpush.msra.mxu0 0.0
    %1606 = vmatpush.msra.mxu0 0.0
    %1607 = vmatpush.msra.mxu0 0.0
    %1608 = vmatpush.msra.mxu0 0.0
    %1609 = vmatpush.msra.mxu0 0.0
    %1610 = vmatpush.msra.mxu0 0.0
    %1611 = vmatpush.msra.mxu0 0.0
    %1612 = vmatpush.msra.mxu0 0.0
    %1613 = vmatpush.msra.mxu0 0.0
    %1614 = vmatpush.msra.mxu0 0.0
    %1615 = vmatpush.msra.mxu0 0.0
    %v1616 = vand.u32 %v873, 4294901760
    %v1617 = vsub.f32 %v873, %v1616
    %v1618 = vand.u32 %v1617, 4294901760
    %1619 = vmatpush.msra.mxu0 %v1618
    %v1620 = vand.u32 %v858, 4294901760
    %v1621 = vsub.f32 %v858, %v1620
    %v1622 = vand.u32 %v1621, 4294901760
    %1623 = vmatpush.msra.mxu0 %v1622
    %v1624 = vand.u32 %v854, 4294901760
    %v1625 = vsub.f32 %v854, %v1624
    %v1626 = vand.u32 %v1625, 4294901760
    %1627 = vmatpush.msra.mxu0 %v1626
    %v1628 = vand.u32 %v850, 4294901760
    %v1629 = vsub.f32 %v850, %v1628
    %v1630 = vand.u32 %v1629, 4294901760
    %1631 = vmatpush.msra.mxu0 %v1630
    %v1632 = vand.u32 %v846, 4294901760
    %v1633 = vsub.f32 %v846, %v1632
    %v1634 = vand.u32 %v1633, 4294901760
    %1635 = vmatpush.msra.mxu0 %v1634
    %v1636 = vand.u32 %v35, 4294901760
    %1637 = vmatmul.f32.gmra.mxu0 %v1636
    %v1638 = vpop.f32.mrf.mxu0
    %v1639 = vadd.f32 %v1603, %v1638
    %1640 = vdwg.mxu0
    %1641 = vmatpush.msra.mxu0 0.0
    %1642 = vmatpush.msra.mxu0 0.0
    %1643 = vmatpush.msra.mxu0 0.0
    %1644 = vmatpush.msra.mxu0 0.0
    %1645 = vmatpush.msra.mxu0 0.0
    %1646 = vmatpush.msra.mxu0 0.0
    %1647 = vmatpush.msra.mxu0 0.0
    %1648 = vmatpush.msra.mxu0 0.0
    %1649 = vmatpush.msra.mxu0 0.0
    %1650 = vmatpush.msra.mxu0 0.0
    %1651 = vmatpush.msra.mxu0 0.0
    %v1652 = vand.u32 %v873, 4294901760
    %1653 = vmatpush.msra.mxu0 %v1652
    %v1654 = vand.u32 %v858, 4294901760
    %1655 = vmatpush.msra.mxu0 %v1654
    %v1656 = vand.u32 %v854, 4294901760
    %1657 = vmatpush.msra.mxu0 %v1656
    %v1658 = vand.u32 %v850, 4294901760
    %1659 = vmatpush.msra.mxu0 %v1658
    %v1660 = vand.u32 %v846, 4294901760
    %1661 = vmatpush.msra.mxu0 %v1660
    %v1662 = vand.u32 %v35, 4294901760
    %1663 = vmatmul.f32.gmra.mxu0 %v1662
    %v1664 = vpop.f32.mrf.mxu0
    %v1665 = vadd.f32 %v1639, %v1664
    %1666 = vdwg.mxu0
    %v1667 = vmul.f32 %v246, %v1071
    %v1668 = vmul.f32 %v444, %v1269
    %v1669 = vmul.f32 %v642, %v1467
    %v1670 = vmul.f32 %v840, %v1665
    %s1671 = scalar_lea.vmem %s0, 320
    %v1672 = vld [vmem:[%s1671] sm:$0xff]
    %v1673 = vld [vmem:[%s1671 + $0x8] sm:$0xff]
    %v1674 = vld [vmem:[%s1671 + $0x10] sm:$0xff]
    %v1675 = vld [vmem:[%s1671 + $0x18] sm:$0xff]
    %v1676 = vld [vmem:[%s1671 + $0x20] sm:$0xff]
    %v1677 = vld [vmem:[%s1671 + $0x28] sm:$0xff]
    %v1678 = vld [vmem:[%s1671 + $0x30] sm:$0xff]
    %v1679 = vld [vmem:[%s1671 + $0x38] sm:$0xff]
    %v1680 = vld [vmem:[%s1671 + $0x40] sm:$0xff]
    %v1681 = vld [vmem:[%s1671 + $0x48] sm:$0xff]
    %v1682 = vld [vmem:[%s1671 + $0x50] sm:$0xff]
    %v1683 = vld [vmem:[%s1671 + $0x58] sm:$0xff]
    %v1684 = vld [vmem:[%s1671 + $0x60] sm:$0xff]
    %v1685 = vld [vmem:[%s1671 + $0x68] sm:$0xff]
    %v1686 = vld [vmem:[%s1671 + $0x70] sm:$0xff]
    %v1687 = vld [vmem:[%s1671 + $0x78] sm:$0xff]
    %v1688 = vld [vmem:[%s1671 + $0x80] sm:$0x1f]
    %v1689 = vld [vmem:[%s1671 + $0x88] sm:$0x1f]
    %v1690 = vld [vmem:[%s1671 + $0x90] sm:$0x1f]
    %v1691 = vld [vmem:[%s1671 + $0x98] sm:$0x1f]
    %v1693 = vsel %vm37, %v1688, 0
    %v1696 = vsel %vm37, %v1689, 0
    %v1699 = vsel %vm37, %v1690, 0
    %v1702 = vsel %vm37, %v1691, 0
    %1704 = vmatpush.msra.mxu0 0.0
    %1705 = vmatpush.msra.mxu0 0.0
    %1706 = vmatpush.msra.mxu0 0.0
    %1707 = vmatpush.msra.mxu0 0.0
    %1708 = vmatpush.msra.mxu0 0.0
    %1709 = vmatpush.msra.mxu0 0.0
    %1710 = vmatpush.msra.mxu0 0.0
    %1711 = vmatpush.msra.mxu0 0.0
    %1712 = vmatpush.msra.mxu0 0.0
    %1713 = vmatpush.msra.mxu0 0.0
    %1714 = vmatpush.msra.mxu0 0.0
    %v1715 = vand.u32 %v1693, 4294901760
    %1716 = vmatpush.msra.mxu0 %v1715
    %v1717 = vand.u32 %v1684, 4294901760
    %1718 = vmatpush.msra.mxu0 %v1717
    %v1719 = vand.u32 %v1680, 4294901760
    %1720 = vmatpush.msra.mxu0 %v1719
    %v1721 = vand.u32 %v1676, 4294901760
    %1722 = vmatpush.msra.mxu0 %v1721
    %v1723 = vand.u32 %v1672, 4294901760
    %1724 = vmatpush.msra.mxu0 %v1723
    %v1725 = vand.u32 %v35, 4294901760
    %v1726 = vsub.f32 %v35, %v1725
    %v1727 = vand.u32 %v1726, 4294901760
    %v1728 = vsub.f32 %v1726, %v1727
    %v1729 = vand.u32 %v1728, 4294901760
    %1730 = vmatmul.f32.gmra.mxu0 %v1729
    %v1731 = vpop.f32.mrf.mxu0
    %v1732 = vadd.f32 0.0, %v1731
    %1733 = vdwg.mxu0
    %1734 = vmatpush.msra.mxu0 0.0
    %1735 = vmatpush.msra.mxu0 0.0
    %1736 = vmatpush.msra.mxu0 0.0
    %1737 = vmatpush.msra.mxu0 0.0
    %1738 = vmatpush.msra.mxu0 0.0
    %1739 = vmatpush.msra.mxu0 0.0
    %1740 = vmatpush.msra.mxu0 0.0
    %1741 = vmatpush.msra.mxu0 0.0
    %1742 = vmatpush.msra.mxu0 0.0
    %1743 = vmatpush.msra.mxu0 0.0
    %1744 = vmatpush.msra.mxu0 0.0
    %v1745 = vand.u32 %v1693, 4294901760
    %v1746 = vsub.f32 %v1693, %v1745
    %v1747 = vand.u32 %v1746, 4294901760
    %v1748 = vsub.f32 %v1746, %v1747
    %v1749 = vand.u32 %v1748, 4294901760
    %1750 = vmatpush.msra.mxu0 %v1749
    %v1751 = vand.u32 %v1684, 4294901760
    %v1752 = vsub.f32 %v1684, %v1751
    %v1753 = vand.u32 %v1752, 4294901760
    %v1754 = vsub.f32 %v1752, %v1753
    %v1755 = vand.u32 %v1754, 4294901760
    %1756 = vmatpush.msra.mxu0 %v1755
    %v1757 = vand.u32 %v1680, 4294901760
    %v1758 = vsub.f32 %v1680, %v1757
    %v1759 = vand.u32 %v1758, 4294901760
    %v1760 = vsub.f32 %v1758, %v1759
    %v1761 = vand.u32 %v1760, 4294901760
    %1762 = vmatpush.msra.mxu0 %v1761
    %v1763 = vand.u32 %v1676, 4294901760
    %v1764 = vsub.f32 %v1676, %v1763
    %v1765 = vand.u32 %v1764, 4294901760
    %v1766 = vsub.f32 %v1764, %v1765
    %v1767 = vand.u32 %v1766, 4294901760
    %1768 = vmatpush.msra.mxu0 %v1767
    %v1769 = vand.u32 %v1672, 4294901760
    %v1770 = vsub.f32 %v1672, %v1769
    %v1771 = vand.u32 %v1770, 4294901760
    %v1772 = vsub.f32 %v1770, %v1771
    %v1773 = vand.u32 %v1772, 4294901760
    %1774 = vmatpush.msra.mxu0 %v1773
    %v1775 = vand.u32 %v35, 4294901760
    %1776 = vmatmul.f32.gmra.mxu0 %v1775
    %v1777 = vpop.f32.mrf.mxu0
    %v1778 = vadd.f32 %v1732, %v1777
    %1779 = vdwg.mxu0
    %1780 = vmatpush.msra.mxu0 0.0
    %1781 = vmatpush.msra.mxu0 0.0
    %1782 = vmatpush.msra.mxu0 0.0
    %1783 = vmatpush.msra.mxu0 0.0
    %1784 = vmatpush.msra.mxu0 0.0
    %1785 = vmatpush.msra.mxu0 0.0
    %1786 = vmatpush.msra.mxu0 0.0
    %1787 = vmatpush.msra.mxu0 0.0
    %1788 = vmatpush.msra.mxu0 0.0
    %1789 = vmatpush.msra.mxu0 0.0
    %1790 = vmatpush.msra.mxu0 0.0
    %v1791 = vand.u32 %v1693, 4294901760
    %v1792 = vsub.f32 %v1693, %v1791
    %1793 = vmatpush.msra.mxu0 %v1792
    %v1794 = vand.u32 %v1684, 4294901760
    %v1795 = vsub.f32 %v1684, %v1794
    %1796 = vmatpush.msra.mxu0 %v1795
    %v1797 = vand.u32 %v1680, 4294901760
    %v1798 = vsub.f32 %v1680, %v1797
    %1799 = vmatpush.msra.mxu0 %v1798
    %v1800 = vand.u32 %v1676, 4294901760
    %v1801 = vsub.f32 %v1676, %v1800
    %1802 = vmatpush.msra.mxu0 %v1801
    %v1803 = vand.u32 %v1672, 4294901760
    %v1804 = vsub.f32 %v1672, %v1803
    %1805 = vmatpush.msra.mxu0 %v1804
    %v1806 = vand.u32 %v35, 4294901760
    %v1807 = vsub.f32 %v35, %v1806
    %1808 = vmatmul.f32.gmra.mxu0 %v1807
    %v1809 = vpop.f32.mrf.mxu0
    %v1810 = vadd.f32 %v1778, %v1809
    %1811 = vdwg.mxu0
    %1812 = vmatpush.msra.mxu0 0.0
    %1813 = vmatpush.msra.mxu0 0.0
    %1814 = vmatpush.msra.mxu0 0.0
    %1815 = vmatpush.msra.mxu0 0.0
    %1816 = vmatpush.msra.mxu0 0.0
    %1817 = vmatpush.msra.mxu0 0.0
    %1818 = vmatpush.msra.mxu0 0.0
    %1819 = vmatpush.msra.mxu0 0.0
    %1820 = vmatpush.msra.mxu0 0.0
    %1821 = vmatpush.msra.mxu0 0.0
    %1822 = vmatpush.msra.mxu0 0.0
    %v1823 = vand.u32 %v1693, 4294901760
    %1824 = vmatpush.msra.mxu0 %v1823
    %v1825 = vand.u32 %v1684, 4294901760
    %1826 = vmatpush.msra.mxu0 %v1825
    %v1827 = vand.u32 %v1680, 4294901760
    %1828 = vmatpush.msra.mxu0 %v1827
    %v1829 = vand.u32 %v1676, 4294901760
    %1830 = vmatpush.msra.mxu0 %v1829
    %v1831 = vand.u32 %v1672, 4294901760
    %1832 = vmatpush.msra.mxu0 %v1831
    %v1833 = vand.u32 %v35, 4294901760
    %v1834 = vsub.f32 %v35, %v1833
    %v1835 = vand.u32 %v1834, 4294901760
    %1836 = vmatmul.f32.gmra.mxu0 %v1835
    %v1837 = vpop.f32.mrf.mxu0
    %v1838 = vadd.f32 %v1810, %v1837
    %1839 = vdwg.mxu0
    %1840 = vmatpush.msra.mxu0 0.0
    %1841 = vmatpush.msra.mxu0 0.0
    %1842 = vmatpush.msra.mxu0 0.0
    %1843 = vmatpush.msra.mxu0 0.0
    %1844 = vmatpush.msra.mxu0 0.0
    %1845 = vmatpush.msra.mxu0 0.0
    %1846 = vmatpush.msra.mxu0 0.0
    %1847 = vmatpush.msra.mxu0 0.0
    %1848 = vmatpush.msra.mxu0 0.0
    %1849 = vmatpush.msra.mxu0 0.0
    %1850 = vmatpush.msra.mxu0 0.0
    %v1851 = vand.u32 %v1693, 4294901760
    %v1852 = vsub.f32 %v1693, %v1851
    %v1853 = vand.u32 %v1852, 4294901760
    %1854 = vmatpush.msra.mxu0 %v1853
    %v1855 = vand.u32 %v1684, 4294901760
    %v1856 = vsub.f32 %v1684, %v1855
    %v1857 = vand.u32 %v1856, 4294901760
    %1858 = vmatpush.msra.mxu0 %v1857
    %v1859 = vand.u32 %v1680, 4294901760
    %v1860 = vsub.f32 %v1680, %v1859
    %v1861 = vand.u32 %v1860, 4294901760
    %1862 = vmatpush.msra.mxu0 %v1861
    %v1863 = vand.u32 %v1676, 4294901760
    %v1864 = vsub.f32 %v1676, %v1863
    %v1865 = vand.u32 %v1864, 4294901760
    %1866 = vmatpush.msra.mxu0 %v1865
    %v1867 = vand.u32 %v1672, 4294901760
    %v1868 = vsub.f32 %v1672, %v1867
    %v1869 = vand.u32 %v1868, 4294901760
    %1870 = vmatpush.msra.mxu0 %v1869
    %v1871 = vand.u32 %v35, 4294901760
    %1872 = vmatmul.f32.gmra.mxu0 %v1871
    %v1873 = vpop.f32.mrf.mxu0
    %v1874 = vadd.f32 %v1838, %v1873
    %1875 = vdwg.mxu0
    %1876 = vmatpush.msra.mxu0 0.0
    %1877 = vmatpush.msra.mxu0 0.0
    %1878 = vmatpush.msra.mxu0 0.0
    %1879 = vmatpush.msra.mxu0 0.0
    %1880 = vmatpush.msra.mxu0 0.0
    %1881 = vmatpush.msra.mxu0 0.0
    %1882 = vmatpush.msra.mxu0 0.0
    %1883 = vmatpush.msra.mxu0 0.0
    %1884 = vmatpush.msra.mxu0 0.0
    %1885 = vmatpush.msra.mxu0 0.0
    %1886 = vmatpush.msra.mxu0 0.0
    %v1887 = vand.u32 %v1693, 4294901760
    %1888 = vmatpush.msra.mxu0 %v1887
    %v1889 = vand.u32 %v1684, 4294901760
    %1890 = vmatpush.msra.mxu0 %v1889
    %v1891 = vand.u32 %v1680, 4294901760
    %1892 = vmatpush.msra.mxu0 %v1891
    %v1893 = vand.u32 %v1676, 4294901760
    %1894 = vmatpush.msra.mxu0 %v1893
    %v1895 = vand.u32 %v1672, 4294901760
    %1896 = vmatpush.msra.mxu0 %v1895
    %v1897 = vand.u32 %v35, 4294901760
    %1898 = vmatmul.f32.gmra.mxu0 %v1897
    %v1899 = vpop.f32.mrf.mxu0
    %v1900 = vadd.f32 %v1874, %v1899
    %1901 = vdwg.mxu0
    %1902 = vmatpush.msra.mxu0 0.0
    %1903 = vmatpush.msra.mxu0 0.0
    %1904 = vmatpush.msra.mxu0 0.0
    %1905 = vmatpush.msra.mxu0 0.0
    %1906 = vmatpush.msra.mxu0 0.0
    %1907 = vmatpush.msra.mxu0 0.0
    %1908 = vmatpush.msra.mxu0 0.0
    %1909 = vmatpush.msra.mxu0 0.0
    %1910 = vmatpush.msra.mxu0 0.0
    %1911 = vmatpush.msra.mxu0 0.0
    %1912 = vmatpush.msra.mxu0 0.0
    %v1913 = vand.u32 %v1696, 4294901760
    %1914 = vmatpush.msra.mxu0 %v1913
    %v1915 = vand.u32 %v1685, 4294901760
    %1916 = vmatpush.msra.mxu0 %v1915
    %v1917 = vand.u32 %v1681, 4294901760
    %1918 = vmatpush.msra.mxu0 %v1917
    %v1919 = vand.u32 %v1677, 4294901760
    %1920 = vmatpush.msra.mxu0 %v1919
    %v1921 = vand.u32 %v1673, 4294901760
    %1922 = vmatpush.msra.mxu0 %v1921
    %v1923 = vand.u32 %v35, 4294901760
    %v1924 = vsub.f32 %v35, %v1923
    %v1925 = vand.u32 %v1924, 4294901760
    %v1926 = vsub.f32 %v1924, %v1925
    %v1927 = vand.u32 %v1926, 4294901760
    %1928 = vmatmul.f32.gmra.mxu0 %v1927
    %v1929 = vpop.f32.mrf.mxu0
    %v1930 = vadd.f32 0.0, %v1929
    %1931 = vdwg.mxu0
    %1932 = vmatpush.msra.mxu0 0.0
    %1933 = vmatpush.msra.mxu0 0.0
    %1934 = vmatpush.msra.mxu0 0.0
    %1935 = vmatpush.msra.mxu0 0.0
    %1936 = vmatpush.msra.mxu0 0.0
    %1937 = vmatpush.msra.mxu0 0.0
    %1938 = vmatpush.msra.mxu0 0.0
    %1939 = vmatpush.msra.mxu0 0.0
    %1940 = vmatpush.msra.mxu0 0.0
    %1941 = vmatpush.msra.mxu0 0.0
    %1942 = vmatpush.msra.mxu0 0.0
    %v1943 = vand.u32 %v1696, 4294901760
    %v1944 = vsub.f32 %v1696, %v1943
    %v1945 = vand.u32 %v1944, 4294901760
    %v1946 = vsub.f32 %v1944, %v1945
    %v1947 = vand.u32 %v1946, 4294901760
    %1948 = vmatpush.msra.mxu0 %v1947
    %v1949 = vand.u32 %v1685, 4294901760
    %v1950 = vsub.f32 %v1685, %v1949
    %v1951 = vand.u32 %v1950, 4294901760
    %v1952 = vsub.f32 %v1950, %v1951
    %v1953 = vand.u32 %v1952, 4294901760
    %1954 = vmatpush.msra.mxu0 %v1953
    %v1955 = vand.u32 %v1681, 4294901760
    %v1956 = vsub.f32 %v1681, %v1955
    %v1957 = vand.u32 %v1956, 4294901760
    %v1958 = vsub.f32 %v1956, %v1957
    %v1959 = vand.u32 %v1958, 4294901760
    %1960 = vmatpush.msra.mxu0 %v1959
    %v1961 = vand.u32 %v1677, 4294901760
    %v1962 = vsub.f32 %v1677, %v1961
    %v1963 = vand.u32 %v1962, 4294901760
    %v1964 = vsub.f32 %v1962, %v1963
    %v1965 = vand.u32 %v1964, 4294901760
    %1966 = vmatpush.msra.mxu0 %v1965
    %v1967 = vand.u32 %v1673, 4294901760
    %v1968 = vsub.f32 %v1673, %v1967
    %v1969 = vand.u32 %v1968, 4294901760
    %v1970 = vsub.f32 %v1968, %v1969
    %v1971 = vand.u32 %v1970, 4294901760
    %1972 = vmatpush.msra.mxu0 %v1971
    %v1973 = vand.u32 %v35, 4294901760
    %1974 = vmatmul.f32.gmra.mxu0 %v1973
    %v1975 = vpop.f32.mrf.mxu0
    %v1976 = vadd.f32 %v1930, %v1975
    %1977 = vdwg.mxu0
    %1978 = vmatpush.msra.mxu0 0.0
    %1979 = vmatpush.msra.mxu0 0.0
    %1980 = vmatpush.msra.mxu0 0.0
    %1981 = vmatpush.msra.mxu0 0.0
    %1982 = vmatpush.msra.mxu0 0.0
    %1983 = vmatpush.msra.mxu0 0.0
    %1984 = vmatpush.msra.mxu0 0.0
    %1985 = vmatpush.msra.mxu0 0.0
    %1986 = vmatpush.msra.mxu0 0.0
    %1987 = vmatpush.msra.mxu0 0.0
    %1988 = vmatpush.msra.mxu0 0.0
    %v1989 = vand.u32 %v1696, 4294901760
    %v1990 = vsub.f32 %v1696, %v1989
    %1991 = vmatpush.msra.mxu0 %v1990
    %v1992 = vand.u32 %v1685, 4294901760
    %v1993 = vsub.f32 %v1685, %v1992
    %1994 = vmatpush.msra.mxu0 %v1993
    %v1995 = vand.u32 %v1681, 4294901760
    %v1996 = vsub.f32 %v1681, %v1995
    %1997 = vmatpush.msra.mxu0 %v1996
    %v1998 = vand.u32 %v1677, 4294901760
    %v1999 = vsub.f32 %v1677, %v1998
    %2000 = vmatpush.msra.mxu0 %v1999
    %v2001 = vand.u32 %v1673, 4294901760
    %v2002 = vsub.f32 %v1673, %v2001
    %2003 = vmatpush.msra.mxu0 %v2002
    %v2004 = vand.u32 %v35, 4294901760
    %v2005 = vsub.f32 %v35, %v2004
    %2006 = vmatmul.f32.gmra.mxu0 %v2005
    %v2007 = vpop.f32.mrf.mxu0
    %v2008 = vadd.f32 %v1976, %v2007
    %2009 = vdwg.mxu0
    %2010 = vmatpush.msra.mxu0 0.0
    %2011 = vmatpush.msra.mxu0 0.0
    %2012 = vmatpush.msra.mxu0 0.0
    %2013 = vmatpush.msra.mxu0 0.0
    %2014 = vmatpush.msra.mxu0 0.0
    %2015 = vmatpush.msra.mxu0 0.0
    %2016 = vmatpush.msra.mxu0 0.0
    %2017 = vmatpush.msra.mxu0 0.0
    %2018 = vmatpush.msra.mxu0 0.0
    %2019 = vmatpush.msra.mxu0 0.0
    %2020 = vmatpush.msra.mxu0 0.0
    %v2021 = vand.u32 %v1696, 4294901760
    %2022 = vmatpush.msra.mxu0 %v2021
    %v2023 = vand.u32 %v1685, 4294901760
    %2024 = vmatpush.msra.mxu0 %v2023
    %v2025 = vand.u32 %v1681, 4294901760
    %2026 = vmatpush.msra.mxu0 %v2025
    %v2027 = vand.u32 %v1677, 4294901760
    %2028 = vmatpush.msra.mxu0 %v2027
    %v2029 = vand.u32 %v1673, 4294901760
    %2030 = vmatpush.msra.mxu0 %v2029
    %v2031 = vand.u32 %v35, 4294901760
    %v2032 = vsub.f32 %v35, %v2031
    %v2033 = vand.u32 %v2032, 4294901760
    %2034 = vmatmul.f32.gmra.mxu0 %v2033
    %v2035 = vpop.f32.mrf.mxu0
    %v2036 = vadd.f32 %v2008, %v2035
    %2037 = vdwg.mxu0
    %2038 = vmatpush.msra.mxu0 0.0
    %2039 = vmatpush.msra.mxu0 0.0
    %2040 = vmatpush.msra.mxu0 0.0
    %2041 = vmatpush.msra.mxu0 0.0
    %2042 = vmatpush.msra.mxu0 0.0
    %2043 = vmatpush.msra.mxu0 0.0
    %2044 = vmatpush.msra.mxu0 0.0
    %2045 = vmatpush.msra.mxu0 0.0
    %2046 = vmatpush.msra.mxu0 0.0
    %2047 = vmatpush.msra.mxu0 0.0
    %2048 = vmatpush.msra.mxu0 0.0
    %v2049 = vand.u32 %v1696, 4294901760
    %v2050 = vsub.f32 %v1696, %v2049
    %v2051 = vand.u32 %v2050, 4294901760
    %2052 = vmatpush.msra.mxu0 %v2051
    %v2053 = vand.u32 %v1685, 4294901760
    %v2054 = vsub.f32 %v1685, %v2053
    %v2055 = vand.u32 %v2054, 4294901760
    %2056 = vmatpush.msra.mxu0 %v2055
    %v2057 = vand.u32 %v1681, 4294901760
    %v2058 = vsub.f32 %v1681, %v2057
    %v2059 = vand.u32 %v2058, 4294901760
    %2060 = vmatpush.msra.mxu0 %v2059
    %v2061 = vand.u32 %v1677, 4294901760
    %v2062 = vsub.f32 %v1677, %v2061
    %v2063 = vand.u32 %v2062, 4294901760
    %2064 = vmatpush.msra.mxu0 %v2063
    %v2065 = vand.u32 %v1673, 4294901760
    %v2066 = vsub.f32 %v1673, %v2065
    %v2067 = vand.u32 %v2066, 4294901760
    %2068 = vmatpush.msra.mxu0 %v2067
    %v2069 = vand.u32 %v35, 4294901760
    %2070 = vmatmul.f32.gmra.mxu0 %v2069
    %v2071 = vpop.f32.mrf.mxu0
    %v2072 = vadd.f32 %v2036, %v2071
    %2073 = vdwg.mxu0
    %2074 = vmatpush.msra.mxu0 0.0
    %2075 = vmatpush.msra.mxu0 0.0
    %2076 = vmatpush.msra.mxu0 0.0
    %2077 = vmatpush.msra.mxu0 0.0
    %2078 = vmatpush.msra.mxu0 0.0
    %2079 = vmatpush.msra.mxu0 0.0
    %2080 = vmatpush.msra.mxu0 0.0
    %2081 = vmatpush.msra.mxu0 0.0
    %2082 = vmatpush.msra.mxu0 0.0
    %2083 = vmatpush.msra.mxu0 0.0
    %2084 = vmatpush.msra.mxu0 0.0
    %v2085 = vand.u32 %v1696, 4294901760
    %2086 = vmatpush.msra.mxu0 %v2085
    %v2087 = vand.u32 %v1685, 4294901760
    %2088 = vmatpush.msra.mxu0 %v2087
    %v2089 = vand.u32 %v1681, 4294901760
    %2090 = vmatpush.msra.mxu0 %v2089
    %v2091 = vand.u32 %v1677, 4294901760
    %2092 = vmatpush.msra.mxu0 %v2091
    %v2093 = vand.u32 %v1673, 4294901760
    %2094 = vmatpush.msra.mxu0 %v2093
    %v2095 = vand.u32 %v35, 4294901760
    %2096 = vmatmul.f32.gmra.mxu0 %v2095
    %v2097 = vpop.f32.mrf.mxu0
    %v2098 = vadd.f32 %v2072, %v2097
    %2099 = vdwg.mxu0
    %2100 = vmatpush.msra.mxu0 0.0
    %2101 = vmatpush.msra.mxu0 0.0
    %2102 = vmatpush.msra.mxu0 0.0
    %2103 = vmatpush.msra.mxu0 0.0
    %2104 = vmatpush.msra.mxu0 0.0
    %2105 = vmatpush.msra.mxu0 0.0
    %2106 = vmatpush.msra.mxu0 0.0
    %2107 = vmatpush.msra.mxu0 0.0
    %2108 = vmatpush.msra.mxu0 0.0
    %2109 = vmatpush.msra.mxu0 0.0
    %2110 = vmatpush.msra.mxu0 0.0
    %v2111 = vand.u32 %v1699, 4294901760
    %2112 = vmatpush.msra.mxu0 %v2111
    %v2113 = vand.u32 %v1686, 4294901760
    %2114 = vmatpush.msra.mxu0 %v2113
    %v2115 = vand.u32 %v1682, 4294901760
    %2116 = vmatpush.msra.mxu0 %v2115
    %v2117 = vand.u32 %v1678, 4294901760
    %2118 = vmatpush.msra.mxu0 %v2117
    %v2119 = vand.u32 %v1674, 4294901760
    %2120 = vmatpush.msra.mxu0 %v2119
    %v2121 = vand.u32 %v35, 4294901760
    %v2122 = vsub.f32 %v35, %v2121
    %v2123 = vand.u32 %v2122, 4294901760
    %v2124 = vsub.f32 %v2122, %v2123
    %v2125 = vand.u32 %v2124, 4294901760
    %2126 = vmatmul.f32.gmra.mxu0 %v2125
    %v2127 = vpop.f32.mrf.mxu0
    %v2128 = vadd.f32 0.0, %v2127
    %2129 = vdwg.mxu0
    %2130 = vmatpush.msra.mxu0 0.0
    %2131 = vmatpush.msra.mxu0 0.0
    %2132 = vmatpush.msra.mxu0 0.0
    %2133 = vmatpush.msra.mxu0 0.0
    %2134 = vmatpush.msra.mxu0 0.0
    %2135 = vmatpush.msra.mxu0 0.0
    %2136 = vmatpush.msra.mxu0 0.0
    %2137 = vmatpush.msra.mxu0 0.0
    %2138 = vmatpush.msra.mxu0 0.0
    %2139 = vmatpush.msra.mxu0 0.0
    %2140 = vmatpush.msra.mxu0 0.0
    %v2141 = vand.u32 %v1699, 4294901760
    %v2142 = vsub.f32 %v1699, %v2141
    %v2143 = vand.u32 %v2142, 4294901760
    %v2144 = vsub.f32 %v2142, %v2143
    %v2145 = vand.u32 %v2144, 4294901760
    %2146 = vmatpush.msra.mxu0 %v2145
    %v2147 = vand.u32 %v1686, 4294901760
    %v2148 = vsub.f32 %v1686, %v2147
    %v2149 = vand.u32 %v2148, 4294901760
    %v2150 = vsub.f32 %v2148, %v2149
    %v2151 = vand.u32 %v2150, 4294901760
    %2152 = vmatpush.msra.mxu0 %v2151
    %v2153 = vand.u32 %v1682, 4294901760
    %v2154 = vsub.f32 %v1682, %v2153
    %v2155 = vand.u32 %v2154, 4294901760
    %v2156 = vsub.f32 %v2154, %v2155
    %v2157 = vand.u32 %v2156, 4294901760
    %2158 = vmatpush.msra.mxu0 %v2157
    %v2159 = vand.u32 %v1678, 4294901760
    %v2160 = vsub.f32 %v1678, %v2159
    %v2161 = vand.u32 %v2160, 4294901760
    %v2162 = vsub.f32 %v2160, %v2161
    %v2163 = vand.u32 %v2162, 4294901760
    %2164 = vmatpush.msra.mxu0 %v2163
    %v2165 = vand.u32 %v1674, 4294901760
    %v2166 = vsub.f32 %v1674, %v2165
    %v2167 = vand.u32 %v2166, 4294901760
    %v2168 = vsub.f32 %v2166, %v2167
    %v2169 = vand.u32 %v2168, 4294901760
    %2170 = vmatpush.msra.mxu0 %v2169
    %v2171 = vand.u32 %v35, 4294901760
    %2172 = vmatmul.f32.gmra.mxu0 %v2171
    %v2173 = vpop.f32.mrf.mxu0
    %v2174 = vadd.f32 %v2128, %v2173
    %2175 = vdwg.mxu0
    %2176 = vmatpush.msra.mxu0 0.0
    %2177 = vmatpush.msra.mxu0 0.0
    %2178 = vmatpush.msra.mxu0 0.0
    %2179 = vmatpush.msra.mxu0 0.0
    %2180 = vmatpush.msra.mxu0 0.0
    %2181 = vmatpush.msra.mxu0 0.0
    %2182 = vmatpush.msra.mxu0 0.0
    %2183 = vmatpush.msra.mxu0 0.0
    %2184 = vmatpush.msra.mxu0 0.0
    %2185 = vmatpush.msra.mxu0 0.0
    %2186 = vmatpush.msra.mxu0 0.0
    %v2187 = vand.u32 %v1699, 4294901760
    %v2188 = vsub.f32 %v1699, %v2187
    %2189 = vmatpush.msra.mxu0 %v2188
    %v2190 = vand.u32 %v1686, 4294901760
    %v2191 = vsub.f32 %v1686, %v2190
    %2192 = vmatpush.msra.mxu0 %v2191
    %v2193 = vand.u32 %v1682, 4294901760
    %v2194 = vsub.f32 %v1682, %v2193
    %2195 = vmatpush.msra.mxu0 %v2194
    %v2196 = vand.u32 %v1678, 4294901760
    %v2197 = vsub.f32 %v1678, %v2196
    %2198 = vmatpush.msra.mxu0 %v2197
    %v2199 = vand.u32 %v1674, 4294901760
    %v2200 = vsub.f32 %v1674, %v2199
    %2201 = vmatpush.msra.mxu0 %v2200
    %v2202 = vand.u32 %v35, 4294901760
    %v2203 = vsub.f32 %v35, %v2202
    %2204 = vmatmul.f32.gmra.mxu0 %v2203
    %v2205 = vpop.f32.mrf.mxu0
    %v2206 = vadd.f32 %v2174, %v2205
    %2207 = vdwg.mxu0
    %2208 = vmatpush.msra.mxu0 0.0
    %2209 = vmatpush.msra.mxu0 0.0
    %2210 = vmatpush.msra.mxu0 0.0
    %2211 = vmatpush.msra.mxu0 0.0
    %2212 = vmatpush.msra.mxu0 0.0
    %2213 = vmatpush.msra.mxu0 0.0
    %2214 = vmatpush.msra.mxu0 0.0
    %2215 = vmatpush.msra.mxu0 0.0
    %2216 = vmatpush.msra.mxu0 0.0
    %2217 = vmatpush.msra.mxu0 0.0
    %2218 = vmatpush.msra.mxu0 0.0
    %v2219 = vand.u32 %v1699, 4294901760
    %2220 = vmatpush.msra.mxu0 %v2219
    %v2221 = vand.u32 %v1686, 4294901760
    %2222 = vmatpush.msra.mxu0 %v2221
    %v2223 = vand.u32 %v1682, 4294901760
    %2224 = vmatpush.msra.mxu0 %v2223
    %v2225 = vand.u32 %v1678, 4294901760
    %2226 = vmatpush.msra.mxu0 %v2225
    %v2227 = vand.u32 %v1674, 4294901760
    %2228 = vmatpush.msra.mxu0 %v2227
    %v2229 = vand.u32 %v35, 4294901760
    %v2230 = vsub.f32 %v35, %v2229
    %v2231 = vand.u32 %v2230, 4294901760
    %2232 = vmatmul.f32.gmra.mxu0 %v2231
    %v2233 = vpop.f32.mrf.mxu0
    %v2234 = vadd.f32 %v2206, %v2233
    %2235 = vdwg.mxu0
    %2236 = vmatpush.msra.mxu0 0.0
    %2237 = vmatpush.msra.mxu0 0.0
    %2238 = vmatpush.msra.mxu0 0.0
    %2239 = vmatpush.msra.mxu0 0.0
    %2240 = vmatpush.msra.mxu0 0.0
    %2241 = vmatpush.msra.mxu0 0.0
    %2242 = vmatpush.msra.mxu0 0.0
    %2243 = vmatpush.msra.mxu0 0.0
    %2244 = vmatpush.msra.mxu0 0.0
    %2245 = vmatpush.msra.mxu0 0.0
    %2246 = vmatpush.msra.mxu0 0.0
    %v2247 = vand.u32 %v1699, 4294901760
    %v2248 = vsub.f32 %v1699, %v2247
    %v2249 = vand.u32 %v2248, 4294901760
    %2250 = vmatpush.msra.mxu0 %v2249
    %v2251 = vand.u32 %v1686, 4294901760
    %v2252 = vsub.f32 %v1686, %v2251
    %v2253 = vand.u32 %v2252, 4294901760
    %2254 = vmatpush.msra.mxu0 %v2253
    %v2255 = vand.u32 %v1682, 4294901760
    %v2256 = vsub.f32 %v1682, %v2255
    %v2257 = vand.u32 %v2256, 4294901760
    %2258 = vmatpush.msra.mxu0 %v2257
    %v2259 = vand.u32 %v1678, 4294901760
    %v2260 = vsub.f32 %v1678, %v2259
    %v2261 = vand.u32 %v2260, 4294901760
    %2262 = vmatpush.msra.mxu0 %v2261
    %v2263 = vand.u32 %v1674, 4294901760
    %v2264 = vsub.f32 %v1674, %v2263
    %v2265 = vand.u32 %v2264, 4294901760
    %2266 = vmatpush.msra.mxu0 %v2265
    %v2267 = vand.u32 %v35, 4294901760
    %2268 = vmatmul.f32.gmra.mxu0 %v2267
    %v2269 = vpop.f32.mrf.mxu0
    %v2270 = vadd.f32 %v2234, %v2269
    %2271 = vdwg.mxu0
    %2272 = vmatpush.msra.mxu0 0.0
    %2273 = vmatpush.msra.mxu0 0.0
    %2274 = vmatpush.msra.mxu0 0.0
    %2275 = vmatpush.msra.mxu0 0.0
    %2276 = vmatpush.msra.mxu0 0.0
    %2277 = vmatpush.msra.mxu0 0.0
    %2278 = vmatpush.msra.mxu0 0.0
    %2279 = vmatpush.msra.mxu0 0.0
    %2280 = vmatpush.msra.mxu0 0.0
    %2281 = vmatpush.msra.mxu0 0.0
    %2282 = vmatpush.msra.mxu0 0.0
    %v2283 = vand.u32 %v1699, 4294901760
    %2284 = vmatpush.msra.mxu0 %v2283
    %v2285 = vand.u32 %v1686, 4294901760
    %2286 = vmatpush.msra.mxu0 %v2285
    %v2287 = vand.u32 %v1682, 4294901760
    %2288 = vmatpush.msra.mxu0 %v2287
    %v2289 = vand.u32 %v1678, 4294901760
    %2290 = vmatpush.msra.mxu0 %v2289
    %v2291 = vand.u32 %v1674, 4294901760
    %2292 = vmatpush.msra.mxu0 %v2291
    %v2293 = vand.u32 %v35, 4294901760
    %2294 = vmatmul.f32.gmra.mxu0 %v2293
    %v2295 = vpop.f32.mrf.mxu0
    %v2296 = vadd.f32 %v2270, %v2295
    %2297 = vdwg.mxu0
    %2298 = vmatpush.msra.mxu0 0.0
    %2299 = vmatpush.msra.mxu0 0.0
    %2300 = vmatpush.msra.mxu0 0.0
    %2301 = vmatpush.msra.mxu0 0.0
    %2302 = vmatpush.msra.mxu0 0.0
    %2303 = vmatpush.msra.mxu0 0.0
    %2304 = vmatpush.msra.mxu0 0.0
    %2305 = vmatpush.msra.mxu0 0.0
    %2306 = vmatpush.msra.mxu0 0.0
    %2307 = vmatpush.msra.mxu0 0.0
    %2308 = vmatpush.msra.mxu0 0.0
    %v2309 = vand.u32 %v1702, 4294901760
    %2310 = vmatpush.msra.mxu0 %v2309
    %v2311 = vand.u32 %v1687, 4294901760
    %2312 = vmatpush.msra.mxu0 %v2311
    %v2313 = vand.u32 %v1683, 4294901760
    %2314 = vmatpush.msra.mxu0 %v2313
    %v2315 = vand.u32 %v1679, 4294901760
    %2316 = vmatpush.msra.mxu0 %v2315
    %v2317 = vand.u32 %v1675, 4294901760
    %2318 = vmatpush.msra.mxu0 %v2317
    %v2319 = vand.u32 %v35, 4294901760
    %v2320 = vsub.f32 %v35, %v2319
    %v2321 = vand.u32 %v2320, 4294901760
    %v2322 = vsub.f32 %v2320, %v2321
    %v2323 = vand.u32 %v2322, 4294901760
    %2324 = vmatmul.f32.gmra.mxu0 %v2323
    %v2325 = vpop.f32.mrf.mxu0
    %v2326 = vadd.f32 0.0, %v2325
    %2327 = vdwg.mxu0
    %2328 = vmatpush.msra.mxu0 0.0
    %2329 = vmatpush.msra.mxu0 0.0
    %2330 = vmatpush.msra.mxu0 0.0
    %2331 = vmatpush.msra.mxu0 0.0
    %2332 = vmatpush.msra.mxu0 0.0
    %2333 = vmatpush.msra.mxu0 0.0
    %2334 = vmatpush.msra.mxu0 0.0
    %2335 = vmatpush.msra.mxu0 0.0
    %2336 = vmatpush.msra.mxu0 0.0
    %2337 = vmatpush.msra.mxu0 0.0
    %2338 = vmatpush.msra.mxu0 0.0
    %v2339 = vand.u32 %v1702, 4294901760
    %v2340 = vsub.f32 %v1702, %v2339
    %v2341 = vand.u32 %v2340, 4294901760
    %v2342 = vsub.f32 %v2340, %v2341
    %v2343 = vand.u32 %v2342, 4294901760
    %2344 = vmatpush.msra.mxu0 %v2343
    %v2345 = vand.u32 %v1687, 4294901760
    %v2346 = vsub.f32 %v1687, %v2345
    %v2347 = vand.u32 %v2346, 4294901760
    %v2348 = vsub.f32 %v2346, %v2347
    %v2349 = vand.u32 %v2348, 4294901760
    %2350 = vmatpush.msra.mxu0 %v2349
    %v2351 = vand.u32 %v1683, 4294901760
    %v2352 = vsub.f32 %v1683, %v2351
    %v2353 = vand.u32 %v2352, 4294901760
    %v2354 = vsub.f32 %v2352, %v2353
    %v2355 = vand.u32 %v2354, 4294901760
    %2356 = vmatpush.msra.mxu0 %v2355
    %v2357 = vand.u32 %v1679, 4294901760
    %v2358 = vsub.f32 %v1679, %v2357
    %v2359 = vand.u32 %v2358, 4294901760
    %v2360 = vsub.f32 %v2358, %v2359
    %v2361 = vand.u32 %v2360, 4294901760
    %2362 = vmatpush.msra.mxu0 %v2361
    %v2363 = vand.u32 %v1675, 4294901760
    %v2364 = vsub.f32 %v1675, %v2363
    %v2365 = vand.u32 %v2364, 4294901760
    %v2366 = vsub.f32 %v2364, %v2365
    %v2367 = vand.u32 %v2366, 4294901760
    %2368 = vmatpush.msra.mxu0 %v2367
    %v2369 = vand.u32 %v35, 4294901760
    %2370 = vmatmul.f32.gmra.mxu0 %v2369
    %v2371 = vpop.f32.mrf.mxu0
    %v2372 = vadd.f32 %v2326, %v2371
    %2373 = vdwg.mxu0
    %2374 = vmatpush.msra.mxu0 0.0
    %2375 = vmatpush.msra.mxu0 0.0
    %2376 = vmatpush.msra.mxu0 0.0
    %2377 = vmatpush.msra.mxu0 0.0
    %2378 = vmatpush.msra.mxu0 0.0
    %2379 = vmatpush.msra.mxu0 0.0
    %2380 = vmatpush.msra.mxu0 0.0
    %2381 = vmatpush.msra.mxu0 0.0
    %2382 = vmatpush.msra.mxu0 0.0
    %2383 = vmatpush.msra.mxu0 0.0
    %2384 = vmatpush.msra.mxu0 0.0
    %v2385 = vand.u32 %v1702, 4294901760
    %v2386 = vsub.f32 %v1702, %v2385
    %2387 = vmatpush.msra.mxu0 %v2386
    %v2388 = vand.u32 %v1687, 4294901760
    %v2389 = vsub.f32 %v1687, %v2388
    %2390 = vmatpush.msra.mxu0 %v2389
    %v2391 = vand.u32 %v1683, 4294901760
    %v2392 = vsub.f32 %v1683, %v2391
    %2393 = vmatpush.msra.mxu0 %v2392
    %v2394 = vand.u32 %v1679, 4294901760
    %v2395 = vsub.f32 %v1679, %v2394
    %2396 = vmatpush.msra.mxu0 %v2395
    %v2397 = vand.u32 %v1675, 4294901760
    %v2398 = vsub.f32 %v1675, %v2397
    %2399 = vmatpush.msra.mxu0 %v2398
    %v2400 = vand.u32 %v35, 4294901760
    %v2401 = vsub.f32 %v35, %v2400
    %2402 = vmatmul.f32.gmra.mxu0 %v2401
    %v2403 = vpop.f32.mrf.mxu0
    %v2404 = vadd.f32 %v2372, %v2403
    %2405 = vdwg.mxu0
    %2406 = vmatpush.msra.mxu0 0.0
    %2407 = vmatpush.msra.mxu0 0.0
    %2408 = vmatpush.msra.mxu0 0.0
    %2409 = vmatpush.msra.mxu0 0.0
    %2410 = vmatpush.msra.mxu0 0.0
    %2411 = vmatpush.msra.mxu0 0.0
    %2412 = vmatpush.msra.mxu0 0.0
    %2413 = vmatpush.msra.mxu0 0.0
    %2414 = vmatpush.msra.mxu0 0.0
    %2415 = vmatpush.msra.mxu0 0.0
    %2416 = vmatpush.msra.mxu0 0.0
    %v2417 = vand.u32 %v1702, 4294901760
    %2418 = vmatpush.msra.mxu0 %v2417
    %v2419 = vand.u32 %v1687, 4294901760
    %2420 = vmatpush.msra.mxu0 %v2419
    %v2421 = vand.u32 %v1683, 4294901760
    %2422 = vmatpush.msra.mxu0 %v2421
    %v2423 = vand.u32 %v1679, 4294901760
    %2424 = vmatpush.msra.mxu0 %v2423
    %v2425 = vand.u32 %v1675, 4294901760
    %2426 = vmatpush.msra.mxu0 %v2425
    %v2427 = vand.u32 %v35, 4294901760
    %v2428 = vsub.f32 %v35, %v2427
    %v2429 = vand.u32 %v2428, 4294901760
    %2430 = vmatmul.f32.gmra.mxu0 %v2429
    %v2431 = vpop.f32.mrf.mxu0
    %v2432 = vadd.f32 %v2404, %v2431
    %2433 = vdwg.mxu0
    %2434 = vmatpush.msra.mxu0 0.0
    %2435 = vmatpush.msra.mxu0 0.0
    %2436 = vmatpush.msra.mxu0 0.0
    %2437 = vmatpush.msra.mxu0 0.0
    %2438 = vmatpush.msra.mxu0 0.0
    %2439 = vmatpush.msra.mxu0 0.0
    %2440 = vmatpush.msra.mxu0 0.0
    %2441 = vmatpush.msra.mxu0 0.0
    %2442 = vmatpush.msra.mxu0 0.0
    %2443 = vmatpush.msra.mxu0 0.0
    %2444 = vmatpush.msra.mxu0 0.0
    %v2445 = vand.u32 %v1702, 4294901760
    %v2446 = vsub.f32 %v1702, %v2445
    %v2447 = vand.u32 %v2446, 4294901760
    %2448 = vmatpush.msra.mxu0 %v2447
    %v2449 = vand.u32 %v1687, 4294901760
    %v2450 = vsub.f32 %v1687, %v2449
    %v2451 = vand.u32 %v2450, 4294901760
    %2452 = vmatpush.msra.mxu0 %v2451
    %v2453 = vand.u32 %v1683, 4294901760
    %v2454 = vsub.f32 %v1683, %v2453
    %v2455 = vand.u32 %v2454, 4294901760
    %2456 = vmatpush.msra.mxu0 %v2455
    %v2457 = vand.u32 %v1679, 4294901760
    %v2458 = vsub.f32 %v1679, %v2457
    %v2459 = vand.u32 %v2458, 4294901760
    %2460 = vmatpush.msra.mxu0 %v2459
    %v2461 = vand.u32 %v1675, 4294901760
    %v2462 = vsub.f32 %v1675, %v2461
    %v2463 = vand.u32 %v2462, 4294901760
    %2464 = vmatpush.msra.mxu0 %v2463
    %v2465 = vand.u32 %v35, 4294901760
    %2466 = vmatmul.f32.gmra.mxu0 %v2465
    %v2467 = vpop.f32.mrf.mxu0
    %v2468 = vadd.f32 %v2432, %v2467
    %2469 = vdwg.mxu0
    %2470 = vmatpush.msra.mxu0 0.0
    %2471 = vmatpush.msra.mxu0 0.0
    %2472 = vmatpush.msra.mxu0 0.0
    %2473 = vmatpush.msra.mxu0 0.0
    %2474 = vmatpush.msra.mxu0 0.0
    %2475 = vmatpush.msra.mxu0 0.0
    %2476 = vmatpush.msra.mxu0 0.0
    %2477 = vmatpush.msra.mxu0 0.0
    %2478 = vmatpush.msra.mxu0 0.0
    %2479 = vmatpush.msra.mxu0 0.0
    %2480 = vmatpush.msra.mxu0 0.0
    %v2481 = vand.u32 %v1702, 4294901760
    %2482 = vmatpush.msra.mxu0 %v2481
    %v2483 = vand.u32 %v1687, 4294901760
    %2484 = vmatpush.msra.mxu0 %v2483
    %v2485 = vand.u32 %v1683, 4294901760
    %2486 = vmatpush.msra.mxu0 %v2485
    %v2487 = vand.u32 %v1679, 4294901760
    %2488 = vmatpush.msra.mxu0 %v2487
    %v2489 = vand.u32 %v1675, 4294901760
    %2490 = vmatpush.msra.mxu0 %v2489
    %v2491 = vand.u32 %v35, 4294901760
    %2492 = vmatmul.f32.gmra.mxu0 %v2491
    %v2493 = vpop.f32.mrf.mxu0
    %v2494 = vadd.f32 %v2468, %v2493
    %2495 = vdwg.mxu0
    %v2496 = vmul.f32 %v1667, %v1900
    %v2497 = vmul.f32 %v1668, %v2098
    %v2498 = vmul.f32 %v1669, %v2296
    %v2499 = vmul.f32 %v1670, %v2494
    %s2500 = scalar_lea.vmem %s0, 480
    %v2501 = vld [vmem:[%s2500] sm:$0xff]
    %v2502 = vld [vmem:[%s2500 + $0x8] sm:$0xff]
    %v2503 = vld [vmem:[%s2500 + $0x10] sm:$0xff]
    %v2504 = vld [vmem:[%s2500 + $0x18] sm:$0xff]
    %v2505 = vld [vmem:[%s2500 + $0x20] sm:$0xff]
    %v2506 = vld [vmem:[%s2500 + $0x28] sm:$0xff]
    %v2507 = vld [vmem:[%s2500 + $0x30] sm:$0xff]
    %v2508 = vld [vmem:[%s2500 + $0x38] sm:$0xff]
    %v2509 = vld [vmem:[%s2500 + $0x40] sm:$0xff]
    %v2510 = vld [vmem:[%s2500 + $0x48] sm:$0xff]
    %v2511 = vld [vmem:[%s2500 + $0x50] sm:$0xff]
    %v2512 = vld [vmem:[%s2500 + $0x58] sm:$0xff]
    %v2513 = vld [vmem:[%s2500 + $0x60] sm:$0xff]
    %v2514 = vld [vmem:[%s2500 + $0x68] sm:$0xff]
    %v2515 = vld [vmem:[%s2500 + $0x70] sm:$0xff]
    %v2516 = vld [vmem:[%s2500 + $0x78] sm:$0xff]
    %v2517 = vld [vmem:[%s2500 + $0x80] sm:$0x1f]
    %v2518 = vld [vmem:[%s2500 + $0x88] sm:$0x1f]
    %v2519 = vld [vmem:[%s2500 + $0x90] sm:$0x1f]
    %v2520 = vld [vmem:[%s2500 + $0x98] sm:$0x1f]
    %v2522 = vsel %vm37, %v2517, 0
    %v2525 = vsel %vm37, %v2518, 0
    %v2528 = vsel %vm37, %v2519, 0
    %v2531 = vsel %vm37, %v2520, 0
    %2533 = vmatpush.msra.mxu0 0.0
    %2534 = vmatpush.msra.mxu0 0.0
    %2535 = vmatpush.msra.mxu0 0.0
    %2536 = vmatpush.msra.mxu0 0.0
    %2537 = vmatpush.msra.mxu0 0.0
    %2538 = vmatpush.msra.mxu0 0.0
    %2539 = vmatpush.msra.mxu0 0.0
    %2540 = vmatpush.msra.mxu0 0.0
    %2541 = vmatpush.msra.mxu0 0.0
    %2542 = vmatpush.msra.mxu0 0.0
    %2543 = vmatpush.msra.mxu0 0.0
    %v2544 = vand.u32 %v2522, 4294901760
    %2545 = vmatpush.msra.mxu0 %v2544
    %v2546 = vand.u32 %v2513, 4294901760
    %2547 = vmatpush.msra.mxu0 %v2546
    %v2548 = vand.u32 %v2509, 4294901760
    %2549 = vmatpush.msra.mxu0 %v2548
    %v2550 = vand.u32 %v2505, 4294901760
    %2551 = vmatpush.msra.mxu0 %v2550
    %v2552 = vand.u32 %v2501, 4294901760
    %2553 = vmatpush.msra.mxu0 %v2552
    %v2554 = vand.u32 %v35, 4294901760
    %v2555 = vsub.f32 %v35, %v2554
    %v2556 = vand.u32 %v2555, 4294901760
    %v2557 = vsub.f32 %v2555, %v2556
    %v2558 = vand.u32 %v2557, 4294901760
    %2559 = vmatmul.f32.gmra.mxu0 %v2558
    %v2560 = vpop.f32.mrf.mxu0
    %v2561 = vadd.f32 0.0, %v2560
    %2562 = vdwg.mxu0
    %2563 = vmatpush.msra.mxu0 0.0
    %2564 = vmatpush.msra.mxu0 0.0
    %2565 = vmatpush.msra.mxu0 0.0
    %2566 = vmatpush.msra.mxu0 0.0
    %2567 = vmatpush.msra.mxu0 0.0
    %2568 = vmatpush.msra.mxu0 0.0
    %2569 = vmatpush.msra.mxu0 0.0
    %2570 = vmatpush.msra.mxu0 0.0
    %2571 = vmatpush.msra.mxu0 0.0
    %2572 = vmatpush.msra.mxu0 0.0
    %2573 = vmatpush.msra.mxu0 0.0
    %v2574 = vand.u32 %v2522, 4294901760
    %v2575 = vsub.f32 %v2522, %v2574
    %v2576 = vand.u32 %v2575, 4294901760
    %v2577 = vsub.f32 %v2575, %v2576
    %v2578 = vand.u32 %v2577, 4294901760
    %2579 = vmatpush.msra.mxu0 %v2578
    %v2580 = vand.u32 %v2513, 4294901760
    %v2581 = vsub.f32 %v2513, %v2580
    %v2582 = vand.u32 %v2581, 4294901760
    %v2583 = vsub.f32 %v2581, %v2582
    %v2584 = vand.u32 %v2583, 4294901760
    %2585 = vmatpush.msra.mxu0 %v2584
    %v2586 = vand.u32 %v2509, 4294901760
    %v2587 = vsub.f32 %v2509, %v2586
    %v2588 = vand.u32 %v2587, 4294901760
    %v2589 = vsub.f32 %v2587, %v2588
    %v2590 = vand.u32 %v2589, 4294901760
    %2591 = vmatpush.msra.mxu0 %v2590
    %v2592 = vand.u32 %v2505, 4294901760
    %v2593 = vsub.f32 %v2505, %v2592
    %v2594 = vand.u32 %v2593, 4294901760
    %v2595 = vsub.f32 %v2593, %v2594
    %v2596 = vand.u32 %v2595, 4294901760
    %2597 = vmatpush.msra.mxu0 %v2596
    %v2598 = vand.u32 %v2501, 4294901760
    %v2599 = vsub.f32 %v2501, %v2598
    %v2600 = vand.u32 %v2599, 4294901760
    %v2601 = vsub.f32 %v2599, %v2600
    %v2602 = vand.u32 %v2601, 4294901760
    %2603 = vmatpush.msra.mxu0 %v2602
    %v2604 = vand.u32 %v35, 4294901760
    %2605 = vmatmul.f32.gmra.mxu0 %v2604
    %v2606 = vpop.f32.mrf.mxu0
    %v2607 = vadd.f32 %v2561, %v2606
    %2608 = vdwg.mxu0
    %2609 = vmatpush.msra.mxu0 0.0
    %2610 = vmatpush.msra.mxu0 0.0
    %2611 = vmatpush.msra.mxu0 0.0
    %2612 = vmatpush.msra.mxu0 0.0
    %2613 = vmatpush.msra.mxu0 0.0
    %2614 = vmatpush.msra.mxu0 0.0
    %2615 = vmatpush.msra.mxu0 0.0
    %2616 = vmatpush.msra.mxu0 0.0
    %2617 = vmatpush.msra.mxu0 0.0
    %2618 = vmatpush.msra.mxu0 0.0
    %2619 = vmatpush.msra.mxu0 0.0
    %v2620 = vand.u32 %v2522, 4294901760
    %v2621 = vsub.f32 %v2522, %v2620
    %2622 = vmatpush.msra.mxu0 %v2621
    %v2623 = vand.u32 %v2513, 4294901760
    %v2624 = vsub.f32 %v2513, %v2623
    %2625 = vmatpush.msra.mxu0 %v2624
    %v2626 = vand.u32 %v2509, 4294901760
    %v2627 = vsub.f32 %v2509, %v2626
    %2628 = vmatpush.msra.mxu0 %v2627
    %v2629 = vand.u32 %v2505, 4294901760
    %v2630 = vsub.f32 %v2505, %v2629
    %2631 = vmatpush.msra.mxu0 %v2630
    %v2632 = vand.u32 %v2501, 4294901760
    %v2633 = vsub.f32 %v2501, %v2632
    %2634 = vmatpush.msra.mxu0 %v2633
    %v2635 = vand.u32 %v35, 4294901760
    %v2636 = vsub.f32 %v35, %v2635
    %2637 = vmatmul.f32.gmra.mxu0 %v2636
    %v2638 = vpop.f32.mrf.mxu0
    %v2639 = vadd.f32 %v2607, %v2638
    %2640 = vdwg.mxu0
    %2641 = vmatpush.msra.mxu0 0.0
    %2642 = vmatpush.msra.mxu0 0.0
    %2643 = vmatpush.msra.mxu0 0.0
    %2644 = vmatpush.msra.mxu0 0.0
    %2645 = vmatpush.msra.mxu0 0.0
    %2646 = vmatpush.msra.mxu0 0.0
    %2647 = vmatpush.msra.mxu0 0.0
    %2648 = vmatpush.msra.mxu0 0.0
    %2649 = vmatpush.msra.mxu0 0.0
    %2650 = vmatpush.msra.mxu0 0.0
    %2651 = vmatpush.msra.mxu0 0.0
    %v2652 = vand.u32 %v2522, 4294901760
    %2653 = vmatpush.msra.mxu0 %v2652
    %v2654 = vand.u32 %v2513, 4294901760
    %2655 = vmatpush.msra.mxu0 %v2654
    %v2656 = vand.u32 %v2509, 4294901760
    %2657 = vmatpush.msra.mxu0 %v2656
    %v2658 = vand.u32 %v2505, 4294901760
    %2659 = vmatpush.msra.mxu0 %v2658
    %v2660 = vand.u32 %v2501, 4294901760
    %2661 = vmatpush.msra.mxu0 %v2660
    %v2662 = vand.u32 %v35, 4294901760
    %v2663 = vsub.f32 %v35, %v2662
    %v2664 = vand.u32 %v2663, 4294901760
    %2665 = vmatmul.f32.gmra.mxu0 %v2664
    %v2666 = vpop.f32.mrf.mxu0
    %v2667 = vadd.f32 %v2639, %v2666
    %2668 = vdwg.mxu0
    %2669 = vmatpush.msra.mxu0 0.0
    %2670 = vmatpush.msra.mxu0 0.0
    %2671 = vmatpush.msra.mxu0 0.0
    %2672 = vmatpush.msra.mxu0 0.0
    %2673 = vmatpush.msra.mxu0 0.0
    %2674 = vmatpush.msra.mxu0 0.0
    %2675 = vmatpush.msra.mxu0 0.0
    %2676 = vmatpush.msra.mxu0 0.0
    %2677 = vmatpush.msra.mxu0 0.0
    %2678 = vmatpush.msra.mxu0 0.0
    %2679 = vmatpush.msra.mxu0 0.0
    %v2680 = vand.u32 %v2522, 4294901760
    %v2681 = vsub.f32 %v2522, %v2680
    %v2682 = vand.u32 %v2681, 4294901760
    %2683 = vmatpush.msra.mxu0 %v2682
    %v2684 = vand.u32 %v2513, 4294901760
    %v2685 = vsub.f32 %v2513, %v2684
    %v2686 = vand.u32 %v2685, 4294901760
    %2687 = vmatpush.msra.mxu0 %v2686
    %v2688 = vand.u32 %v2509, 4294901760
    %v2689 = vsub.f32 %v2509, %v2688
    %v2690 = vand.u32 %v2689, 4294901760
    %2691 = vmatpush.msra.mxu0 %v2690
    %v2692 = vand.u32 %v2505, 4294901760
    %v2693 = vsub.f32 %v2505, %v2692
    %v2694 = vand.u32 %v2693, 4294901760
    %2695 = vmatpush.msra.mxu0 %v2694
    %v2696 = vand.u32 %v2501, 4294901760
    %v2697 = vsub.f32 %v2501, %v2696
    %v2698 = vand.u32 %v2697, 4294901760
    %2699 = vmatpush.msra.mxu0 %v2698
    %v2700 = vand.u32 %v35, 4294901760
    %2701 = vmatmul.f32.gmra.mxu0 %v2700
    %v2702 = vpop.f32.mrf.mxu0
    %v2703 = vadd.f32 %v2667, %v2702
    %2704 = vdwg.mxu0
    %2705 = vmatpush.msra.mxu0 0.0
    %2706 = vmatpush.msra.mxu0 0.0
    %2707 = vmatpush.msra.mxu0 0.0
    %2708 = vmatpush.msra.mxu0 0.0
    %2709 = vmatpush.msra.mxu0 0.0
    %2710 = vmatpush.msra.mxu0 0.0
    %2711 = vmatpush.msra.mxu0 0.0
    %2712 = vmatpush.msra.mxu0 0.0
    %2713 = vmatpush.msra.mxu0 0.0
    %2714 = vmatpush.msra.mxu0 0.0
    %2715 = vmatpush.msra.mxu0 0.0
    %v2716 = vand.u32 %v2522, 4294901760
    %2717 = vmatpush.msra.mxu0 %v2716
    %v2718 = vand.u32 %v2513, 4294901760
    %2719 = vmatpush.msra.mxu0 %v2718
    %v2720 = vand.u32 %v2509, 4294901760
    %2721 = vmatpush.msra.mxu0 %v2720
    %v2722 = vand.u32 %v2505, 4294901760
    %2723 = vmatpush.msra.mxu0 %v2722
    %v2724 = vand.u32 %v2501, 4294901760
    %2725 = vmatpush.msra.mxu0 %v2724
    %v2726 = vand.u32 %v35, 4294901760
    %2727 = vmatmul.f32.gmra.mxu0 %v2726
    %v2728 = vpop.f32.mrf.mxu0
    %v2729 = vadd.f32 %v2703, %v2728
    %2730 = vdwg.mxu0
    %2731 = vmatpush.msra.mxu0 0.0
    %2732 = vmatpush.msra.mxu0 0.0
    %2733 = vmatpush.msra.mxu0 0.0
    %2734 = vmatpush.msra.mxu0 0.0
    %2735 = vmatpush.msra.mxu0 0.0
    %2736 = vmatpush.msra.mxu0 0.0
    %2737 = vmatpush.msra.mxu0 0.0
    %2738 = vmatpush.msra.mxu0 0.0
    %2739 = vmatpush.msra.mxu0 0.0
    %2740 = vmatpush.msra.mxu0 0.0
    %2741 = vmatpush.msra.mxu0 0.0
    %v2742 = vand.u32 %v2525, 4294901760
    %2743 = vmatpush.msra.mxu0 %v2742
    %v2744 = vand.u32 %v2514, 4294901760
    %2745 = vmatpush.msra.mxu0 %v2744
    %v2746 = vand.u32 %v2510, 4294901760
    %2747 = vmatpush.msra.mxu0 %v2746
    %v2748 = vand.u32 %v2506, 4294901760
    %2749 = vmatpush.msra.mxu0 %v2748
    %v2750 = vand.u32 %v2502, 4294901760
    %2751 = vmatpush.msra.mxu0 %v2750
    %v2752 = vand.u32 %v35, 4294901760
    %v2753 = vsub.f32 %v35, %v2752
    %v2754 = vand.u32 %v2753, 4294901760
    %v2755 = vsub.f32 %v2753, %v2754
    %v2756 = vand.u32 %v2755, 4294901760
    %2757 = vmatmul.f32.gmra.mxu0 %v2756
    %v2758 = vpop.f32.mrf.mxu0
    %v2759 = vadd.f32 0.0, %v2758
    %2760 = vdwg.mxu0
    %2761 = vmatpush.msra.mxu0 0.0
    %2762 = vmatpush.msra.mxu0 0.0
    %2763 = vmatpush.msra.mxu0 0.0
    %2764 = vmatpush.msra.mxu0 0.0
    %2765 = vmatpush.msra.mxu0 0.0
    %2766 = vmatpush.msra.mxu0 0.0
    %2767 = vmatpush.msra.mxu0 0.0
    %2768 = vmatpush.msra.mxu0 0.0
    %2769 = vmatpush.msra.mxu0 0.0
    %2770 = vmatpush.msra.mxu0 0.0
    %2771 = vmatpush.msra.mxu0 0.0
    %v2772 = vand.u32 %v2525, 4294901760
    %v2773 = vsub.f32 %v2525, %v2772
    %v2774 = vand.u32 %v2773, 4294901760
    %v2775 = vsub.f32 %v2773, %v2774
    %v2776 = vand.u32 %v2775, 4294901760
    %2777 = vmatpush.msra.mxu0 %v2776
    %v2778 = vand.u32 %v2514, 4294901760
    %v2779 = vsub.f32 %v2514, %v2778
    %v2780 = vand.u32 %v2779, 4294901760
    %v2781 = vsub.f32 %v2779, %v2780
    %v2782 = vand.u32 %v2781, 4294901760
    %2783 = vmatpush.msra.mxu0 %v2782
    %v2784 = vand.u32 %v2510, 4294901760
    %v2785 = vsub.f32 %v2510, %v2784
    %v2786 = vand.u32 %v2785, 4294901760
    %v2787 = vsub.f32 %v2785, %v2786
    %v2788 = vand.u32 %v2787, 4294901760
    %2789 = vmatpush.msra.mxu0 %v2788
    %v2790 = vand.u32 %v2506, 4294901760
    %v2791 = vsub.f32 %v2506, %v2790
    %v2792 = vand.u32 %v2791, 4294901760
    %v2793 = vsub.f32 %v2791, %v2792
    %v2794 = vand.u32 %v2793, 4294901760
    %2795 = vmatpush.msra.mxu0 %v2794
    %v2796 = vand.u32 %v2502, 4294901760
    %v2797 = vsub.f32 %v2502, %v2796
    %v2798 = vand.u32 %v2797, 4294901760
    %v2799 = vsub.f32 %v2797, %v2798
    %v2800 = vand.u32 %v2799, 4294901760
    %2801 = vmatpush.msra.mxu0 %v2800
    %v2802 = vand.u32 %v35, 4294901760
    %2803 = vmatmul.f32.gmra.mxu0 %v2802
    %v2804 = vpop.f32.mrf.mxu0
    %v2805 = vadd.f32 %v2759, %v2804
    %2806 = vdwg.mxu0
    %2807 = vmatpush.msra.mxu0 0.0
    %2808 = vmatpush.msra.mxu0 0.0
    %2809 = vmatpush.msra.mxu0 0.0
    %2810 = vmatpush.msra.mxu0 0.0
    %2811 = vmatpush.msra.mxu0 0.0
    %2812 = vmatpush.msra.mxu0 0.0
    %2813 = vmatpush.msra.mxu0 0.0
    %2814 = vmatpush.msra.mxu0 0.0
    %2815 = vmatpush.msra.mxu0 0.0
    %2816 = vmatpush.msra.mxu0 0.0
    %2817 = vmatpush.msra.mxu0 0.0
    %v2818 = vand.u32 %v2525, 4294901760
    %v2819 = vsub.f32 %v2525, %v2818
    %2820 = vmatpush.msra.mxu0 %v2819
    %v2821 = vand.u32 %v2514, 4294901760
    %v2822 = vsub.f32 %v2514, %v2821
    %2823 = vmatpush.msra.mxu0 %v2822
    %v2824 = vand.u32 %v2510, 4294901760
    %v2825 = vsub.f32 %v2510, %v2824
    %2826 = vmatpush.msra.mxu0 %v2825
    %v2827 = vand.u32 %v2506, 4294901760
    %v2828 = vsub.f32 %v2506, %v2827
    %2829 = vmatpush.msra.mxu0 %v2828
    %v2830 = vand.u32 %v2502, 4294901760
    %v2831 = vsub.f32 %v2502, %v2830
    %2832 = vmatpush.msra.mxu0 %v2831
    %v2833 = vand.u32 %v35, 4294901760
    %v2834 = vsub.f32 %v35, %v2833
    %2835 = vmatmul.f32.gmra.mxu0 %v2834
    %v2836 = vpop.f32.mrf.mxu0
    %v2837 = vadd.f32 %v2805, %v2836
    %2838 = vdwg.mxu0
    %2839 = vmatpush.msra.mxu0 0.0
    %2840 = vmatpush.msra.mxu0 0.0
    %2841 = vmatpush.msra.mxu0 0.0
    %2842 = vmatpush.msra.mxu0 0.0
    %2843 = vmatpush.msra.mxu0 0.0
    %2844 = vmatpush.msra.mxu0 0.0
    %2845 = vmatpush.msra.mxu0 0.0
    %2846 = vmatpush.msra.mxu0 0.0
    %2847 = vmatpush.msra.mxu0 0.0
    %2848 = vmatpush.msra.mxu0 0.0
    %2849 = vmatpush.msra.mxu0 0.0
    %v2850 = vand.u32 %v2525, 4294901760
    %2851 = vmatpush.msra.mxu0 %v2850
    %v2852 = vand.u32 %v2514, 4294901760
    %2853 = vmatpush.msra.mxu0 %v2852
    %v2854 = vand.u32 %v2510, 4294901760
    %2855 = vmatpush.msra.mxu0 %v2854
    %v2856 = vand.u32 %v2506, 4294901760
    %2857 = vmatpush.msra.mxu0 %v2856
    %v2858 = vand.u32 %v2502, 4294901760
    %2859 = vmatpush.msra.mxu0 %v2858
    %v2860 = vand.u32 %v35, 4294901760
    %v2861 = vsub.f32 %v35, %v2860
    %v2862 = vand.u32 %v2861, 4294901760
    %2863 = vmatmul.f32.gmra.mxu0 %v2862
    %v2864 = vpop.f32.mrf.mxu0
    %v2865 = vadd.f32 %v2837, %v2864
    %2866 = vdwg.mxu0
    %2867 = vmatpush.msra.mxu0 0.0
    %2868 = vmatpush.msra.mxu0 0.0
    %2869 = vmatpush.msra.mxu0 0.0
    %2870 = vmatpush.msra.mxu0 0.0
    %2871 = vmatpush.msra.mxu0 0.0
    %2872 = vmatpush.msra.mxu0 0.0
    %2873 = vmatpush.msra.mxu0 0.0
    %2874 = vmatpush.msra.mxu0 0.0
    %2875 = vmatpush.msra.mxu0 0.0
    %2876 = vmatpush.msra.mxu0 0.0
    %2877 = vmatpush.msra.mxu0 0.0
    %v2878 = vand.u32 %v2525, 4294901760
    %v2879 = vsub.f32 %v2525, %v2878
    %v2880 = vand.u32 %v2879, 4294901760
    %2881 = vmatpush.msra.mxu0 %v2880
    %v2882 = vand.u32 %v2514, 4294901760
    %v2883 = vsub.f32 %v2514, %v2882
    %v2884 = vand.u32 %v2883, 4294901760
    %2885 = vmatpush.msra.mxu0 %v2884
    %v2886 = vand.u32 %v2510, 4294901760
    %v2887 = vsub.f32 %v2510, %v2886
    %v2888 = vand.u32 %v2887, 4294901760
    %2889 = vmatpush.msra.mxu0 %v2888
    %v2890 = vand.u32 %v2506, 4294901760
    %v2891 = vsub.f32 %v2506, %v2890
    %v2892 = vand.u32 %v2891, 4294901760
    %2893 = vmatpush.msra.mxu0 %v2892
    %v2894 = vand.u32 %v2502, 4294901760
    %v2895 = vsub.f32 %v2502, %v2894
    %v2896 = vand.u32 %v2895, 4294901760
    %2897 = vmatpush.msra.mxu0 %v2896
    %v2898 = vand.u32 %v35, 4294901760
    %2899 = vmatmul.f32.gmra.mxu0 %v2898
    %v2900 = vpop.f32.mrf.mxu0
    %v2901 = vadd.f32 %v2865, %v2900
    %2902 = vdwg.mxu0
    %2903 = vmatpush.msra.mxu0 0.0
    %2904 = vmatpush.msra.mxu0 0.0
    %2905 = vmatpush.msra.mxu0 0.0
    %2906 = vmatpush.msra.mxu0 0.0
    %2907 = vmatpush.msra.mxu0 0.0
    %2908 = vmatpush.msra.mxu0 0.0
    %2909 = vmatpush.msra.mxu0 0.0
    %2910 = vmatpush.msra.mxu0 0.0
    %2911 = vmatpush.msra.mxu0 0.0
    %2912 = vmatpush.msra.mxu0 0.0
    %2913 = vmatpush.msra.mxu0 0.0
    %v2914 = vand.u32 %v2525, 4294901760
    %2915 = vmatpush.msra.mxu0 %v2914
    %v2916 = vand.u32 %v2514, 4294901760
    %2917 = vmatpush.msra.mxu0 %v2916
    %v2918 = vand.u32 %v2510, 4294901760
    %2919 = vmatpush.msra.mxu0 %v2918
    %v2920 = vand.u32 %v2506, 4294901760
    %2921 = vmatpush.msra.mxu0 %v2920
    %v2922 = vand.u32 %v2502, 4294901760
    %2923 = vmatpush.msra.mxu0 %v2922
    %v2924 = vand.u32 %v35, 4294901760
    %2925 = vmatmul.f32.gmra.mxu0 %v2924
    %v2926 = vpop.f32.mrf.mxu0
    %v2927 = vadd.f32 %v2901, %v2926
    %2928 = vdwg.mxu0
    %2929 = vmatpush.msra.mxu0 0.0
    %2930 = vmatpush.msra.mxu0 0.0
    %2931 = vmatpush.msra.mxu0 0.0
    %2932 = vmatpush.msra.mxu0 0.0
    %2933 = vmatpush.msra.mxu0 0.0
    %2934 = vmatpush.msra.mxu0 0.0
    %2935 = vmatpush.msra.mxu0 0.0
    %2936 = vmatpush.msra.mxu0 0.0
    %2937 = vmatpush.msra.mxu0 0.0
    %2938 = vmatpush.msra.mxu0 0.0
    %2939 = vmatpush.msra.mxu0 0.0
    %v2940 = vand.u32 %v2528, 4294901760
    %2941 = vmatpush.msra.mxu0 %v2940
    %v2942 = vand.u32 %v2515, 4294901760
    %2943 = vmatpush.msra.mxu0 %v2942
    %v2944 = vand.u32 %v2511, 4294901760
    %2945 = vmatpush.msra.mxu0 %v2944
    %v2946 = vand.u32 %v2507, 4294901760
    %2947 = vmatpush.msra.mxu0 %v2946
    %v2948 = vand.u32 %v2503, 4294901760
    %2949 = vmatpush.msra.mxu0 %v2948
    %v2950 = vand.u32 %v35, 4294901760
    %v2951 = vsub.f32 %v35, %v2950
    %v2952 = vand.u32 %v2951, 4294901760
    %v2953 = vsub.f32 %v2951, %v2952
    %v2954 = vand.u32 %v2953, 4294901760
    %2955 = vmatmul.f32.gmra.mxu0 %v2954
    %v2956 = vpop.f32.mrf.mxu0
    %v2957 = vadd.f32 0.0, %v2956
    %2958 = vdwg.mxu0
    %2959 = vmatpush.msra.mxu0 0.0
    %2960 = vmatpush.msra.mxu0 0.0
    %2961 = vmatpush.msra.mxu0 0.0
    %2962 = vmatpush.msra.mxu0 0.0
    %2963 = vmatpush.msra.mxu0 0.0
    %2964 = vmatpush.msra.mxu0 0.0
    %2965 = vmatpush.msra.mxu0 0.0
    %2966 = vmatpush.msra.mxu0 0.0
    %2967 = vmatpush.msra.mxu0 0.0
    %2968 = vmatpush.msra.mxu0 0.0
    %2969 = vmatpush.msra.mxu0 0.0
    %v2970 = vand.u32 %v2528, 4294901760
    %v2971 = vsub.f32 %v2528, %v2970
    %v2972 = vand.u32 %v2971, 4294901760
    %v2973 = vsub.f32 %v2971, %v2972
    %v2974 = vand.u32 %v2973, 4294901760
    %2975 = vmatpush.msra.mxu0 %v2974
    %v2976 = vand.u32 %v2515, 4294901760
    %v2977 = vsub.f32 %v2515, %v2976
    %v2978 = vand.u32 %v2977, 4294901760
    %v2979 = vsub.f32 %v2977, %v2978
    %v2980 = vand.u32 %v2979, 4294901760
    %2981 = vmatpush.msra.mxu0 %v2980
    %v2982 = vand.u32 %v2511, 4294901760
    %v2983 = vsub.f32 %v2511, %v2982
    %v2984 = vand.u32 %v2983, 4294901760
    %v2985 = vsub.f32 %v2983, %v2984
    %v2986 = vand.u32 %v2985, 4294901760
    %2987 = vmatpush.msra.mxu0 %v2986
    %v2988 = vand.u32 %v2507, 4294901760
    %v2989 = vsub.f32 %v2507, %v2988
    %v2990 = vand.u32 %v2989, 4294901760
    %v2991 = vsub.f32 %v2989, %v2990
    %v2992 = vand.u32 %v2991, 4294901760
    %2993 = vmatpush.msra.mxu0 %v2992
    %v2994 = vand.u32 %v2503, 4294901760
    %v2995 = vsub.f32 %v2503, %v2994
    %v2996 = vand.u32 %v2995, 4294901760
    %v2997 = vsub.f32 %v2995, %v2996
    %v2998 = vand.u32 %v2997, 4294901760
    %2999 = vmatpush.msra.mxu0 %v2998
    %v3000 = vand.u32 %v35, 4294901760
    %3001 = vmatmul.f32.gmra.mxu0 %v3000
    %v3002 = vpop.f32.mrf.mxu0
    %v3003 = vadd.f32 %v2957, %v3002
    %3004 = vdwg.mxu0
    %3005 = vmatpush.msra.mxu0 0.0
    %3006 = vmatpush.msra.mxu0 0.0
    %3007 = vmatpush.msra.mxu0 0.0
    %3008 = vmatpush.msra.mxu0 0.0
    %3009 = vmatpush.msra.mxu0 0.0
    %3010 = vmatpush.msra.mxu0 0.0
    %3011 = vmatpush.msra.mxu0 0.0
    %3012 = vmatpush.msra.mxu0 0.0
    %3013 = vmatpush.msra.mxu0 0.0
    %3014 = vmatpush.msra.mxu0 0.0
    %3015 = vmatpush.msra.mxu0 0.0
    %v3016 = vand.u32 %v2528, 4294901760
    %v3017 = vsub.f32 %v2528, %v3016
    %3018 = vmatpush.msra.mxu0 %v3017
    %v3019 = vand.u32 %v2515, 4294901760
    %v3020 = vsub.f32 %v2515, %v3019
    %3021 = vmatpush.msra.mxu0 %v3020
    %v3022 = vand.u32 %v2511, 4294901760
    %v3023 = vsub.f32 %v2511, %v3022
    %3024 = vmatpush.msra.mxu0 %v3023
    %v3025 = vand.u32 %v2507, 4294901760
    %v3026 = vsub.f32 %v2507, %v3025
    %3027 = vmatpush.msra.mxu0 %v3026
    %v3028 = vand.u32 %v2503, 4294901760
    %v3029 = vsub.f32 %v2503, %v3028
    %3030 = vmatpush.msra.mxu0 %v3029
    %v3031 = vand.u32 %v35, 4294901760
    %v3032 = vsub.f32 %v35, %v3031
    %3033 = vmatmul.f32.gmra.mxu0 %v3032
    %v3034 = vpop.f32.mrf.mxu0
    %v3035 = vadd.f32 %v3003, %v3034
    %3036 = vdwg.mxu0
    %3037 = vmatpush.msra.mxu0 0.0
    %3038 = vmatpush.msra.mxu0 0.0
    %3039 = vmatpush.msra.mxu0 0.0
    %3040 = vmatpush.msra.mxu0 0.0
    %3041 = vmatpush.msra.mxu0 0.0
    %3042 = vmatpush.msra.mxu0 0.0
    %3043 = vmatpush.msra.mxu0 0.0
    %3044 = vmatpush.msra.mxu0 0.0
    %3045 = vmatpush.msra.mxu0 0.0
    %3046 = vmatpush.msra.mxu0 0.0
    %3047 = vmatpush.msra.mxu0 0.0
    %v3048 = vand.u32 %v2528, 4294901760
    %3049 = vmatpush.msra.mxu0 %v3048
    %v3050 = vand.u32 %v2515, 4294901760
    %3051 = vmatpush.msra.mxu0 %v3050
    %v3052 = vand.u32 %v2511, 4294901760
    %3053 = vmatpush.msra.mxu0 %v3052
    %v3054 = vand.u32 %v2507, 4294901760
    %3055 = vmatpush.msra.mxu0 %v3054
    %v3056 = vand.u32 %v2503, 4294901760
    %3057 = vmatpush.msra.mxu0 %v3056
    %v3058 = vand.u32 %v35, 4294901760
    %v3059 = vsub.f32 %v35, %v3058
    %v3060 = vand.u32 %v3059, 4294901760
    %3061 = vmatmul.f32.gmra.mxu0 %v3060
    %v3062 = vpop.f32.mrf.mxu0
    %v3063 = vadd.f32 %v3035, %v3062
    %3064 = vdwg.mxu0
    %3065 = vmatpush.msra.mxu0 0.0
    %3066 = vmatpush.msra.mxu0 0.0
    %3067 = vmatpush.msra.mxu0 0.0
    %3068 = vmatpush.msra.mxu0 0.0
    %3069 = vmatpush.msra.mxu0 0.0
    %3070 = vmatpush.msra.mxu0 0.0
    %3071 = vmatpush.msra.mxu0 0.0
    %3072 = vmatpush.msra.mxu0 0.0
    %3073 = vmatpush.msra.mxu0 0.0
    %3074 = vmatpush.msra.mxu0 0.0
    %3075 = vmatpush.msra.mxu0 0.0
    %v3076 = vand.u32 %v2528, 4294901760
    %v3077 = vsub.f32 %v2528, %v3076
    %v3078 = vand.u32 %v3077, 4294901760
    %3079 = vmatpush.msra.mxu0 %v3078
    %v3080 = vand.u32 %v2515, 4294901760
    %v3081 = vsub.f32 %v2515, %v3080
    %v3082 = vand.u32 %v3081, 4294901760
    %3083 = vmatpush.msra.mxu0 %v3082
    %v3084 = vand.u32 %v2511, 4294901760
    %v3085 = vsub.f32 %v2511, %v3084
    %v3086 = vand.u32 %v3085, 4294901760
    %3087 = vmatpush.msra.mxu0 %v3086
    %v3088 = vand.u32 %v2507, 4294901760
    %v3089 = vsub.f32 %v2507, %v3088
    %v3090 = vand.u32 %v3089, 4294901760
    %3091 = vmatpush.msra.mxu0 %v3090
    %v3092 = vand.u32 %v2503, 4294901760
    %v3093 = vsub.f32 %v2503, %v3092
    %v3094 = vand.u32 %v3093, 4294901760
    %3095 = vmatpush.msra.mxu0 %v3094
    %v3096 = vand.u32 %v35, 4294901760
    %3097 = vmatmul.f32.gmra.mxu0 %v3096
    %v3098 = vpop.f32.mrf.mxu0
    %v3099 = vadd.f32 %v3063, %v3098
    %3100 = vdwg.mxu0
    %3101 = vmatpush.msra.mxu0 0.0
    %3102 = vmatpush.msra.mxu0 0.0
    %3103 = vmatpush.msra.mxu0 0.0
    %3104 = vmatpush.msra.mxu0 0.0
    %3105 = vmatpush.msra.mxu0 0.0
    %3106 = vmatpush.msra.mxu0 0.0
    %3107 = vmatpush.msra.mxu0 0.0
    %3108 = vmatpush.msra.mxu0 0.0
    %3109 = vmatpush.msra.mxu0 0.0
    %3110 = vmatpush.msra.mxu0 0.0
    %3111 = vmatpush.msra.mxu0 0.0
    %v3112 = vand.u32 %v2528, 4294901760
    %3113 = vmatpush.msra.mxu0 %v3112
    %v3114 = vand.u32 %v2515, 4294901760
    %3115 = vmatpush.msra.mxu0 %v3114
    %v3116 = vand.u32 %v2511, 4294901760
    %3117 = vmatpush.msra.mxu0 %v3116
    %v3118 = vand.u32 %v2507, 4294901760
    %3119 = vmatpush.msra.mxu0 %v3118
    %v3120 = vand.u32 %v2503, 4294901760
    %3121 = vmatpush.msra.mxu0 %v3120
    %v3122 = vand.u32 %v35, 4294901760
    %3123 = vmatmul.f32.gmra.mxu0 %v3122
    %v3124 = vpop.f32.mrf.mxu0
    %v3125 = vadd.f32 %v3099, %v3124
    %3126 = vdwg.mxu0
    %3127 = vmatpush.msra.mxu0 0.0
    %3128 = vmatpush.msra.mxu0 0.0
    %3129 = vmatpush.msra.mxu0 0.0
    %3130 = vmatpush.msra.mxu0 0.0
    %3131 = vmatpush.msra.mxu0 0.0
    %3132 = vmatpush.msra.mxu0 0.0
    %3133 = vmatpush.msra.mxu0 0.0
    %3134 = vmatpush.msra.mxu0 0.0
    %3135 = vmatpush.msra.mxu0 0.0
    %3136 = vmatpush.msra.mxu0 0.0
    %3137 = vmatpush.msra.mxu0 0.0
    %v3138 = vand.u32 %v2531, 4294901760
    %3139 = vmatpush.msra.mxu0 %v3138
    %v3140 = vand.u32 %v2516, 4294901760
    %3141 = vmatpush.msra.mxu0 %v3140
    %v3142 = vand.u32 %v2512, 4294901760
    %3143 = vmatpush.msra.mxu0 %v3142
    %v3144 = vand.u32 %v2508, 4294901760
    %3145 = vmatpush.msra.mxu0 %v3144
    %v3146 = vand.u32 %v2504, 4294901760
    %3147 = vmatpush.msra.mxu0 %v3146
    %v3148 = vand.u32 %v35, 4294901760
    %v3149 = vsub.f32 %v35, %v3148
    %v3150 = vand.u32 %v3149, 4294901760
    %v3151 = vsub.f32 %v3149, %v3150
    %v3152 = vand.u32 %v3151, 4294901760
    %3153 = vmatmul.f32.gmra.mxu0 %v3152
    %v3154 = vpop.f32.mrf.mxu0
    %v3155 = vadd.f32 0.0, %v3154
    %3156 = vdwg.mxu0
    %3157 = vmatpush.msra.mxu0 0.0
    %3158 = vmatpush.msra.mxu0 0.0
    %3159 = vmatpush.msra.mxu0 0.0
    %3160 = vmatpush.msra.mxu0 0.0
    %3161 = vmatpush.msra.mxu0 0.0
    %3162 = vmatpush.msra.mxu0 0.0
    %3163 = vmatpush.msra.mxu0 0.0
    %3164 = vmatpush.msra.mxu0 0.0
    %3165 = vmatpush.msra.mxu0 0.0
    %3166 = vmatpush.msra.mxu0 0.0
    %3167 = vmatpush.msra.mxu0 0.0
    %v3168 = vand.u32 %v2531, 4294901760
    %v3169 = vsub.f32 %v2531, %v3168
    %v3170 = vand.u32 %v3169, 4294901760
    %v3171 = vsub.f32 %v3169, %v3170
    %v3172 = vand.u32 %v3171, 4294901760
    %3173 = vmatpush.msra.mxu0 %v3172
    %v3174 = vand.u32 %v2516, 4294901760
    %v3175 = vsub.f32 %v2516, %v3174
    %v3176 = vand.u32 %v3175, 4294901760
    %v3177 = vsub.f32 %v3175, %v3176
    %v3178 = vand.u32 %v3177, 4294901760
    %3179 = vmatpush.msra.mxu0 %v3178
    %v3180 = vand.u32 %v2512, 4294901760
    %v3181 = vsub.f32 %v2512, %v3180
    %v3182 = vand.u32 %v3181, 4294901760
    %v3183 = vsub.f32 %v3181, %v3182
    %v3184 = vand.u32 %v3183, 4294901760
    %3185 = vmatpush.msra.mxu0 %v3184
    %v3186 = vand.u32 %v2508, 4294901760
    %v3187 = vsub.f32 %v2508, %v3186
    %v3188 = vand.u32 %v3187, 4294901760
    %v3189 = vsub.f32 %v3187, %v3188
    %v3190 = vand.u32 %v3189, 4294901760
    %3191 = vmatpush.msra.mxu0 %v3190
    %v3192 = vand.u32 %v2504, 4294901760
    %v3193 = vsub.f32 %v2504, %v3192
    %v3194 = vand.u32 %v3193, 4294901760
    %v3195 = vsub.f32 %v3193, %v3194
    %v3196 = vand.u32 %v3195, 4294901760
    %3197 = vmatpush.msra.mxu0 %v3196
    %v3198 = vand.u32 %v35, 4294901760
    %3199 = vmatmul.f32.gmra.mxu0 %v3198
    %v3200 = vpop.f32.mrf.mxu0
    %v3201 = vadd.f32 %v3155, %v3200
    %3202 = vdwg.mxu0
    %3203 = vmatpush.msra.mxu0 0.0
    %3204 = vmatpush.msra.mxu0 0.0
    %3205 = vmatpush.msra.mxu0 0.0
    %3206 = vmatpush.msra.mxu0 0.0
    %3207 = vmatpush.msra.mxu0 0.0
    %3208 = vmatpush.msra.mxu0 0.0
    %3209 = vmatpush.msra.mxu0 0.0
    %3210 = vmatpush.msra.mxu0 0.0
    %3211 = vmatpush.msra.mxu0 0.0
    %3212 = vmatpush.msra.mxu0 0.0
    %3213 = vmatpush.msra.mxu0 0.0
    %v3214 = vand.u32 %v2531, 4294901760
    %v3215 = vsub.f32 %v2531, %v3214
    %3216 = vmatpush.msra.mxu0 %v3215
    %v3217 = vand.u32 %v2516, 4294901760
    %v3218 = vsub.f32 %v2516, %v3217
    %3219 = vmatpush.msra.mxu0 %v3218
    %v3220 = vand.u32 %v2512, 4294901760
    %v3221 = vsub.f32 %v2512, %v3220
    %3222 = vmatpush.msra.mxu0 %v3221
    %v3223 = vand.u32 %v2508, 4294901760
    %v3224 = vsub.f32 %v2508, %v3223
    %3225 = vmatpush.msra.mxu0 %v3224
    %v3226 = vand.u32 %v2504, 4294901760
    %v3227 = vsub.f32 %v2504, %v3226
    %3228 = vmatpush.msra.mxu0 %v3227
    %v3229 = vand.u32 %v35, 4294901760
    %v3230 = vsub.f32 %v35, %v3229
    %3231 = vmatmul.f32.gmra.mxu0 %v3230
    %v3232 = vpop.f32.mrf.mxu0
    %v3233 = vadd.f32 %v3201, %v3232
    %3234 = vdwg.mxu0
    %3235 = vmatpush.msra.mxu0 0.0
    %3236 = vmatpush.msra.mxu0 0.0
    %3237 = vmatpush.msra.mxu0 0.0
    %3238 = vmatpush.msra.mxu0 0.0
    %3239 = vmatpush.msra.mxu0 0.0
    %3240 = vmatpush.msra.mxu0 0.0
    %3241 = vmatpush.msra.mxu0 0.0
    %3242 = vmatpush.msra.mxu0 0.0
    %3243 = vmatpush.msra.mxu0 0.0
    %3244 = vmatpush.msra.mxu0 0.0
    %3245 = vmatpush.msra.mxu0 0.0
    %v3246 = vand.u32 %v2531, 4294901760
    %3247 = vmatpush.msra.mxu0 %v3246
    %v3248 = vand.u32 %v2516, 4294901760
    %3249 = vmatpush.msra.mxu0 %v3248
    %v3250 = vand.u32 %v2512, 4294901760
    %3251 = vmatpush.msra.mxu0 %v3250
    %v3252 = vand.u32 %v2508, 4294901760
    %3253 = vmatpush.msra.mxu0 %v3252
    %v3254 = vand.u32 %v2504, 4294901760
    %3255 = vmatpush.msra.mxu0 %v3254
    %v3256 = vand.u32 %v35, 4294901760
    %v3257 = vsub.f32 %v35, %v3256
    %v3258 = vand.u32 %v3257, 4294901760
    %3259 = vmatmul.f32.gmra.mxu0 %v3258
    %v3260 = vpop.f32.mrf.mxu0
    %v3261 = vadd.f32 %v3233, %v3260
    %3262 = vdwg.mxu0
    %3263 = vmatpush.msra.mxu0 0.0
    %3264 = vmatpush.msra.mxu0 0.0
    %3265 = vmatpush.msra.mxu0 0.0
    %3266 = vmatpush.msra.mxu0 0.0
    %3267 = vmatpush.msra.mxu0 0.0
    %3268 = vmatpush.msra.mxu0 0.0
    %3269 = vmatpush.msra.mxu0 0.0
    %3270 = vmatpush.msra.mxu0 0.0
    %3271 = vmatpush.msra.mxu0 0.0
    %3272 = vmatpush.msra.mxu0 0.0
    %3273 = vmatpush.msra.mxu0 0.0
    %v3274 = vand.u32 %v2531, 4294901760
    %v3275 = vsub.f32 %v2531, %v3274
    %v3276 = vand.u32 %v3275, 4294901760
    %3277 = vmatpush.msra.mxu0 %v3276
    %v3278 = vand.u32 %v2516, 4294901760
    %v3279 = vsub.f32 %v2516, %v3278
    %v3280 = vand.u32 %v3279, 4294901760
    %3281 = vmatpush.msra.mxu0 %v3280
    %v3282 = vand.u32 %v2512, 4294901760
    %v3283 = vsub.f32 %v2512, %v3282
    %v3284 = vand.u32 %v3283, 4294901760
    %3285 = vmatpush.msra.mxu0 %v3284
    %v3286 = vand.u32 %v2508, 4294901760
    %v3287 = vsub.f32 %v2508, %v3286
    %v3288 = vand.u32 %v3287, 4294901760
    %3289 = vmatpush.msra.mxu0 %v3288
    %v3290 = vand.u32 %v2504, 4294901760
    %v3291 = vsub.f32 %v2504, %v3290
    %v3292 = vand.u32 %v3291, 4294901760
    %3293 = vmatpush.msra.mxu0 %v3292
    %v3294 = vand.u32 %v35, 4294901760
    %3295 = vmatmul.f32.gmra.mxu0 %v3294
    %v3296 = vpop.f32.mrf.mxu0
    %v3297 = vadd.f32 %v3261, %v3296
    %3298 = vdwg.mxu0
    %3299 = vmatpush.msra.mxu0 0.0
    %3300 = vmatpush.msra.mxu0 0.0
    %3301 = vmatpush.msra.mxu0 0.0
    %3302 = vmatpush.msra.mxu0 0.0
    %3303 = vmatpush.msra.mxu0 0.0
    %3304 = vmatpush.msra.mxu0 0.0
    %3305 = vmatpush.msra.mxu0 0.0
    %3306 = vmatpush.msra.mxu0 0.0
    %3307 = vmatpush.msra.mxu0 0.0
    %3308 = vmatpush.msra.mxu0 0.0
    %3309 = vmatpush.msra.mxu0 0.0
    %v3310 = vand.u32 %v2531, 4294901760
    %3311 = vmatpush.msra.mxu0 %v3310
    %v3312 = vand.u32 %v2516, 4294901760
    %3313 = vmatpush.msra.mxu0 %v3312
    %v3314 = vand.u32 %v2512, 4294901760
    %3315 = vmatpush.msra.mxu0 %v3314
    %v3316 = vand.u32 %v2508, 4294901760
    %3317 = vmatpush.msra.mxu0 %v3316
    %v3318 = vand.u32 %v2504, 4294901760
    %3319 = vmatpush.msra.mxu0 %v3318
    %v3320 = vand.u32 %v35, 4294901760
    %3321 = vmatmul.f32.gmra.mxu0 %v3320
    %v3322 = vpop.f32.mrf.mxu0
    %v3323 = vadd.f32 %v3297, %v3322
    %3324 = vdwg.mxu0
    %v3325 = vmul.f32 %v2496, %v2729
    %v3326 = vmul.f32 %v2497, %v2927
    %v3327 = vmul.f32 %v2498, %v3125
    %v3328 = vmul.f32 %v2499, %v3323
    %v3333 = vrot.slane %v3326, 4
    %v3334 = vrot.slane %v3328, 4
    %vm3335 = vcmask 1043456
    %v3336 = vsel %vm3335, %v3325, %v3333
    %v3337 = vsel %vm3335, %v3327, %v3334
    %3340 = vst [vmem:[#allocation2] sm:$0xff] %v3336
    %3341 = vst [vmem:[#allocation2 + $0x8] sm:$0xff] %v3337
    // Predicated region
    $region10: #{tpu_custom_call.1} parent=1 // pred_check
      _
    $region11: #{tpu_custom_call.1} parent=1 // pred_check_branch
      %3343 = sbr.rel (0) target = $region13
    $region12: #{tpu_custom_call.1} parent=1 // pred_region
      %3345 = vsyncadd [#allocation3], 0
      %s3347 = sshll.u32 [#allocation2], 4
      %s3348 = int_to_ptr.vmem [resolvable:$true] %s3347
      %s3349 = sshll.u32 %s2, 4
      %s3350 = int_to_ptr.hbm [resolvable:$true] %s3349
      %3352 = dma.vmem_to_hbm [thread:$0]  %s3348, 256, %s3350, [#allocation3]
    $region13: #{tpu_custom_call.1} parent=1 // pred_fallthru
      _
    // Predicated region
    $region14: #{tpu_custom_call.1} parent=1 // pred_check
      _
    $region15: #{tpu_custom_call.1} parent=1 // pred_check_branch
      %3354 = sbr.rel (0) target = $region17
    $region16: #{tpu_custom_call.1} parent=1 // pred_region
      %3356 = dma.done [#allocation3], 256
    $region17: #{tpu_custom_call.1} parent=1 // pred_fallthru
      _
    %3357 = vsyncpa [#allocation3], 1

</llo_original>
